<compile_context>
chip_gen: v6e
topology: v6e:2x2x1
jax: 0.10.0
libtpu: 0.0.40
codegen_flags: <defaults>
</compile_context>

<pallas_src>
import numpy as np
import jax
import jax.numpy as jnp
from jax.experimental import pallas as pl
from jax.experimental.pallas import tpu as pltpu

# ----------------------------- configuration --------------------------------
VOCAB_SIZE = 8
EMBED = 32          # embedding_size
IMG_DIM = 32        # image_vector_dim (encoder_dim)
RNN = 32            # rnn_size
SEQ_LEN = 8         # seq_length
B = 2               # batch size
L = 16              # number of image feature locations
V3 = VOCAB_SIZE + 3
T1 = SEQ_LEN + 1    # max_timespan
START_TOKEN = VOCAB_SIZE + 1
END_TOKEN = VOCAB_SIZE + 2

# ---- weight-slab layout (single packed input; see build_weight_slab) -------
WS_ROWS, WS_COLS = 88, 384
# rows 0:32  : fused h-projection weights, 128-lane-aligned chunks
HB_ROW = 0
HB_HH_C, HB_U_C, HB_FB_C = 0, 128, 256          # h@w_hh | h@U_w | h@fb_w
# rows 32:64 : [w_ih_ctx | deep_w (padded to 128) | W_w | init_h_w | init_c_w]
B1_ROW = 32
WIHC_C, DEEP_C, WW_C, INIT_C = 0, 128, 256, 288
# rows 64:80 : alpha -> output-slab lane selector (L x 128)
SEL_ROW = 64
# bias rows
HB_B_ROW, DEEP_B_ROW, WB_ROW, VW_ROW, INIT_B_ROW = 80, 81, 82, 83, 84

# ---- output-slab lane layout ------------------------------------------------
OUT_LANES = 128
PRED_OFF = 0          # preds in lanes [0, V3)
ALPHA_OFF = 16        # alphas in lanes [16, 16+L)
assert ALPHA_OFF >= V3 and ALPHA_OFF + L <= OUT_LANES


# ------------------------------- kernel --------------------------------------
def decoder_kernel(
    img_ref,        # (B, L, D)        image features
    emb_proj_ref,   # (T1, B, 4R)      embedding[:, t] @ w_ih_emb + b_ih (precomputed)
    w_ref,          # (WS_ROWS, WS_COLS) packed weight slab
    out_ref,        # (T1*B, 128)      lane-dense output slab (preds | alphas)
    hstk_ref,       # VMEM scratch (T1*B, R)   per-step hidden states
    astk_ref,       # VMEM scratch (T1*B, L)   per-step attention weights
):
    img = img_ref[...]                                   # (B, L, D)
    Bc, Lc, Dc = img.shape
    R = RNN

    # ---- one-time small loads from the slab (static ref slices are free) ----
    Wb = w_ref[WB_ROW:WB_ROW + 1, 0:R]                   # (1, R)
    v_w = w_ref[VW_ROW:VW_ROW + 1, 0:R]                  # (1, R)
    init_b = w_ref[INIT_B_ROW:INIT_B_ROW + 1, 0:2 * R]   # (1, 2R)
    hbig_b = w_ref[HB_B_ROW:HB_B_ROW + 1, :]             # (1, WS_COLS)

    # --- get_init_lstm_state: one fused matmul for tanh(init_h), tanh(init_c) ---
    avg = jnp.mean(img, axis=1)                          # (B, D)
    init_w = w_ref[B1_ROW:B1_ROW + Dc, INIT_C:INIT_C + 2 * R]   # (D, 2R)
    hc = jnp.tanh(jnp.dot(avg, init_w, preferred_element_type=jnp.float32) + init_b)
    h = hc[:, :R]
    c = hc[:, R:2 * R]

    # --- hoisted, time-invariant attention projection: W_s = img @ W_w + W_b ---
    Ww = w_ref[B1_ROW:B1_ROW + Dc, WW_C:WW_C + R]        # (D, R)
    w_s = (jnp.dot(img.reshape(Bc * Lc, Dc), Ww, preferred_element_type=jnp.float32)
           + Wb).reshape(Bc, Lc, R)                      # (B, L, R)

    # --- hoisted loop-invariant broadcasts (JAX does not CSE broadcast_in_dim) ---
    v_b3 = jnp.broadcast_to(v_w.reshape(1, 1, R), (Bc, Lc, R))
    hbig_bB = jnp.broadcast_to(hbig_b, (Bc, WS_COLS))

    # Statically-unrolled recurrence (T1 = 9 steps).
    for t in range(T1):
        # fused h projection: [h@w_hh+b_hh | h@U_w+U_b | h@fb_w+fb_b], chunks
        # 128-lane aligned so the slices below are free vreg selects.
        # (re-loaded from the slab each step to keep vreg live ranges bounded)
        hbig_w = w_ref[HB_ROW:HB_ROW + R, :]                              # (R, WS_COLS)
        hp = jnp.dot(h, hbig_w, preferred_element_type=jnp.float32) + hbig_bB
        hh_gates = hp[:, HB_HH_C:HB_HH_C + 4 * R]        # (B, 4R)
        u_h = hp[:, HB_U_C:HB_U_C + R]                   # (B, R)
        gate = jax.nn.sigmoid(hp[:, HB_FB_C:HB_FB_C + Dc])   # (B, D)

        # --- Attention(img_features, h) ---
        att = jnp.tanh(w_s + u_h[:, None, :])            # (B, L, R)
        # NOTE: the v-layer bias is omitted; it adds a uniform constant along the
        # softmax axis and cancels exactly (softmax shift invariance).
        e = jnp.sum(att * v_b3, axis=2)                  # (B, L)
        e = e - jnp.max(e, axis=1, keepdims=True)
        ex = jnp.exp(e)
        alpha = ex * pl.reciprocal(jnp.sum(ex, axis=1, keepdims=True), approx=True)
        # context kept on VPU+XLU (slots have slack at this size); MXU variant
        # (batched einsum) deferred per review "measure first".
        context = jnp.sum(img * alpha[:, :, None], axis=1)    # (B, D)

        # --- gated context + LSTMCell (concat-free) ---
        gated = gate * context
        wih_ctx = w_ref[B1_ROW:B1_ROW + Dc, WIHC_C:WIHC_C + 4 * R]        # (D, 4R)
        gates = (emb_proj_ref[t] + hh_gates
                 + jnp.dot(gated, wih_ctx, preferred_element_type=jnp.float32))
        i_g = jax.nn.sigmoid(gates[:, 0:R])
        f_g = jax.nn.sigmoid(gates[:, R:2 * R])
        g_g = jnp.tanh(gates[:, 2 * R:3 * R])
        o_g = jax.nn.sigmoid(gates[:, 3 * R:4 * R])
        c = f_g * c + i_g * g_g
        h = o_g * jnp.tanh(c)

        # stash per-step state; deep_output + output stores are deferred
        hstk_ref[pl.ds(t * Bc, Bc), :] = h               # (B, R)
        astk_ref[pl.ds(t * Bc, Bc), :] = alpha           # (B, L)

    # --- deferred deep_output(dropout(h)) + single lane-dense packed store ---
    # TODO(synk): nn.Dropout is treated as identity (eval-mode semantics);
    # training-mode stochastic dropout is not reproduced.
    hs = hstk_ref[...]                                   # (T1*B, R)
    al = astk_ref[...]                                   # (T1*B, L)
    deep_w = w_ref[B1_ROW:B1_ROW + R, DEEP_C:DEEP_C + OUT_LANES]      # (R, 128)
    deep_b = w_ref[DEEP_B_ROW:DEEP_B_ROW + 1, 0:OUT_LANES]            # (1, 128)
    sel = w_ref[SEL_ROW:SEL_ROW + Lc, 0:OUT_LANES]                    # (L, 128)
    out_ref[...] = (jnp.dot(hs, deep_w, preferred_element_type=jnp.float32) + deep_b
                    + jnp.dot(al, sel, preferred_element_type=jnp.float32))


# ------------------------------ wrapper ---------------------------------------
def build_weight_slab(p, w_ih_ctx):
    """Pack every weight/bias into one lane-padded (WS_ROWS, WS_COLS) f32 slab."""
    w = jnp.zeros((WS_ROWS, WS_COLS), jnp.float32)
    # band 0: fused h-projection, 128-lane-aligned chunks
    w = w.at[HB_ROW:HB_ROW + RNN, HB_HH_C:HB_HH_C + 4 * RNN].set(p['w_hh'])
    w = w.at[HB_ROW:HB_ROW + RNN, HB_U_C:HB_U_C + RNN].set(p['U_w'])
    w = w.at[HB_ROW:HB_ROW + RNN, HB_FB_C:HB_FB_C + IMG_DIM].set(p['fb_w'])
    # band 1
    w = w.at[B1_ROW:B1_ROW + IMG_DIM, WIHC_C:WIHC_C + 4 * RNN].set(w_ih_ctx)
    w = w.at[B1_ROW:B1_ROW + RNN, DEEP_C:DEEP_C + V3].set(p['deep_w'])
    w = w.at[B1_ROW:B1_ROW + IMG_DIM, WW_C:WW_C + RNN].set(p['W_w'])
    w = w.at[B1_ROW:B1_ROW + IMG_DIM, INIT_C:INIT_C + RNN].set(p['init_h_w'])
    w = w.at[B1_ROW:B1_ROW + IMG_DIM, INIT_C + RNN:INIT_C + 2 * RNN].set(p['init_c_w'])
    # band 2: alpha -> output-slab lane selector (places alpha l at lane ALPHA_OFF+l)
    sel = jnp.pad(jnp.eye(L, dtype=jnp.float32),
                  ((0, 0), (ALPHA_OFF, OUT_LANES - ALPHA_OFF - L)))
    w = w.at[SEL_ROW:SEL_ROW + L, 0:OUT_LANES].set(sel)
    # bias rows (v-layer bias intentionally NOT packed: softmax shift invariance)
    w = w.at[HB_B_ROW, HB_HH_C:HB_HH_C + 4 * RNN].set(p['b_hh'][0])
    w = w.at[HB_B_ROW, HB_U_C:HB_U_C + RNN].set(p['U_b'][0])
    w = w.at[HB_B_ROW, HB_FB_C:HB_FB_C + IMG_DIM].set(p['fb_b'][0])
    w = w.at[DEEP_B_ROW, 0:V3].set(p['deep_b'][0])
    w = w.at[WB_ROW, 0:RNN].set(p['W_b'][0])
    w = w.at[VW_ROW, 0:RNN].set(p['v_w'][0])
    w = w.at[INIT_B_ROW, 0:RNN].set(p['init_h_b'][0])
    w = w.at[INIT_B_ROW, RNN:2 * RNN].set(p['init_c_b'][0])
    return w


def decoder_forward(img_features, captions, p):
    Bsz, Lf, Dd = img_features.shape

    # get_target: prepend START token, then embed.
    target = jnp.concatenate(
        [jnp.full((Bsz, 1), START_TOKEN, dtype=jnp.int32), captions.astype(jnp.int32)],
        axis=1)                                                    # (B, T1)
    emb = jnp.take(p['emb_table'], target, axis=0)                 # (B, T1, E)
    emb_tm = jnp.transpose(emb, (1, 0, 2)).astype(jnp.float32)     # (T1, B, E)

    # Off-critical-path precomputation (XLA): embedding part of the LSTM input
    # projection, folded with b_ih.
    w_ih_emb = p['w_ih'][:EMBED]                                   # (E, 4R)
    w_ih_ctx = p['w_ih'][EMBED:]                                   # (D, 4R)
    emb_proj = jnp.einsum('tbe,eg->tbg', emb_tm, w_ih_emb) + p['b_ih'][0]   # (T1, B, 4R)

    wslab = build_weight_slab(p, w_ih_ctx)

    inputs = [img_features.astype(jnp.float32), emb_proj, wslab]

    def full(shape):
        return pl.BlockSpec(shape, lambda i, n=len(shape): (0,) * n)

    out = pl.pallas_call(
        decoder_kernel,
        out_shape=jax.ShapeDtypeStruct((T1 * Bsz, OUT_LANES), jnp.float32),
        grid_spec=pltpu.PrefetchScalarGridSpec(
            num_scalar_prefetch=0,
            grid=(1,),                      # single invocation; recurrence unrolled in-kernel
            in_specs=[full(x.shape) for x in inputs],
            out_specs=full((T1 * Bsz, OUT_LANES)),
            scratch_shapes=[pltpu.VMEM((T1 * Bsz, RNN), jnp.float32),
                            pltpu.VMEM((T1 * Bsz, Lf), jnp.float32)],
        ),
        compiler_params=pltpu.CompilerParams(dimension_semantics=("arbitrary",)),
    )(*inputs)

    # Unpack the lane-dense slab back to PyTorch layout.
    slab = out.reshape(T1, Bsz, OUT_LANES)
    preds = jnp.transpose(slab[:, :, PRED_OFF:PRED_OFF + V3], (1, 0, 2))      # (B, T1, V3)
    alphas = jnp.transpose(slab[:, :, ALPHA_OFF:ALPHA_OFF + Lf], (1, 0, 2))   # (B, T1, L)
    return preds, alphas


# ------------------------- pure-JAX reference ---------------------------------
def ref_forward(img, captions, p):
    target = jnp.concatenate(
        [jnp.full((B, 1), START_TOKEN, dtype=jnp.int32), captions.astype(jnp.int32)], axis=1)
    emb = jnp.take(p['emb_table'], target, axis=0)
    avg = img.mean(axis=1)
    h = jnp.tanh(avg @ p['init_h_w'] + p['init_h_b'][0])
    c = jnp.tanh(avg @ p['init_c_w'] + p['init_c_b'][0])
    preds, alphas = [], []
    for t in range(T1):
        u_h = h @ p['U_w'] + p['U_b'][0]
        w_s = img @ p['W_w'] + p['W_b'][0]
        att = jnp.tanh(w_s + u_h[:, None, :])
        e = jnp.sum(att * p['v_w'][0], axis=2) + p['v_b'][0, 0]
        alpha = jax.nn.softmax(e, axis=1)
        context = jnp.sum(img * alpha[:, :, None], axis=1)
        gate = jax.nn.sigmoid(h @ p['fb_w'] + p['fb_b'][0])
        x = jnp.concatenate([emb[:, t], gate * context], axis=1)
        gates = x @ p['w_ih'] + p['b_ih'][0] + h @ p['w_hh'] + p['b_hh'][0]
        i_g = jax.nn.sigmoid(gates[:, :RNN])
        f_g = jax.nn.sigmoid(gates[:, RNN:2 * RNN])
        g_g = jnp.tanh(gates[:, 2 * RNN:3 * RNN])
        o_g = jax.nn.sigmoid(gates[:, 3 * RNN:])
        c = f_g * c + i_g * g_g
        h = o_g * jnp.tanh(c)
        preds.append(h @ p['deep_w'] + p['deep_b'][0])
        alphas.append(alpha)
    return jnp.stack(preds, axis=1), jnp.stack(alphas, axis=1)


# --------------------------- deterministic init --------------------------------
def init_params(key):
    ks = jax.random.split(key, 24)
    def W(k, shape, s=0.1):
        return (s * jax.random.normal(k, shape)).astype(jnp.float32)
    return {
        'emb_table': W(ks[0], (V3, EMBED), 0.2),
        'init_h_w': W(ks[1], (IMG_DIM, RNN)), 'init_h_b': W(ks[2], (1, RNN)),
        'init_c_w': W(ks[3], (IMG_DIM, RNN)), 'init_c_b': W(ks[4], (1, RNN)),
        'U_w': W(ks[5], (RNN, RNN)),          'U_b': W(ks[6], (1, RNN)),
        'W_w': W(ks[7], (IMG_DIM, RNN)),      'W_b': W(ks[8], (1, RNN)),
        'v_w': W(ks[9], (1, RNN)),            'v_b': W(ks[10], (1, 1)),
        'fb_w': W(ks[11], (RNN, IMG_DIM)),    'fb_b': W(ks[12], (1, IMG_DIM)),
        'w_ih': W(ks[13], (EMBED + IMG_DIM, 4 * RNN)), 'b_ih': W(ks[14], (1, 4 * RNN)),
        'w_hh': W(ks[15], (RNN, 4 * RNN)),             'b_hh': W(ks[16], (1, 4 * RNN)),
        'deep_w': W(ks[17], (RNN, V3)),       'deep_b': W(ks[18], (1, V3)),
    }


if __name__ == "__main__":
    key = jax.random.PRNGKey(0)
    k_params, k_img, k_cap = jax.random.split(key, 3)
    params = init_params(k_params)
    img_features = jax.random.normal(k_img, (B, L, IMG_DIM), dtype=jnp.float32)
    captions = jax.random.randint(k_cap, (B, SEQ_LEN), 1, VOCAB_SIZE + 1, dtype=jnp.int32)

    preds, alphas = decoder_forward(img_features, captions, params)
    jax.block_until_ready((preds, alphas))

    ref_p, ref_a = ref_forward(img_features, captions, params)
    assert preds.shape == (B, T1, V3) and alphas.shape == (B, T1, L)
    assert np.allclose(np.asarray(preds), np.asarray(ref_p), rtol=2e-2, atol=2e-2)
    assert np.allclose(np.asarray(alphas), np.asarray(ref_a), rtol=2e-2, atol=2e-2)
    print("KERNEL_OK")
</pallas_src>

<mosaic_0001>
module attributes {stable_mosaic.version = 11 : i64} {
  func.func @decoder_kernel(%arg0: i32, %arg1: memref<2x16x32xf32, #tpu.memory_space<vmem>>, %arg2: memref<9x2x128xf32, #tpu.memory_space<vmem>>, %arg3: memref<88x384xf32, #tpu.memory_space<vmem>>, %arg4: memref<18x128xf32, #tpu.memory_space<vmem>>, %arg5: memref<18x32xf32, #tpu.memory_space<vmem>>, %arg6: memref<18x16xf32, #tpu.memory_space<vmem>>) attributes {dimension_semantics = [#tpu.dimension_semantics<arbitrary>], iteration_bounds = array<i64: 1>, scalar_prefetch = 0 : i64, scratch_operands = 2 : i64, tpu.core_type = #tpu.core_type<tc>, window_params = [{pipeline_mode = #tpu.pipeline_mode<synchronous>, transform_indices = @transform_0, window_bounds = array<i64: 2, 16, 32>}, {pipeline_mode = #tpu.pipeline_mode<synchronous>, transform_indices = @transform_1, window_bounds = array<i64: 9, 2, 128>}, {pipeline_mode = #tpu.pipeline_mode<synchronous>, transform_indices = @transform_2, window_bounds = array<i64: 88, 384>}, {pipeline_mode = #tpu.pipeline_mode<synchronous>, transform_indices = @transform_3, window_bounds = array<i64: 18, 128>}]} {
    %c0 = arith.constant 0 : index
    %c0_0 = arith.constant 0 : index
    %c0_1 = arith.constant 0 : index
    %0 = vector.load %arg1[%c0, %c0_0, %c0_1] : memref<2x16x32xf32, #tpu.memory_space<vmem>>, vector<2x16x32xf32>
    %c82 = arith.constant 82 : index
    %c0_2 = arith.constant 0 : index
    %1 = vector.load %arg3[%c82, %c0_2] : memref<88x384xf32, #tpu.memory_space<vmem>>, vector<1x32xf32>
    %c83 = arith.constant 83 : index
    %c0_3 = arith.constant 0 : index
    %2 = vector.load %arg3[%c83, %c0_3] : memref<88x384xf32, #tpu.memory_space<vmem>>, vector<1x32xf32>
    %c84 = arith.constant 84 : index
    %c0_4 = arith.constant 0 : index
    %3 = vector.load %arg3[%c84, %c0_4] : memref<88x384xf32, #tpu.memory_space<vmem>>, vector<1x64xf32>
    %c80 = arith.constant 80 : index
    %c0_5 = arith.constant 0 : index
    %4 = vector.load %arg3[%c80, %c0_5] : memref<88x384xf32, #tpu.memory_space<vmem>>, vector<1x384xf32>
    %cst = arith.constant dense<0.000000e+00> : vector<2x32xf32>
    %5 = vector.multi_reduction <add>, %0, %cst [1] : vector<2x16x32xf32> to vector<2x32xf32>
    %cst_6 = arith.constant 1.600000e+01 : f32
    %6 = vector.broadcast %cst_6 : f32 to vector<2x32xf32>
    %7 = arith.divf %5, %6 : vector<2x32xf32>
    %c32 = arith.constant 32 : index
    %c288 = arith.constant 288 : index
    %8 = vector.load %arg3[%c32, %c288] : memref<88x384xf32, #tpu.memory_space<vmem>>, vector<32x64xf32>
    %cst_7 = arith.constant dense<0.000000e+00> : vector<2x64xf32>
    %9 = tpu.matmul %7, %8, %cst_7 {dimension_numbers = #tpu.dot_dimension_numbers<[1], [0], [0], [1], [0, 0, 1, 1], [], []>} : vector<2x32xf32>, vector<32x64xf32>, vector<2x64xf32> -> vector<2x64xf32>
    %10 = vector.broadcast %3 : vector<1x64xf32> to vector<2x64xf32>
    %11 = arith.addf %9, %10 : vector<2x64xf32>
    %12 = math.tanh %11 : vector<2x64xf32>
    %13 = vector.extract_strided_slice %12 {offsets = [0, 0], sizes = [2, 32], strides = [1, 1]} : vector<2x64xf32> to vector<2x32xf32>
    %14 = vector.extract_strided_slice %12 {offsets = [0, 32], sizes = [2, 32], strides = [1, 1]} : vector<2x64xf32> to vector<2x32xf32>
    %c32_8 = arith.constant 32 : index
    %c256 = arith.constant 256 : index
    %15 = vector.load %arg3[%c32_8, %c256] : memref<88x384xf32, #tpu.memory_space<vmem>>, vector<32x32xf32>
    %16 = vector.shape_cast %0 : vector<2x16x32xf32> to vector<32x32xf32>
    %cst_9 = arith.constant dense<0.000000e+00> : vector<32x32xf32>
    %17 = tpu.matmul %16, %15, %cst_9 {dimension_numbers = #tpu.dot_dimension_numbers<[1], [0], [0], [1], [0, 0, 1, 1], [], []>} : vector<32x32xf32>, vector<32x32xf32>, vector<32x32xf32> -> vector<32x32xf32>
    %18 = vector.broadcast %1 : vector<1x32xf32> to vector<32x32xf32>
    %19 = arith.addf %17, %18 : vector<32x32xf32>
    %20 = vector.shape_cast %19 : vector<32x32xf32> to vector<2x16x32xf32>
    %21 = vector.shape_cast %2 : vector<1x32xf32> to vector<1x1x32xf32>
    %22 = vector.shape_cast %21 : vector<1x1x32xf32> to vector<1x1x32xf32>
    %23 = vector.broadcast %22 : vector<1x1x32xf32> to vector<2x16x32xf32>
    %24 = vector.shape_cast %4 : vector<1x384xf32> to vector<1x384xf32>
    %25 = vector.broadcast %24 : vector<1x384xf32> to vector<2x384xf32>
    %c0_10 = arith.constant 0 : index
    %c0_11 = arith.constant 0 : index
    %26 = vector.load %arg3[%c0_10, %c0_11] : memref<88x384xf32, #tpu.memory_space<vmem>>, vector<32x384xf32>
    %cst_12 = arith.constant dense<0.000000e+00> : vector<2x384xf32>
    %27 = tpu.matmul %13, %26, %cst_12 {dimension_numbers = #tpu.dot_dimension_numbers<[1], [0], [0], [1], [0, 0, 1, 1], [], []>} : vector<2x32xf32>, vector<32x384xf32>, vector<2x384xf32> -> vector<2x384xf32>
    %28 = arith.addf %27, %25 : vector<2x384xf32>
    %29 = vector.extract_strided_slice %28 {offsets = [0, 0], sizes = [2, 128], strides = [1, 1]} : vector<2x384xf32> to vector<2x128xf32>
    %30 = vector.extract_strided_slice %28 {offsets = [0, 128], sizes = [2, 32], strides = [1, 1]} : vector<2x384xf32> to vector<2x32xf32>
    %31 = vector.extract_strided_slice %28 {offsets = [0, 256], sizes = [2, 32], strides = [1, 1]} : vector<2x384xf32> to vector<2x32xf32>
    %32 = arith.negf %31 : vector<2x32xf32>
    %33 = math.exp %32 : vector<2x32xf32>
    %cst_13 = arith.constant 1.000000e+00 : f32
    %34 = vector.broadcast %cst_13 : f32 to vector<2x32xf32>
    %35 = arith.addf %34, %33 : vector<2x32xf32>
    %36 = arith.divf %34, %35 : vector<2x32xf32>
    %37 = vector.shape_cast %30 : vector<2x32xf32> to vector<2x1x32xf32>
    %38 = vector.broadcast %37 : vector<2x1x32xf32> to vector<2x16x32xf32>
    %39 = arith.addf %20, %38 : vector<2x16x32xf32>
    %40 = math.tanh %39 : vector<2x16x32xf32>
    %41 = arith.mulf %40, %23 : vector<2x16x32xf32>
    %cst_14 = arith.constant dense<0.000000e+00> : vector<2x16xf32>
    %42 = vector.multi_reduction <add>, %41, %cst_14 [2] : vector<2x16x32xf32> to vector<2x16xf32>
    %cst_15 = arith.constant dense<0xFF800000> : vector<2xf32>
    %43 = vector.multi_reduction <maximumf>, %42, %cst_15 [1] : vector<2x16xf32> to vector<2xf32>
    %44 = vector.shape_cast %43 : vector<2xf32> to vector<2x1xf32>
    %45 = vector.broadcast %44 : vector<2x1xf32> to vector<2x16xf32>
    %46 = arith.subf %42, %45 : vector<2x16xf32>
    %47 = math.exp %46 : vector<2x16xf32>
    %cst_16 = arith.constant dense<0.000000e+00> : vector<2xf32>
    %48 = vector.multi_reduction <add>, %47, %cst_16 [1] : vector<2x16xf32> to vector<2xf32>
    %49 = vector.shape_cast %48 : vector<2xf32> to vector<2x1xf32>
    %50 = tpu.reciprocal %49 {approx = true} : vector<2x1xf32> -> vector<2x1xf32>
    %51 = vector.broadcast %50 : vector<2x1xf32> to vector<2x16xf32>
    %52 = arith.mulf %47, %51 : vector<2x16xf32>
    %53 = vector.shape_cast %52 : vector<2x16xf32> to vector<2x16x1xf32>
    %54 = vector.broadcast %53 : vector<2x16x1xf32> to vector<2x16x32xf32>
    %55 = arith.mulf %0, %54 : vector<2x16x32xf32>
    %cst_17 = arith.constant dense<0.000000e+00> : vector<2x32xf32>
    %56 = vector.multi_reduction <add>, %55, %cst_17 [1] : vector<2x16x32xf32> to vector<2x32xf32>
    %57 = arith.mulf %36, %56 : vector<2x32xf32>
    %c32_18 = arith.constant 32 : index
    %c0_19 = arith.constant 0 : index
    %58 = vector.load %arg3[%c32_18, %c0_19] : memref<88x384xf32, #tpu.memory_space<vmem>>, vector<32x128xf32>
    %c0_20 = arith.constant 0 : index
    %c0_21 = arith.constant 0 : index
    %c0_22 = arith.constant 0 : index
    %59 = vector.load %arg2[%c0_20, %c0_21, %c0_22] : memref<9x2x128xf32, #tpu.memory_space<vmem>>, vector<1x2x128xf32>
    %60 = vector.shape_cast %59 : vector<1x2x128xf32> to vector<2x128xf32>
    %61 = arith.addf %60, %29 : vector<2x128xf32>
    %cst_23 = arith.constant dense<0.000000e+00> : vector<2x128xf32>
    %62 = tpu.matmul %57, %58, %cst_23 {dimension_numbers = #tpu.dot_dimension_numbers<[1], [0], [0], [1], [0, 0, 1, 1], [], []>} : vector<2x32xf32>, vector<32x128xf32>, vector<2x128xf32> -> vector<2x128xf32>
    %63 = arith.addf %61, %62 : vector<2x128xf32>
    %64 = vector.extract_strided_slice %63 {offsets = [0, 0], sizes = [2, 32], strides = [1, 1]} : vector<2x128xf32> to vector<2x32xf32>
    %65 = arith.negf %64 : vector<2x32xf32>
    %66 = math.exp %65 : vector<2x32xf32>
    %cst_24 = arith.constant 1.000000e+00 : f32
    %67 = vector.broadcast %cst_24 : f32 to vector<2x32xf32>
    %68 = arith.addf %67, %66 : vector<2x32xf32>
    %69 = arith.divf %67, %68 : vector<2x32xf32>
    %70 = vector.extract_strided_slice %63 {offsets = [0, 32], sizes = [2, 32], strides = [1, 1]} : vector<2x128xf32> to vector<2x32xf32>
    %71 = arith.negf %70 : vector<2x32xf32>
    %72 = math.exp %71 : vector<2x32xf32>
    %cst_25 = arith.constant 1.000000e+00 : f32
    %73 = vector.broadcast %cst_25 : f32 to vector<2x32xf32>
    %74 = arith.addf %73, %72 : vector<2x32xf32>
    %75 = arith.divf %73, %74 : vector<2x32xf32>
    %76 = vector.extract_strided_slice %63 {offsets = [0, 64], sizes = [2, 32], strides = [1, 1]} : vector<2x128xf32> to vector<2x32xf32>
    %77 = math.tanh %76 : vector<2x32xf32>
    %78 = vector.extract_strided_slice %63 {offsets = [0, 96], sizes = [2, 32], strides = [1, 1]} : vector<2x128xf32> to vector<2x32xf32>
    %79 = arith.negf %78 : vector<2x32xf32>
    %80 = math.exp %79 : vector<2x32xf32>
    %cst_26 = arith.constant 1.000000e+00 : f32
    %81 = vector.broadcast %cst_26 : f32 to vector<2x32xf32>
    %82 = arith.addf %81, %80 : vector<2x32xf32>
    %83 = arith.divf %81, %82 : vector<2x32xf32>
    %84 = arith.mulf %75, %14 : vector<2x32xf32>
    %85 = arith.mulf %69, %77 : vector<2x32xf32>
    %86 = arith.addf %84, %85 : vector<2x32xf32>
    %87 = math.tanh %86 : vector<2x32xf32>
    %88 = arith.mulf %83, %87 : vector<2x32xf32>
    %c0_27 = arith.constant 0 : index
    %c0_28 = arith.constant 0 : index
    %89 = vector.load %arg5[%c0_27, %c0_28] : memref<18x32xf32, #tpu.memory_space<vmem>>, vector<2x32xf32>
    tpu.vector_store %arg5[%c0_27, %c0_28], %88 {strides = array<i32>} : memref<18x32xf32, #tpu.memory_space<vmem>>, vector<2x32xf32>,
    %c0_29 = arith.constant 0 : index
    %c0_30 = arith.constant 0 : index
    %90 = vector.load %arg6[%c0_29, %c0_30] : memref<18x16xf32, #tpu.memory_space<vmem>>, vector<2x16xf32>
    tpu.vector_store %arg6[%c0_29, %c0_30], %52 {strides = array<i32>} : memref<18x16xf32, #tpu.memory_space<vmem>>, vector<2x16xf32>,
    %c0_31 = arith.constant 0 : index
    %c0_32 = arith.constant 0 : index
    %91 = vector.load %arg3[%c0_31, %c0_32] : memref<88x384xf32, #tpu.memory_space<vmem>>, vector<32x384xf32>
    %cst_33 = arith.constant dense<0.000000e+00> : vector<2x384xf32>
    %92 = tpu.matmul %88, %91, %cst_33 {dimension_numbers = #tpu.dot_dimension_numbers<[1], [0], [0], [1], [0, 0, 1, 1], [], []>} : vector<2x32xf32>, vector<32x384xf32>, vector<2x384xf32> -> vector<2x384xf32>
    %93 = arith.addf %92, %25 : vector<2x384xf32>
    %94 = vector.extract_strided_slice %93 {offsets = [0, 0], sizes = [2, 128], strides = [1, 1]} : vector<2x384xf32> to vector<2x128xf32>
    %95 = vector.extract_strided_slice %93 {offsets = [0, 128], sizes = [2, 32], strides = [1, 1]} : vector<2x384xf32> to vector<2x32xf32>
    %96 = vector.extract_strided_slice %93 {offsets = [0, 256], sizes = [2, 32], strides = [1, 1]} : vector<2x384xf32> to vector<2x32xf32>
    %97 = arith.negf %96 : vector<2x32xf32>
    %98 = math.exp %97 : vector<2x32xf32>
    %cst_34 = arith.constant 1.000000e+00 : f32
    %99 = vector.broadcast %cst_34 : f32 to vector<2x32xf32>
    %100 = arith.addf %99, %98 : vector<2x32xf32>
    %101 = arith.divf %99, %100 : vector<2x32xf32>
    %102 = vector.shape_cast %95 : vector<2x32xf32> to vector<2x1x32xf32>
    %103 = vector.broadcast %102 : vector<2x1x32xf32> to vector<2x16x32xf32>
    %104 = arith.addf %20, %103 : vector<2x16x32xf32>
    %105 = math.tanh %104 : vector<2x16x32xf32>
    %106 = arith.mulf %105, %23 : vector<2x16x32xf32>
    %cst_35 = arith.constant dense<0.000000e+00> : vector<2x16xf32>
    %107 = vector.multi_reduction <add>, %106, %cst_35 [2] : vector<2x16x32xf32> to vector<2x16xf32>
    %cst_36 = arith.constant dense<0xFF800000> : vector<2xf32>
    %108 = vector.multi_reduction <maximumf>, %107, %cst_36 [1] : vector<2x16xf32> to vector<2xf32>
    %109 = vector.shape_cast %108 : vector<2xf32> to vector<2x1xf32>
    %110 = vector.broadcast %109 : vector<2x1xf32> to vector<2x16xf32>
    %111 = arith.subf %107, %110 : vector<2x16xf32>
    %112 = math.exp %111 : vector<2x16xf32>
    %cst_37 = arith.constant dense<0.000000e+00> : vector<2xf32>
    %113 = vector.multi_reduction <add>, %112, %cst_37 [1] : vector<2x16xf32> to vector<2xf32>
    %114 = vector.shape_cast %113 : vector<2xf32> to vector<2x1xf32>
    %115 = tpu.reciprocal %114 {approx = true} : vector<2x1xf32> -> vector<2x1xf32>
    %116 = vector.broadcast %115 : vector<2x1xf32> to vector<2x16xf32>
    %117 = arith.mulf %112, %116 : vector<2x16xf32>
    %118 = vector.shape_cast %117 : vector<2x16xf32> to vector<2x16x1xf32>
    %119 = vector.broadcast %118 : vector<2x16x1xf32> to vector<2x16x32xf32>
    %120 = arith.mulf %0, %119 : vector<2x16x32xf32>
    %cst_38 = arith.constant dense<0.000000e+00> : vector<2x32xf32>
    %121 = vector.multi_reduction <add>, %120, %cst_38 [1] : vector<2x16x32xf32> to vector<2x32xf32>
    %122 = arith.mulf %101, %121 : vector<2x32xf32>
    %c32_39 = arith.constant 32 : index
    %c0_40 = arith.constant 0 : index
    %123 = vector.load %arg3[%c32_39, %c0_40] : memref<88x384xf32, #tpu.memory_space<vmem>>, vector<32x128xf32>
    %c1 = arith.constant 1 : index
    %c0_41 = arith.constant 0 : index
    %c0_42 = arith.constant 0 : index
    %124 = vector.load %arg2[%c1, %c0_41, %c0_42] : memref<9x2x128xf32, #tpu.memory_space<vmem>>, vector<1x2x128xf32>
    %125 = vector.shape_cast %124 : vector<1x2x128xf32> to vector<2x128xf32>
    %126 = arith.addf %125, %94 : vector<2x128xf32>
    %cst_43 = arith.constant dense<0.000000e+00> : vector<2x128xf32>
    %127 = tpu.matmul %122, %123, %cst_43 {dimension_numbers = #tpu.dot_dimension_numbers<[1], [0], [0], [1], [0, 0, 1, 1], [], []>} : vector<2x32xf32>, vector<32x128xf32>, vector<2x128xf32> -> vector<2x128xf32>
    %128 = arith.addf %126, %127 : vector<2x128xf32>
    %129 = vector.extract_strided_slice %128 {offsets = [0, 0], sizes = [2, 32], strides = [1, 1]} : vector<2x128xf32> to vector<2x32xf32>
    %130 = arith.negf %129 : vector<2x32xf32>
    %131 = math.exp %130 : vector<2x32xf32>
    %cst_44 = arith.constant 1.000000e+00 : f32
    %132 = vector.broadcast %cst_44 : f32 to vector<2x32xf32>
    %133 = arith.addf %132, %131 : vector<2x32xf32>
    %134 = arith.divf %132, %133 : vector<2x32xf32>
    %135 = vector.extract_strided_slice %128 {offsets = [0, 32], sizes = [2, 32], strides = [1, 1]} : vector<2x128xf32> to vector<2x32xf32>
    %136 = arith.negf %135 : vector<2x32xf32>
    %137 = math.exp %136 : vector<2x32xf32>
    %cst_45 = arith.constant 1.000000e+00 : f32
    %138 = vector.broadcast %cst_45 : f32 to vector<2x32xf32>
    %139 = arith.addf %138, %137 : vector<2x32xf32>
    %140 = arith.divf %138, %139 : vector<2x32xf32>
    %141 = vector.extract_strided_slice %128 {offsets = [0, 64], sizes = [2, 32], strides = [1, 1]} : vector<2x128xf32> to vector<2x32xf32>
    %142 = math.tanh %141 : vector<2x32xf32>
    %143 = vector.extract_strided_slice %128 {offsets = [0, 96], sizes = [2, 32], strides = [1, 1]} : vector<2x128xf32> to vector<2x32xf32>
    %144 = arith.negf %143 : vector<2x32xf32>
    %145 = math.exp %144 : vector<2x32xf32>
    %cst_46 = arith.constant 1.000000e+00 : f32
    %146 = vector.broadcast %cst_46 : f32 to vector<2x32xf32>
    %147 = arith.addf %146, %145 : vector<2x32xf32>
    %148 = arith.divf %146, %147 : vector<2x32xf32>
    %149 = arith.mulf %140, %86 : vector<2x32xf32>
    %150 = arith.mulf %134, %142 : vector<2x32xf32>
    %151 = arith.addf %149, %150 : vector<2x32xf32>
    %152 = math.tanh %151 : vector<2x32xf32>
    %153 = arith.mulf %148, %152 : vector<2x32xf32>
    %c2 = arith.constant 2 : index
    %c0_47 = arith.constant 0 : index
    %154 = vector.load %arg5[%c2, %c0_47] : memref<18x32xf32, #tpu.memory_space<vmem>>, vector<2x32xf32>
    tpu.vector_store %arg5[%c2, %c0_47], %153 {strides = array<i32>} : memref<18x32xf32, #tpu.memory_space<vmem>>, vector<2x32xf32>,
    %c2_48 = arith.constant 2 : index
    %c0_49 = arith.constant 0 : index
    %155 = vector.load %arg6[%c2_48, %c0_49] : memref<18x16xf32, #tpu.memory_space<vmem>>, vector<2x16xf32>
    tpu.vector_store %arg6[%c2_48, %c0_49], %117 {strides = array<i32>} : memref<18x16xf32, #tpu.memory_space<vmem>>, vector<2x16xf32>,
    %c0_50 = arith.constant 0 : index
    %c0_51 = arith.constant 0 : index
    %156 = vector.load %arg3[%c0_50, %c0_51] : memref<88x384xf32, #tpu.memory_space<vmem>>, vector<32x384xf32>
    %cst_52 = arith.constant dense<0.000000e+00> : vector<2x384xf32>
    %157 = tpu.matmul %153, %156, %cst_52 {dimension_numbers = #tpu.dot_dimension_numbers<[1], [0], [0], [1], [0, 0, 1, 1], [], []>} : vector<2x32xf32>, vector<32x384xf32>, vector<2x384xf32> -> vector<2x384xf32>
    %158 = arith.addf %157, %25 : vector<2x384xf32>
    %159 = vector.extract_strided_slice %158 {offsets = [0, 0], sizes = [2, 128], strides = [1, 1]} : vector<2x384xf32> to vector<2x128xf32>
    %160 = vector.extract_strided_slice %158 {offsets = [0, 128], sizes = [2, 32], strides = [1, 1]} : vector<2x384xf32> to vector<2x32xf32>
    %161 = vector.extract_strided_slice %158 {offsets = [0, 256], sizes = [2, 32], strides = [1, 1]} : vector<2x384xf32> to vector<2x32xf32>
    %162 = arith.negf %161 : vector<2x32xf32>
    %163 = math.exp %162 : vector<2x32xf32>
    %cst_53 = arith.constant 1.000000e+00 : f32
    %164 = vector.broadcast %cst_53 : f32 to vector<2x32xf32>
    %165 = arith.addf %164, %163 : vector<2x32xf32>
    %166 = arith.divf %164, %165 : vector<2x32xf32>
    %167 = vector.shape_cast %160 : vector<2x32xf32> to vector<2x1x32xf32>
    %168 = vector.broadcast %167 : vector<2x1x32xf32> to vector<2x16x32xf32>
    %169 = arith.addf %20, %168 : vector<2x16x32xf32>
    %170 = math.tanh %169 : vector<2x16x32xf32>
    %171 = arith.mulf %170, %23 : vector<2x16x32xf32>
    %cst_54 = arith.constant dense<0.000000e+00> : vector<2x16xf32>
    %172 = vector.multi_reduction <add>, %171, %cst_54 [2] : vector<2x16x32xf32> to vector<2x16xf32>
    %cst_55 = arith.constant dense<0xFF800000> : vector<2xf32>
    %173 = vector.multi_reduction <maximumf>, %172, %cst_55 [1] : vector<2x16xf32> to vector<2xf32>
    %174 = vector.shape_cast %173 : vector<2xf32> to vector<2x1xf32>
    %175 = vector.broadcast %174 : vector<2x1xf32> to vector<2x16xf32>
    %176 = arith.subf %172, %175 : vector<2x16xf32>
    %177 = math.exp %176 : vector<2x16xf32>
    %cst_56 = arith.constant dense<0.000000e+00> : vector<2xf32>
    %178 = vector.multi_reduction <add>, %177, %cst_56 [1] : vector<2x16xf32> to vector<2xf32>
    %179 = vector.shape_cast %178 : vector<2xf32> to vector<2x1xf32>
    %180 = tpu.reciprocal %179 {approx = true} : vector<2x1xf32> -> vector<2x1xf32>
    %181 = vector.broadcast %180 : vector<2x1xf32> to vector<2x16xf32>
    %182 = arith.mulf %177, %181 : vector<2x16xf32>
    %183 = vector.shape_cast %182 : vector<2x16xf32> to vector<2x16x1xf32>
    %184 = vector.broadcast %183 : vector<2x16x1xf32> to vector<2x16x32xf32>
    %185 = arith.mulf %0, %184 : vector<2x16x32xf32>
    %cst_57 = arith.constant dense<0.000000e+00> : vector<2x32xf32>
    %186 = vector.multi_reduction <add>, %185, %cst_57 [1] : vector<2x16x32xf32> to vector<2x32xf32>
    %187 = arith.mulf %166, %186 : vector<2x32xf32>
    %c32_58 = arith.constant 32 : index
    %c0_59 = arith.constant 0 : index
    %188 = vector.load %arg3[%c32_58, %c0_59] : memref<88x384xf32, #tpu.memory_space<vmem>>, vector<32x128xf32>
    %c2_60 = arith.constant 2 : index
    %c0_61 = arith.constant 0 : index
    %c0_62 = arith.constant 0 : index
    %189 = vector.load %arg2[%c2_60, %c0_61, %c0_62] : memref<9x2x128xf32, #tpu.memory_space<vmem>>, vector<1x2x128xf32>
    %190 = vector.shape_cast %189 : vector<1x2x128xf32> to vector<2x128xf32>
    %191 = arith.addf %190, %159 : vector<2x128xf32>
    %cst_63 = arith.constant dense<0.000000e+00> : vector<2x128xf32>
    %192 = tpu.matmul %187, %188, %cst_63 {dimension_numbers = #tpu.dot_dimension_numbers<[1], [0], [0], [1], [0, 0, 1, 1], [], []>} : vector<2x32xf32>, vector<32x128xf32>, vector<2x128xf32> -> vector<2x128xf32>
    %193 = arith.addf %191, %192 : vector<2x128xf32>
    %194 = vector.extract_strided_slice %193 {offsets = [0, 0], sizes = [2, 32], strides = [1, 1]} : vector<2x128xf32> to vector<2x32xf32>
    %195 = arith.negf %194 : vector<2x32xf32>
    %196 = math.exp %195 : vector<2x32xf32>
    %cst_64 = arith.constant 1.000000e+00 : f32
    %197 = vector.broadcast %cst_64 : f32 to vector<2x32xf32>
    %198 = arith.addf %197, %196 : vector<2x32xf32>
    %199 = arith.divf %197, %198 : vector<2x32xf32>
    %200 = vector.extract_strided_slice %193 {offsets = [0, 32], sizes = [2, 32], strides = [1, 1]} : vector<2x128xf32> to vector<2x32xf32>
    %201 = arith.negf %200 : vector<2x32xf32>
    %202 = math.exp %201 : vector<2x32xf32>
    %cst_65 = arith.constant 1.000000e+00 : f32
    %203 = vector.broadcast %cst_65 : f32 to vector<2x32xf32>
    %204 = arith.addf %203, %202 : vector<2x32xf32>
    %205 = arith.divf %203, %204 : vector<2x32xf32>
    %206 = vector.extract_strided_slice %193 {offsets = [0, 64], sizes = [2, 32], strides = [1, 1]} : vector<2x128xf32> to vector<2x32xf32>
    %207 = math.tanh %206 : vector<2x32xf32>
    %208 = vector.extract_strided_slice %193 {offsets = [0, 96], sizes = [2, 32], strides = [1, 1]} : vector<2x128xf32> to vector<2x32xf32>
    %209 = arith.negf %208 : vector<2x32xf32>
    %210 = math.exp %209 : vector<2x32xf32>
    %cst_66 = arith.constant 1.000000e+00 : f32
    %211 = vector.broadcast %cst_66 : f32 to vector<2x32xf32>
    %212 = arith.addf %211, %210 : vector<2x32xf32>
    %213 = arith.divf %211, %212 : vector<2x32xf32>
    %214 = arith.mulf %205, %151 : vector<2x32xf32>
    %215 = arith.mulf %199, %207 : vector<2x32xf32>
    %216 = arith.addf %214, %215 : vector<2x32xf32>
    %217 = math.tanh %216 : vector<2x32xf32>
    %218 = arith.mulf %213, %217 : vector<2x32xf32>
    %c4 = arith.constant 4 : index
    %c0_67 = arith.constant 0 : index
    %219 = vector.load %arg5[%c4, %c0_67] : memref<18x32xf32, #tpu.memory_space<vmem>>, vector<2x32xf32>
    tpu.vector_store %arg5[%c4, %c0_67], %218 {strides = array<i32>} : memref<18x32xf32, #tpu.memory_space<vmem>>, vector<2x32xf32>,
    %c4_68 = arith.constant 4 : index
    %c0_69 = arith.constant 0 : index
    %220 = vector.load %arg6[%c4_68, %c0_69] : memref<18x16xf32, #tpu.memory_space<vmem>>, vector<2x16xf32>
    tpu.vector_store %arg6[%c4_68, %c0_69], %182 {strides = array<i32>} : memref<18x16xf32, #tpu.memory_space<vmem>>, vector<2x16xf32>,
    %c0_70 = arith.constant 0 : index
    %c0_71 = arith.constant 0 : index
    %221 = vector.load %arg3[%c0_70, %c0_71] : memref<88x384xf32, #tpu.memory_space<vmem>>, vector<32x384xf32>
    %cst_72 = arith.constant dense<0.000000e+00> : vector<2x384xf32>
    %222 = tpu.matmul %218, %221, %cst_72 {dimension_numbers = #tpu.dot_dimension_numbers<[1], [0], [0], [1], [0, 0, 1, 1], [], []>} : vector<2x32xf32>, vector<32x384xf32>, vector<2x384xf32> -> vector<2x384xf32>
    %223 = arith.addf %222, %25 : vector<2x384xf32>
    %224 = vector.extract_strided_slice %223 {offsets = [0, 0], sizes = [2, 128], strides = [1, 1]} : vector<2x384xf32> to vector<2x128xf32>
    %225 = vector.extract_strided_slice %223 {offsets = [0, 128], sizes = [2, 32], strides = [1, 1]} : vector<2x384xf32> to vector<2x32xf32>
    %226 = vector.extract_strided_slice %223 {offsets = [0, 256], sizes = [2, 32], strides = [1, 1]} : vector<2x384xf32> to vector<2x32xf32>
    %227 = arith.negf %226 : vector<2x32xf32>
    %228 = math.exp %227 : vector<2x32xf32>
    %cst_73 = arith.constant 1.000000e+00 : f32
    %229 = vector.broadcast %cst_73 : f32 to vector<2x32xf32>
    %230 = arith.addf %229, %228 : vector<2x32xf32>
    %231 = arith.divf %229, %230 : vector<2x32xf32>
    %232 = vector.shape_cast %225 : vector<2x32xf32> to vector<2x1x32xf32>
    %233 = vector.broadcast %232 : vector<2x1x32xf32> to vector<2x16x32xf32>
    %234 = arith.addf %20, %233 : vector<2x16x32xf32>
    %235 = math.tanh %234 : vector<2x16x32xf32>
    %236 = arith.mulf %235, %23 : vector<2x16x32xf32>
    %cst_74 = arith.constant dense<0.000000e+00> : vector<2x16xf32>
    %237 = vector.multi_reduction <add>, %236, %cst_74 [2] : vector<2x16x32xf32> to vector<2x16xf32>
    %cst_75 = arith.constant dense<0xFF800000> : vector<2xf32>
    %238 = vector.multi_reduction <maximumf>, %237, %cst_75 [1] : vector<2x16xf32> to vector<2xf32>
    %239 = vector.shape_cast %238 : vector<2xf32> to vector<2x1xf32>
    %240 = vector.broadcast %239 : vector<2x1xf32> to vector<2x16xf32>
    %241 = arith.subf %237, %240 : vector<2x16xf32>
    %242 = math.exp %241 : vector<2x16xf32>
    %cst_76 = arith.constant dense<0.000000e+00> : vector<2xf32>
    %243 = vector.multi_reduction <add>, %242, %cst_76 [1] : vector<2x16xf32> to vector<2xf32>
    %244 = vector.shape_cast %243 : vector<2xf32> to vector<2x1xf32>
    %245 = tpu.reciprocal %244 {approx = true} : vector<2x1xf32> -> vector<2x1xf32>
    %246 = vector.broadcast %245 : vector<2x1xf32> to vector<2x16xf32>
    %247 = arith.mulf %242, %246 : vector<2x16xf32>
    %248 = vector.shape_cast %247 : vector<2x16xf32> to vector<2x16x1xf32>
    %249 = vector.broadcast %248 : vector<2x16x1xf32> to vector<2x16x32xf32>
    %250 = arith.mulf %0, %249 : vector<2x16x32xf32>
    %cst_77 = arith.constant dense<0.000000e+00> : vector<2x32xf32>
    %251 = vector.multi_reduction <add>, %250, %cst_77 [1] : vector<2x16x32xf32> to vector<2x32xf32>
    %252 = arith.mulf %231, %251 : vector<2x32xf32>
    %c32_78 = arith.constant 32 : index
    %c0_79 = arith.constant 0 : index
    %253 = vector.load %arg3[%c32_78, %c0_79] : memref<88x384xf32, #tpu.memory_space<vmem>>, vector<32x128xf32>
    %c3 = arith.constant 3 : index
    %c0_80 = arith.constant 0 : index
    %c0_81 = arith.constant 0 : index
    %254 = vector.load %arg2[%c3, %c0_80, %c0_81] : memref<9x2x128xf32, #tpu.memory_space<vmem>>, vector<1x2x128xf32>
    %255 = vector.shape_cast %254 : vector<1x2x128xf32> to vector<2x128xf32>
    %256 = arith.addf %255, %224 : vector<2x128xf32>
    %cst_82 = arith.constant dense<0.000000e+00> : vector<2x128xf32>
    %257 = tpu.matmul %252, %253, %cst_82 {dimension_numbers = #tpu.dot_dimension_numbers<[1], [0], [0], [1], [0, 0, 1, 1], [], []>} : vector<2x32xf32>, vector<32x128xf32>, vector<2x128xf32> -> vector<2x128xf32>
    %258 = arith.addf %256, %257 : vector<2x128xf32>
    %259 = vector.extract_strided_slice %258 {offsets = [0, 0], sizes = [2, 32], strides = [1, 1]} : vector<2x128xf32> to vector<2x32xf32>
    %260 = arith.negf %259 : vector<2x32xf32>
    %261 = math.exp %260 : vector<2x32xf32>
    %cst_83 = arith.constant 1.000000e+00 : f32
    %262 = vector.broadcast %cst_83 : f32 to vector<2x32xf32>
    %263 = arith.addf %262, %261 : vector<2x32xf32>
    %264 = arith.divf %262, %263 : vector<2x32xf32>
    %265 = vector.extract_strided_slice %258 {offsets = [0, 32], sizes = [2, 32], strides = [1, 1]} : vector<2x128xf32> to vector<2x32xf32>
    %266 = arith.negf %265 : vector<2x32xf32>
    %267 = math.exp %266 : vector<2x32xf32>
    %cst_84 = arith.constant 1.000000e+00 : f32
    %268 = vector.broadcast %cst_84 : f32 to vector<2x32xf32>
    %269 = arith.addf %268, %267 : vector<2x32xf32>
    %270 = arith.divf %268, %269 : vector<2x32xf32>
    %271 = vector.extract_strided_slice %258 {offsets = [0, 64], sizes = [2, 32], strides = [1, 1]} : vector<2x128xf32> to vector<2x32xf32>
    %272 = math.tanh %271 : vector<2x32xf32>
    %273 = vector.extract_strided_slice %258 {offsets = [0, 96], sizes = [2, 32], strides = [1, 1]} : vector<2x128xf32> to vector<2x32xf32>
    %274 = arith.negf %273 : vector<2x32xf32>
    %275 = math.exp %274 : vector<2x32xf32>
    %cst_85 = arith.constant 1.000000e+00 : f32
    %276 = vector.broadcast %cst_85 : f32 to vector<2x32xf32>
    %277 = arith.addf %276, %275 : vector<2x32xf32>
    %278 = arith.divf %276, %277 : vector<2x32xf32>
    %279 = arith.mulf %270, %216 : vector<2x32xf32>
    %280 = arith.mulf %264, %272 : vector<2x32xf32>
    %281 = arith.addf %279, %280 : vector<2x32xf32>
    %282 = math.tanh %281 : vector<2x32xf32>
    %283 = arith.mulf %278, %282 : vector<2x32xf32>
    %c6 = arith.constant 6 : index
    %c0_86 = arith.constant 0 : index
    %284 = vector.load %arg5[%c6, %c0_86] : memref<18x32xf32, #tpu.memory_space<vmem>>, vector<2x32xf32>
    tpu.vector_store %arg5[%c6, %c0_86], %283 {strides = array<i32>} : memref<18x32xf32, #tpu.memory_space<vmem>>, vector<2x32xf32>,
    %c6_87 = arith.constant 6 : index
    %c0_88 = arith.constant 0 : index
    %285 = vector.load %arg6[%c6_87, %c0_88] : memref<18x16xf32, #tpu.memory_space<vmem>>, vector<2x16xf32>
    tpu.vector_store %arg6[%c6_87, %c0_88], %247 {strides = array<i32>} : memref<18x16xf32, #tpu.memory_space<vmem>>, vector<2x16xf32>,
    %c0_89 = arith.constant 0 : index
    %c0_90 = arith.constant 0 : index
    %286 = vector.load %arg3[%c0_89, %c0_90] : memref<88x384xf32, #tpu.memory_space<vmem>>, vector<32x384xf32>
    %cst_91 = arith.constant dense<0.000000e+00> : vector<2x384xf32>
    %287 = tpu.matmul %283, %286, %cst_91 {dimension_numbers = #tpu.dot_dimension_numbers<[1], [0], [0], [1], [0, 0, 1, 1], [], []>} : vector<2x32xf32>, vector<32x384xf32>, vector<2x384xf32> -> vector<2x384xf32>
    %288 = arith.addf %287, %25 : vector<2x384xf32>
    %289 = vector.extract_strided_slice %288 {offsets = [0, 0], sizes = [2, 128], strides = [1, 1]} : vector<2x384xf32> to vector<2x128xf32>
    %290 = vector.extract_strided_slice %288 {offsets = [0, 128], sizes = [2, 32], strides = [1, 1]} : vector<2x384xf32> to vector<2x32xf32>
    %291 = vector.extract_strided_slice %288 {offsets = [0, 256], sizes = [2, 32], strides = [1, 1]} : vector<2x384xf32> to vector<2x32xf32>
    %292 = arith.negf %291 : vector<2x32xf32>
    %293 = math.exp %292 : vector<2x32xf32>
    %cst_92 = arith.constant 1.000000e+00 : f32
    %294 = vector.broadcast %cst_92 : f32 to vector<2x32xf32>
    %295 = arith.addf %294, %293 : vector<2x32xf32>
    %296 = arith.divf %294, %295 : vector<2x32xf32>
    %297 = vector.shape_cast %290 : vector<2x32xf32> to vector<2x1x32xf32>
    %298 = vector.broadcast %297 : vector<2x1x32xf32> to vector<2x16x32xf32>
    %299 = arith.addf %20, %298 : vector<2x16x32xf32>
    %300 = math.tanh %299 : vector<2x16x32xf32>
    %301 = arith.mulf %300, %23 : vector<2x16x32xf32>
    %cst_93 = arith.constant dense<0.000000e+00> : vector<2x16xf32>
    %302 = vector.multi_reduction <add>, %301, %cst_93 [2] : vector<2x16x32xf32> to vector<2x16xf32>
    %cst_94 = arith.constant dense<0xFF800000> : vector<2xf32>
    %303 = vector.multi_reduction <maximumf>, %302, %cst_94 [1] : vector<2x16xf32> to vector<2xf32>
    %304 = vector.shape_cast %303 : vector<2xf32> to vector<2x1xf32>
    %305 = vector.broadcast %304 : vector<2x1xf32> to vector<2x16xf32>
    %306 = arith.subf %302, %305 : vector<2x16xf32>
    %307 = math.exp %306 : vector<2x16xf32>
    %cst_95 = arith.constant dense<0.000000e+00> : vector<2xf32>
    %308 = vector.multi_reduction <add>, %307, %cst_95 [1] : vector<2x16xf32> to vector<2xf32>
    %309 = vector.shape_cast %308 : vector<2xf32> to vector<2x1xf32>
    %310 = tpu.reciprocal %309 {approx = true} : vector<2x1xf32> -> vector<2x1xf32>
    %311 = vector.broadcast %310 : vector<2x1xf32> to vector<2x16xf32>
    %312 = arith.mulf %307, %311 : vector<2x16xf32>
    %313 = vector.shape_cast %312 : vector<2x16xf32> to vector<2x16x1xf32>
    %314 = vector.broadcast %313 : vector<2x16x1xf32> to vector<2x16x32xf32>
    %315 = arith.mulf %0, %314 : vector<2x16x32xf32>
    %cst_96 = arith.constant dense<0.000000e+00> : vector<2x32xf32>
    %316 = vector.multi_reduction <add>, %315, %cst_96 [1] : vector<2x16x32xf32> to vector<2x32xf32>
    %317 = arith.mulf %296, %316 : vector<2x32xf32>
    %c32_97 = arith.constant 32 : index
    %c0_98 = arith.constant 0 : index
    %318 = vector.load %arg3[%c32_97, %c0_98] : memref<88x384xf32, #tpu.memory_space<vmem>>, vector<32x128xf32>
    %c4_99 = arith.constant 4 : index
    %c0_100 = arith.constant 0 : index
    %c0_101 = arith.constant 0 : index
    %319 = vector.load %arg2[%c4_99, %c0_100, %c0_101] : memref<9x2x128xf32, #tpu.memory_space<vmem>>, vector<1x2x128xf32>
    %320 = vector.shape_cast %319 : vector<1x2x128xf32> to vector<2x128xf32>
    %321 = arith.addf %320, %289 : vector<2x128xf32>
    %cst_102 = arith.constant dense<0.000000e+00> : vector<2x128xf32>
    %322 = tpu.matmul %317, %318, %cst_102 {dimension_numbers = #tpu.dot_dimension_numbers<[1], [0], [0], [1], [0, 0, 1, 1], [], []>} : vector<2x32xf32>, vector<32x128xf32>, vector<2x128xf32> -> vector<2x128xf32>
    %323 = arith.addf %321, %322 : vector<2x128xf32>
    %324 = vector.extract_strided_slice %323 {offsets = [0, 0], sizes = [2, 32], strides = [1, 1]} : vector<2x128xf32> to vector<2x32xf32>
    %325 = arith.negf %324 : vector<2x32xf32>
    %326 = math.exp %325 : vector<2x32xf32>
    %cst_103 = arith.constant 1.000000e+00 : f32
    %327 = vector.broadcast %cst_103 : f32 to vector<2x32xf32>
    %328 = arith.addf %327, %326 : vector<2x32xf32>
    %329 = arith.divf %327, %328 : vector<2x32xf32>
    %330 = vector.extract_strided_slice %323 {offsets = [0, 32], sizes = [2, 32], strides = [1, 1]} : vector<2x128xf32> to vector<2x32xf32>
    %331 = arith.negf %330 : vector<2x32xf32>
    %332 = math.exp %331 : vector<2x32xf32>
    %cst_104 = arith.constant 1.000000e+00 : f32
    %333 = vector.broadcast %cst_104 : f32 to vector<2x32xf32>
    %334 = arith.addf %333, %332 : vector<2x32xf32>
    %335 = arith.divf %333, %334 : vector<2x32xf32>
    %336 = vector.extract_strided_slice %323 {offsets = [0, 64], sizes = [2, 32], strides = [1, 1]} : vector<2x128xf32> to vector<2x32xf32>
    %337 = math.tanh %336 : vector<2x32xf32>
    %338 = vector.extract_strided_slice %323 {offsets = [0, 96], sizes = [2, 32], strides = [1, 1]} : vector<2x128xf32> to vector<2x32xf32>
    %339 = arith.negf %338 : vector<2x32xf32>
    %340 = math.exp %339 : vector<2x32xf32>
    %cst_105 = arith.constant 1.000000e+00 : f32
    %341 = vector.broadcast %cst_105 : f32 to vector<2x32xf32>
    %342 = arith.addf %341, %340 : vector<2x32xf32>
    %343 = arith.divf %341, %342 : vector<2x32xf32>
    %344 = arith.mulf %335, %281 : vector<2x32xf32>
    %345 = arith.mulf %329, %337 : vector<2x32xf32>
    %346 = arith.addf %344, %345 : vector<2x32xf32>
    %347 = math.tanh %346 : vector<2x32xf32>
    %348 = arith.mulf %343, %347 : vector<2x32xf32>
    %c8 = arith.constant 8 : index
    %c0_106 = arith.constant 0 : index
    %349 = vector.load %arg5[%c8, %c0_106] : memref<18x32xf32, #tpu.memory_space<vmem>>, vector<2x32xf32>
    tpu.vector_store %arg5[%c8, %c0_106], %348 {strides = array<i32>} : memref<18x32xf32, #tpu.memory_space<vmem>>, vector<2x32xf32>,
    %c8_107 = arith.constant 8 : index
    %c0_108 = arith.constant 0 : index
    %350 = vector.load %arg6[%c8_107, %c0_108] : memref<18x16xf32, #tpu.memory_space<vmem>>, vector<2x16xf32>
    tpu.vector_store %arg6[%c8_107, %c0_108], %312 {strides = array<i32>} : memref<18x16xf32, #tpu.memory_space<vmem>>, vector<2x16xf32>,
    %c0_109 = arith.constant 0 : index
    %c0_110 = arith.constant 0 : index
    %351 = vector.load %arg3[%c0_109, %c0_110] : memref<88x384xf32, #tpu.memory_space<vmem>>, vector<32x384xf32>
    %cst_111 = arith.constant dense<0.000000e+00> : vector<2x384xf32>
    %352 = tpu.matmul %348, %351, %cst_111 {dimension_numbers = #tpu.dot_dimension_numbers<[1], [0], [0], [1], [0, 0, 1, 1], [], []>} : vector<2x32xf32>, vector<32x384xf32>, vector<2x384xf32> -> vector<2x384xf32>
    %353 = arith.addf %352, %25 : vector<2x384xf32>
    %354 = vector.extract_strided_slice %353 {offsets = [0, 0], sizes = [2, 128], strides = [1, 1]} : vector<2x384xf32> to vector<2x128xf32>
    %355 = vector.extract_strided_slice %353 {offsets = [0, 128], sizes = [2, 32], strides = [1, 1]} : vector<2x384xf32> to vector<2x32xf32>
    %356 = vector.extract_strided_slice %353 {offsets = [0, 256], sizes = [2, 32], strides = [1, 1]} : vector<2x384xf32> to vector<2x32xf32>
    %357 = arith.negf %356 : vector<2x32xf32>
    %358 = math.exp %357 : vector<2x32xf32>
    %cst_112 = arith.constant 1.000000e+00 : f32
    %359 = vector.broadcast %cst_112 : f32 to vector<2x32xf32>
    %360 = arith.addf %359, %358 : vector<2x32xf32>
    %361 = arith.divf %359, %360 : vector<2x32xf32>
    %362 = vector.shape_cast %355 : vector<2x32xf32> to vector<2x1x32xf32>
    %363 = vector.broadcast %362 : vector<2x1x32xf32> to vector<2x16x32xf32>
    %364 = arith.addf %20, %363 : vector<2x16x32xf32>
    %365 = math.tanh %364 : vector<2x16x32xf32>
    %366 = arith.mulf %365, %23 : vector<2x16x32xf32>
    %cst_113 = arith.constant dense<0.000000e+00> : vector<2x16xf32>
    %367 = vector.multi_reduction <add>, %366, %cst_113 [2] : vector<2x16x32xf32> to vector<2x16xf32>
    %cst_114 = arith.constant dense<0xFF800000> : vector<2xf32>
    %368 = vector.multi_reduction <maximumf>, %367, %cst_114 [1] : vector<2x16xf32> to vector<2xf32>
    %369 = vector.shape_cast %368 : vector<2xf32> to vector<2x1xf32>
    %370 = vector.broadcast %369 : vector<2x1xf32> to vector<2x16xf32>
    %371 = arith.subf %367, %370 : vector<2x16xf32>
    %372 = math.exp %371 : vector<2x16xf32>
    %cst_115 = arith.constant dense<0.000000e+00> : vector<2xf32>
    %373 = vector.multi_reduction <add>, %372, %cst_115 [1] : vector<2x16xf32> to vector<2xf32>
    %374 = vector.shape_cast %373 : vector<2xf32> to vector<2x1xf32>
    %375 = tpu.reciprocal %374 {approx = true} : vector<2x1xf32> -> vector<2x1xf32>
    %376 = vector.broadcast %375 : vector<2x1xf32> to vector<2x16xf32>
    %377 = arith.mulf %372, %376 : vector<2x16xf32>
    %378 = vector.shape_cast %377 : vector<2x16xf32> to vector<2x16x1xf32>
    %379 = vector.broadcast %378 : vector<2x16x1xf32> to vector<2x16x32xf32>
    %380 = arith.mulf %0, %379 : vector<2x16x32xf32>
    %cst_116 = arith.constant dense<0.000000e+00> : vector<2x32xf32>
    %381 = vector.multi_reduction <add>, %380, %cst_116 [1] : vector<2x16x32xf32> to vector<2x32xf32>
    %382 = arith.mulf %361, %381 : vector<2x32xf32>
    %c32_117 = arith.constant 32 : index
    %c0_118 = arith.constant 0 : index
    %383 = vector.load %arg3[%c32_117, %c0_118] : memref<88x384xf32, #tpu.memory_space<vmem>>, vector<32x128xf32>
    %c5 = arith.constant 5 : index
    %c0_119 = arith.constant 0 : index
    %c0_120 = arith.constant 0 : index
    %384 = vector.load %arg2[%c5, %c0_119, %c0_120] : memref<9x2x128xf32, #tpu.memory_space<vmem>>, vector<1x2x128xf32>
    %385 = vector.shape_cast %384 : vector<1x2x128xf32> to vector<2x128xf32>
    %386 = arith.addf %385, %354 : vector<2x128xf32>
    %cst_121 = arith.constant dense<0.000000e+00> : vector<2x128xf32>
    %387 = tpu.matmul %382, %383, %cst_121 {dimension_numbers = #tpu.dot_dimension_numbers<[1], [0], [0], [1], [0, 0, 1, 1], [], []>} : vector<2x32xf32>, vector<32x128xf32>, vector<2x128xf32> -> vector<2x128xf32>
    %388 = arith.addf %386, %387 : vector<2x128xf32>
    %389 = vector.extract_strided_slice %388 {offsets = [0, 0], sizes = [2, 32], strides = [1, 1]} : vector<2x128xf32> to vector<2x32xf32>
    %390 = arith.negf %389 : vector<2x32xf32>
    %391 = math.exp %390 : vector<2x32xf32>
    %cst_122 = arith.constant 1.000000e+00 : f32
    %392 = vector.broadcast %cst_122 : f32 to vector<2x32xf32>
    %393 = arith.addf %392, %391 : vector<2x32xf32>
    %394 = arith.divf %392, %393 : vector<2x32xf32>
    %395 = vector.extract_strided_slice %388 {offsets = [0, 32], sizes = [2, 32], strides = [1, 1]} : vector<2x128xf32> to vector<2x32xf32>
    %396 = arith.negf %395 : vector<2x32xf32>
    %397 = math.exp %396 : vector<2x32xf32>
    %cst_123 = arith.constant 1.000000e+00 : f32
    %398 = vector.broadcast %cst_123 : f32 to vector<2x32xf32>
    %399 = arith.addf %398, %397 : vector<2x32xf32>
    %400 = arith.divf %398, %399 : vector<2x32xf32>
    %401 = vector.extract_strided_slice %388 {offsets = [0, 64], sizes = [2, 32], strides = [1, 1]} : vector<2x128xf32> to vector<2x32xf32>
    %402 = math.tanh %401 : vector<2x32xf32>
    %403 = vector.extract_strided_slice %388 {offsets = [0, 96], sizes = [2, 32], strides = [1, 1]} : vector<2x128xf32> to vector<2x32xf32>
    %404 = arith.negf %403 : vector<2x32xf32>
    %405 = math.exp %404 : vector<2x32xf32>
    %cst_124 = arith.constant 1.000000e+00 : f32
    %406 = vector.broadcast %cst_124 : f32 to vector<2x32xf32>
    %407 = arith.addf %406, %405 : vector<2x32xf32>
    %408 = arith.divf %406, %407 : vector<2x32xf32>
    %409 = arith.mulf %400, %346 : vector<2x32xf32>
    %410 = arith.mulf %394, %402 : vector<2x32xf32>
    %411 = arith.addf %409, %410 : vector<2x32xf32>
    %412 = math.tanh %411 : vector<2x32xf32>
    %413 = arith.mulf %408, %412 : vector<2x32xf32>
    %c10 = arith.constant 10 : index
    %c0_125 = arith.constant 0 : index
    %414 = vector.load %arg5[%c10, %c0_125] : memref<18x32xf32, #tpu.memory_space<vmem>>, vector<2x32xf32>
    tpu.vector_store %arg5[%c10, %c0_125], %413 {strides = array<i32>} : memref<18x32xf32, #tpu.memory_space<vmem>>, vector<2x32xf32>,
    %c10_126 = arith.constant 10 : index
    %c0_127 = arith.constant 0 : index
    %415 = vector.load %arg6[%c10_126, %c0_127] : memref<18x16xf32, #tpu.memory_space<vmem>>, vector<2x16xf32>
    tpu.vector_store %arg6[%c10_126, %c0_127], %377 {strides = array<i32>} : memref<18x16xf32, #tpu.memory_space<vmem>>, vector<2x16xf32>,
    %c0_128 = arith.constant 0 : index
    %c0_129 = arith.constant 0 : index
    %416 = vector.load %arg3[%c0_128, %c0_129] : memref<88x384xf32, #tpu.memory_space<vmem>>, vector<32x384xf32>
    %cst_130 = arith.constant dense<0.000000e+00> : vector<2x384xf32>
    %417 = tpu.matmul %413, %416, %cst_130 {dimension_numbers = #tpu.dot_dimension_numbers<[1], [0], [0], [1], [0, 0, 1, 1], [], []>} : vector<2x32xf32>, vector<32x384xf32>, vector<2x384xf32> -> vector<2x384xf32>
    %418 = arith.addf %417, %25 : vector<2x384xf32>
    %419 = vector.extract_strided_slice %418 {offsets = [0, 0], sizes = [2, 128], strides = [1, 1]} : vector<2x384xf32> to vector<2x128xf32>
    %420 = vector.extract_strided_slice %418 {offsets = [0, 128], sizes = [2, 32], strides = [1, 1]} : vector<2x384xf32> to vector<2x32xf32>
    %421 = vector.extract_strided_slice %418 {offsets = [0, 256], sizes = [2, 32], strides = [1, 1]} : vector<2x384xf32> to vector<2x32xf32>
    %422 = arith.negf %421 : vector<2x32xf32>
    %423 = math.exp %422 : vector<2x32xf32>
    %cst_131 = arith.constant 1.000000e+00 : f32
    %424 = vector.broadcast %cst_131 : f32 to vector<2x32xf32>
    %425 = arith.addf %424, %423 : vector<2x32xf32>
    %426 = arith.divf %424, %425 : vector<2x32xf32>
    %427 = vector.shape_cast %420 : vector<2x32xf32> to vector<2x1x32xf32>
    %428 = vector.broadcast %427 : vector<2x1x32xf32> to vector<2x16x32xf32>
    %429 = arith.addf %20, %428 : vector<2x16x32xf32>
    %430 = math.tanh %429 : vector<2x16x32xf32>
    %431 = arith.mulf %430, %23 : vector<2x16x32xf32>
    %cst_132 = arith.constant dense<0.000000e+00> : vector<2x16xf32>
    %432 = vector.multi_reduction <add>, %431, %cst_132 [2] : vector<2x16x32xf32> to vector<2x16xf32>
    %cst_133 = arith.constant dense<0xFF800000> : vector<2xf32>
    %433 = vector.multi_reduction <maximumf>, %432, %cst_133 [1] : vector<2x16xf32> to vector<2xf32>
    %434 = vector.shape_cast %433 : vector<2xf32> to vector<2x1xf32>
    %435 = vector.broadcast %434 : vector<2x1xf32> to vector<2x16xf32>
    %436 = arith.subf %432, %435 : vector<2x16xf32>
    %437 = math.exp %436 : vector<2x16xf32>
    %cst_134 = arith.constant dense<0.000000e+00> : vector<2xf32>
    %438 = vector.multi_reduction <add>, %437, %cst_134 [1] : vector<2x16xf32> to vector<2xf32>
    %439 = vector.shape_cast %438 : vector<2xf32> to vector<2x1xf32>
    %440 = tpu.reciprocal %439 {approx = true} : vector<2x1xf32> -> vector<2x1xf32>
    %441 = vector.broadcast %440 : vector<2x1xf32> to vector<2x16xf32>
    %442 = arith.mulf %437, %441 : vector<2x16xf32>
    %443 = vector.shape_cast %442 : vector<2x16xf32> to vector<2x16x1xf32>
    %444 = vector.broadcast %443 : vector<2x16x1xf32> to vector<2x16x32xf32>
    %445 = arith.mulf %0, %444 : vector<2x16x32xf32>
    %cst_135 = arith.constant dense<0.000000e+00> : vector<2x32xf32>
    %446 = vector.multi_reduction <add>, %445, %cst_135 [1] : vector<2x16x32xf32> to vector<2x32xf32>
    %447 = arith.mulf %426, %446 : vector<2x32xf32>
    %c32_136 = arith.constant 32 : index
    %c0_137 = arith.constant 0 : index
    %448 = vector.load %arg3[%c32_136, %c0_137] : memref<88x384xf32, #tpu.memory_space<vmem>>, vector<32x128xf32>
    %c6_138 = arith.constant 6 : index
    %c0_139 = arith.constant 0 : index
    %c0_140 = arith.constant 0 : index
    %449 = vector.load %arg2[%c6_138, %c0_139, %c0_140] : memref<9x2x128xf32, #tpu.memory_space<vmem>>, vector<1x2x128xf32>
    %450 = vector.shape_cast %449 : vector<1x2x128xf32> to vector<2x128xf32>
    %451 = arith.addf %450, %419 : vector<2x128xf32>
    %cst_141 = arith.constant dense<0.000000e+00> : vector<2x128xf32>
    %452 = tpu.matmul %447, %448, %cst_141 {dimension_numbers = #tpu.dot_dimension_numbers<[1], [0], [0], [1], [0, 0, 1, 1], [], []>} : vector<2x32xf32>, vector<32x128xf32>, vector<2x128xf32> -> vector<2x128xf32>
    %453 = arith.addf %451, %452 : vector<2x128xf32>
    %454 = vector.extract_strided_slice %453 {offsets = [0, 0], sizes = [2, 32], strides = [1, 1]} : vector<2x128xf32> to vector<2x32xf32>
    %455 = arith.negf %454 : vector<2x32xf32>
    %456 = math.exp %455 : vector<2x32xf32>
    %cst_142 = arith.constant 1.000000e+00 : f32
    %457 = vector.broadcast %cst_142 : f32 to vector<2x32xf32>
    %458 = arith.addf %457, %456 : vector<2x32xf32>
    %459 = arith.divf %457, %458 : vector<2x32xf32>
    %460 = vector.extract_strided_slice %453 {offsets = [0, 32], sizes = [2, 32], strides = [1, 1]} : vector<2x128xf32> to vector<2x32xf32>
    %461 = arith.negf %460 : vector<2x32xf32>
    %462 = math.exp %461 : vector<2x32xf32>
    %cst_143 = arith.constant 1.000000e+00 : f32
    %463 = vector.broadcast %cst_143 : f32 to vector<2x32xf32>
    %464 = arith.addf %463, %462 : vector<2x32xf32>
    %465 = arith.divf %463, %464 : vector<2x32xf32>
    %466 = vector.extract_strided_slice %453 {offsets = [0, 64], sizes = [2, 32], strides = [1, 1]} : vector<2x128xf32> to vector<2x32xf32>
    %467 = math.tanh %466 : vector<2x32xf32>
    %468 = vector.extract_strided_slice %453 {offsets = [0, 96], sizes = [2, 32], strides = [1, 1]} : vector<2x128xf32> to vector<2x32xf32>
    %469 = arith.negf %468 : vector<2x32xf32>
    %470 = math.exp %469 : vector<2x32xf32>
    %cst_144 = arith.constant 1.000000e+00 : f32
    %471 = vector.broadcast %cst_144 : f32 to vector<2x32xf32>
    %472 = arith.addf %471, %470 : vector<2x32xf32>
    %473 = arith.divf %471, %472 : vector<2x32xf32>
    %474 = arith.mulf %465, %411 : vector<2x32xf32>
    %475 = arith.mulf %459, %467 : vector<2x32xf32>
    %476 = arith.addf %474, %475 : vector<2x32xf32>
    %477 = math.tanh %476 : vector<2x32xf32>
    %478 = arith.mulf %473, %477 : vector<2x32xf32>
    %c12 = arith.constant 12 : index
    %c0_145 = arith.constant 0 : index
    %479 = vector.load %arg5[%c12, %c0_145] : memref<18x32xf32, #tpu.memory_space<vmem>>, vector<2x32xf32>
    tpu.vector_store %arg5[%c12, %c0_145], %478 {strides = array<i32>} : memref<18x32xf32, #tpu.memory_space<vmem>>, vector<2x32xf32>,
    %c12_146 = arith.constant 12 : index
    %c0_147 = arith.constant 0 : index
    %480 = vector.load %arg6[%c12_146, %c0_147] : memref<18x16xf32, #tpu.memory_space<vmem>>, vector<2x16xf32>
    tpu.vector_store %arg6[%c12_146, %c0_147], %442 {strides = array<i32>} : memref<18x16xf32, #tpu.memory_space<vmem>>, vector<2x16xf32>,
    %c0_148 = arith.constant 0 : index
    %c0_149 = arith.constant 0 : index
    %481 = vector.load %arg3[%c0_148, %c0_149] : memref<88x384xf32, #tpu.memory_space<vmem>>, vector<32x384xf32>
    %cst_150 = arith.constant dense<0.000000e+00> : vector<2x384xf32>
    %482 = tpu.matmul %478, %481, %cst_150 {dimension_numbers = #tpu.dot_dimension_numbers<[1], [0], [0], [1], [0, 0, 1, 1], [], []>} : vector<2x32xf32>, vector<32x384xf32>, vector<2x384xf32> -> vector<2x384xf32>
    %483 = arith.addf %482, %25 : vector<2x384xf32>
    %484 = vector.extract_strided_slice %483 {offsets = [0, 0], sizes = [2, 128], strides = [1, 1]} : vector<2x384xf32> to vector<2x128xf32>
    %485 = vector.extract_strided_slice %483 {offsets = [0, 128], sizes = [2, 32], strides = [1, 1]} : vector<2x384xf32> to vector<2x32xf32>
    %486 = vector.extract_strided_slice %483 {offsets = [0, 256], sizes = [2, 32], strides = [1, 1]} : vector<2x384xf32> to vector<2x32xf32>
    %487 = arith.negf %486 : vector<2x32xf32>
    %488 = math.exp %487 : vector<2x32xf32>
    %cst_151 = arith.constant 1.000000e+00 : f32
    %489 = vector.broadcast %cst_151 : f32 to vector<2x32xf32>
    %490 = arith.addf %489, %488 : vector<2x32xf32>
    %491 = arith.divf %489, %490 : vector<2x32xf32>
    %492 = vector.shape_cast %485 : vector<2x32xf32> to vector<2x1x32xf32>
    %493 = vector.broadcast %492 : vector<2x1x32xf32> to vector<2x16x32xf32>
    %494 = arith.addf %20, %493 : vector<2x16x32xf32>
    %495 = math.tanh %494 : vector<2x16x32xf32>
    %496 = arith.mulf %495, %23 : vector<2x16x32xf32>
    %cst_152 = arith.constant dense<0.000000e+00> : vector<2x16xf32>
    %497 = vector.multi_reduction <add>, %496, %cst_152 [2] : vector<2x16x32xf32> to vector<2x16xf32>
    %cst_153 = arith.constant dense<0xFF800000> : vector<2xf32>
    %498 = vector.multi_reduction <maximumf>, %497, %cst_153 [1] : vector<2x16xf32> to vector<2xf32>
    %499 = vector.shape_cast %498 : vector<2xf32> to vector<2x1xf32>
    %500 = vector.broadcast %499 : vector<2x1xf32> to vector<2x16xf32>
    %501 = arith.subf %497, %500 : vector<2x16xf32>
    %502 = math.exp %501 : vector<2x16xf32>
    %cst_154 = arith.constant dense<0.000000e+00> : vector<2xf32>
    %503 = vector.multi_reduction <add>, %502, %cst_154 [1] : vector<2x16xf32> to vector<2xf32>
    %504 = vector.shape_cast %503 : vector<2xf32> to vector<2x1xf32>
    %505 = tpu.reciprocal %504 {approx = true} : vector<2x1xf32> -> vector<2x1xf32>
    %506 = vector.broadcast %505 : vector<2x1xf32> to vector<2x16xf32>
    %507 = arith.mulf %502, %506 : vector<2x16xf32>
    %508 = vector.shape_cast %507 : vector<2x16xf32> to vector<2x16x1xf32>
    %509 = vector.broadcast %508 : vector<2x16x1xf32> to vector<2x16x32xf32>
    %510 = arith.mulf %0, %509 : vector<2x16x32xf32>
    %cst_155 = arith.constant dense<0.000000e+00> : vector<2x32xf32>
    %511 = vector.multi_reduction <add>, %510, %cst_155 [1] : vector<2x16x32xf32> to vector<2x32xf32>
    %512 = arith.mulf %491, %511 : vector<2x32xf32>
    %c32_156 = arith.constant 32 : index
    %c0_157 = arith.constant 0 : index
    %513 = vector.load %arg3[%c32_156, %c0_157] : memref<88x384xf32, #tpu.memory_space<vmem>>, vector<32x128xf32>
    %c7 = arith.constant 7 : index
    %c0_158 = arith.constant 0 : index
    %c0_159 = arith.constant 0 : index
    %514 = vector.load %arg2[%c7, %c0_158, %c0_159] : memref<9x2x128xf32, #tpu.memory_space<vmem>>, vector<1x2x128xf32>
    %515 = vector.shape_cast %514 : vector<1x2x128xf32> to vector<2x128xf32>
    %516 = arith.addf %515, %484 : vector<2x128xf32>
    %cst_160 = arith.constant dense<0.000000e+00> : vector<2x128xf32>
    %517 = tpu.matmul %512, %513, %cst_160 {dimension_numbers = #tpu.dot_dimension_numbers<[1], [0], [0], [1], [0, 0, 1, 1], [], []>} : vector<2x32xf32>, vector<32x128xf32>, vector<2x128xf32> -> vector<2x128xf32>
    %518 = arith.addf %516, %517 : vector<2x128xf32>
    %519 = vector.extract_strided_slice %518 {offsets = [0, 0], sizes = [2, 32], strides = [1, 1]} : vector<2x128xf32> to vector<2x32xf32>
    %520 = arith.negf %519 : vector<2x32xf32>
    %521 = math.exp %520 : vector<2x32xf32>
    %cst_161 = arith.constant 1.000000e+00 : f32
    %522 = vector.broadcast %cst_161 : f32 to vector<2x32xf32>
    %523 = arith.addf %522, %521 : vector<2x32xf32>
    %524 = arith.divf %522, %523 : vector<2x32xf32>
    %525 = vector.extract_strided_slice %518 {offsets = [0, 32], sizes = [2, 32], strides = [1, 1]} : vector<2x128xf32> to vector<2x32xf32>
    %526 = arith.negf %525 : vector<2x32xf32>
    %527 = math.exp %526 : vector<2x32xf32>
    %cst_162 = arith.constant 1.000000e+00 : f32
    %528 = vector.broadcast %cst_162 : f32 to vector<2x32xf32>
    %529 = arith.addf %528, %527 : vector<2x32xf32>
    %530 = arith.divf %528, %529 : vector<2x32xf32>
    %531 = vector.extract_strided_slice %518 {offsets = [0, 64], sizes = [2, 32], strides = [1, 1]} : vector<2x128xf32> to vector<2x32xf32>
    %532 = math.tanh %531 : vector<2x32xf32>
    %533 = vector.extract_strided_slice %518 {offsets = [0, 96], sizes = [2, 32], strides = [1, 1]} : vector<2x128xf32> to vector<2x32xf32>
    %534 = arith.negf %533 : vector<2x32xf32>
    %535 = math.exp %534 : vector<2x32xf32>
    %cst_163 = arith.constant 1.000000e+00 : f32
    %536 = vector.broadcast %cst_163 : f32 to vector<2x32xf32>
    %537 = arith.addf %536, %535 : vector<2x32xf32>
    %538 = arith.divf %536, %537 : vector<2x32xf32>
    %539 = arith.mulf %530, %476 : vector<2x32xf32>
    %540 = arith.mulf %524, %532 : vector<2x32xf32>
    %541 = arith.addf %539, %540 : vector<2x32xf32>
    %542 = math.tanh %541 : vector<2x32xf32>
    %543 = arith.mulf %538, %542 : vector<2x32xf32>
    %c14 = arith.constant 14 : index
    %c0_164 = arith.constant 0 : index
    %544 = vector.load %arg5[%c14, %c0_164] : memref<18x32xf32, #tpu.memory_space<vmem>>, vector<2x32xf32>
    tpu.vector_store %arg5[%c14, %c0_164], %543 {strides = array<i32>} : memref<18x32xf32, #tpu.memory_space<vmem>>, vector<2x32xf32>,
    %c14_165 = arith.constant 14 : index
    %c0_166 = arith.constant 0 : index
    %545 = vector.load %arg6[%c14_165, %c0_166] : memref<18x16xf32, #tpu.memory_space<vmem>>, vector<2x16xf32>
    tpu.vector_store %arg6[%c14_165, %c0_166], %507 {strides = array<i32>} : memref<18x16xf32, #tpu.memory_space<vmem>>, vector<2x16xf32>,
    %c0_167 = arith.constant 0 : index
    %c0_168 = arith.constant 0 : index
    %546 = vector.load %arg3[%c0_167, %c0_168] : memref<88x384xf32, #tpu.memory_space<vmem>>, vector<32x384xf32>
    %cst_169 = arith.constant dense<0.000000e+00> : vector<2x384xf32>
    %547 = tpu.matmul %543, %546, %cst_169 {dimension_numbers = #tpu.dot_dimension_numbers<[1], [0], [0], [1], [0, 0, 1, 1], [], []>} : vector<2x32xf32>, vector<32x384xf32>, vector<2x384xf32> -> vector<2x384xf32>
    %548 = arith.addf %547, %25 : vector<2x384xf32>
    %549 = vector.extract_strided_slice %548 {offsets = [0, 0], sizes = [2, 128], strides = [1, 1]} : vector<2x384xf32> to vector<2x128xf32>
    %550 = vector.extract_strided_slice %548 {offsets = [0, 128], sizes = [2, 32], strides = [1, 1]} : vector<2x384xf32> to vector<2x32xf32>
    %551 = vector.extract_strided_slice %548 {offsets = [0, 256], sizes = [2, 32], strides = [1, 1]} : vector<2x384xf32> to vector<2x32xf32>
    %552 = arith.negf %551 : vector<2x32xf32>
    %553 = math.exp %552 : vector<2x32xf32>
    %cst_170 = arith.constant 1.000000e+00 : f32
    %554 = vector.broadcast %cst_170 : f32 to vector<2x32xf32>
    %555 = arith.addf %554, %553 : vector<2x32xf32>
    %556 = arith.divf %554, %555 : vector<2x32xf32>
    %557 = vector.shape_cast %550 : vector<2x32xf32> to vector<2x1x32xf32>
    %558 = vector.broadcast %557 : vector<2x1x32xf32> to vector<2x16x32xf32>
    %559 = arith.addf %20, %558 : vector<2x16x32xf32>
    %560 = math.tanh %559 : vector<2x16x32xf32>
    %561 = arith.mulf %560, %23 : vector<2x16x32xf32>
    %cst_171 = arith.constant dense<0.000000e+00> : vector<2x16xf32>
    %562 = vector.multi_reduction <add>, %561, %cst_171 [2] : vector<2x16x32xf32> to vector<2x16xf32>
    %cst_172 = arith.constant dense<0xFF800000> : vector<2xf32>
    %563 = vector.multi_reduction <maximumf>, %562, %cst_172 [1] : vector<2x16xf32> to vector<2xf32>
    %564 = vector.shape_cast %563 : vector<2xf32> to vector<2x1xf32>
    %565 = vector.broadcast %564 : vector<2x1xf32> to vector<2x16xf32>
    %566 = arith.subf %562, %565 : vector<2x16xf32>
    %567 = math.exp %566 : vector<2x16xf32>
    %cst_173 = arith.constant dense<0.000000e+00> : vector<2xf32>
    %568 = vector.multi_reduction <add>, %567, %cst_173 [1] : vector<2x16xf32> to vector<2xf32>
    %569 = vector.shape_cast %568 : vector<2xf32> to vector<2x1xf32>
    %570 = tpu.reciprocal %569 {approx = true} : vector<2x1xf32> -> vector<2x1xf32>
    %571 = vector.broadcast %570 : vector<2x1xf32> to vector<2x16xf32>
    %572 = arith.mulf %567, %571 : vector<2x16xf32>
    %573 = vector.shape_cast %572 : vector<2x16xf32> to vector<2x16x1xf32>
    %574 = vector.broadcast %573 : vector<2x16x1xf32> to vector<2x16x32xf32>
    %575 = arith.mulf %0, %574 : vector<2x16x32xf32>
    %cst_174 = arith.constant dense<0.000000e+00> : vector<2x32xf32>
    %576 = vector.multi_reduction <add>, %575, %cst_174 [1] : vector<2x16x32xf32> to vector<2x32xf32>
    %577 = arith.mulf %556, %576 : vector<2x32xf32>
    %c32_175 = arith.constant 32 : index
    %c0_176 = arith.constant 0 : index
    %578 = vector.load %arg3[%c32_175, %c0_176] : memref<88x384xf32, #tpu.memory_space<vmem>>, vector<32x128xf32>
    %c8_177 = arith.constant 8 : index
    %c0_178 = arith.constant 0 : index
    %c0_179 = arith.constant 0 : index
    %579 = vector.load %arg2[%c8_177, %c0_178, %c0_179] : memref<9x2x128xf32, #tpu.memory_space<vmem>>, vector<1x2x128xf32>
    %580 = vector.shape_cast %579 : vector<1x2x128xf32> to vector<2x128xf32>
    %581 = arith.addf %580, %549 : vector<2x128xf32>
    %cst_180 = arith.constant dense<0.000000e+00> : vector<2x128xf32>
    %582 = tpu.matmul %577, %578, %cst_180 {dimension_numbers = #tpu.dot_dimension_numbers<[1], [0], [0], [1], [0, 0, 1, 1], [], []>} : vector<2x32xf32>, vector<32x128xf32>, vector<2x128xf32> -> vector<2x128xf32>
    %583 = arith.addf %581, %582 : vector<2x128xf32>
    %584 = vector.extract_strided_slice %583 {offsets = [0, 0], sizes = [2, 32], strides = [1, 1]} : vector<2x128xf32> to vector<2x32xf32>
    %585 = arith.negf %584 : vector<2x32xf32>
    %586 = math.exp %585 : vector<2x32xf32>
    %cst_181 = arith.constant 1.000000e+00 : f32
    %587 = vector.broadcast %cst_181 : f32 to vector<2x32xf32>
    %588 = arith.addf %587, %586 : vector<2x32xf32>
    %589 = arith.divf %587, %588 : vector<2x32xf32>
    %590 = vector.extract_strided_slice %583 {offsets = [0, 32], sizes = [2, 32], strides = [1, 1]} : vector<2x128xf32> to vector<2x32xf32>
    %591 = arith.negf %590 : vector<2x32xf32>
    %592 = math.exp %591 : vector<2x32xf32>
    %cst_182 = arith.constant 1.000000e+00 : f32
    %593 = vector.broadcast %cst_182 : f32 to vector<2x32xf32>
    %594 = arith.addf %593, %592 : vector<2x32xf32>
    %595 = arith.divf %593, %594 : vector<2x32xf32>
    %596 = vector.extract_strided_slice %583 {offsets = [0, 64], sizes = [2, 32], strides = [1, 1]} : vector<2x128xf32> to vector<2x32xf32>
    %597 = math.tanh %596 : vector<2x32xf32>
    %598 = vector.extract_strided_slice %583 {offsets = [0, 96], sizes = [2, 32], strides = [1, 1]} : vector<2x128xf32> to vector<2x32xf32>
    %599 = arith.negf %598 : vector<2x32xf32>
    %600 = math.exp %599 : vector<2x32xf32>
    %cst_183 = arith.constant 1.000000e+00 : f32
    %601 = vector.broadcast %cst_183 : f32 to vector<2x32xf32>
    %602 = arith.addf %601, %600 : vector<2x32xf32>
    %603 = arith.divf %601, %602 : vector<2x32xf32>
    %604 = arith.mulf %595, %541 : vector<2x32xf32>
    %605 = arith.mulf %589, %597 : vector<2x32xf32>
    %606 = arith.addf %604, %605 : vector<2x32xf32>
    %607 = math.tanh %606 : vector<2x32xf32>
    %608 = arith.mulf %603, %607 : vector<2x32xf32>
    %c16 = arith.constant 16 : index
    %c0_184 = arith.constant 0 : index
    %609 = vector.load %arg5[%c16, %c0_184] : memref<18x32xf32, #tpu.memory_space<vmem>>, vector<2x32xf32>
    tpu.vector_store %arg5[%c16, %c0_184], %608 {strides = array<i32>} : memref<18x32xf32, #tpu.memory_space<vmem>>, vector<2x32xf32>,
    %c16_185 = arith.constant 16 : index
    %c0_186 = arith.constant 0 : index
    %610 = vector.load %arg6[%c16_185, %c0_186] : memref<18x16xf32, #tpu.memory_space<vmem>>, vector<2x16xf32>
    tpu.vector_store %arg6[%c16_185, %c0_186], %572 {strides = array<i32>} : memref<18x16xf32, #tpu.memory_space<vmem>>, vector<2x16xf32>,
    %c0_187 = arith.constant 0 : index
    %c0_188 = arith.constant 0 : index
    %611 = vector.load %arg5[%c0_187, %c0_188] : memref<18x32xf32, #tpu.memory_space<vmem>>, vector<18x32xf32>
    %c0_189 = arith.constant 0 : index
    %c0_190 = arith.constant 0 : index
    %612 = vector.load %arg6[%c0_189, %c0_190] : memref<18x16xf32, #tpu.memory_space<vmem>>, vector<18x16xf32>
    %c32_191 = arith.constant 32 : index
    %c128 = arith.constant 128 : index
    %613 = vector.load %arg3[%c32_191, %c128] : memref<88x384xf32, #tpu.memory_space<vmem>>, vector<32x128xf32>
    %c81 = arith.constant 81 : index
    %c0_192 = arith.constant 0 : index
    %614 = vector.load %arg3[%c81, %c0_192] : memref<88x384xf32, #tpu.memory_space<vmem>>, vector<1x128xf32>
    %c64 = arith.constant 64 : index
    %c0_193 = arith.constant 0 : index
    %615 = vector.load %arg3[%c64, %c0_193] : memref<88x384xf32, #tpu.memory_space<vmem>>, vector<16x128xf32>
    %cst_194 = arith.constant dense<0.000000e+00> : vector<18x128xf32>
    %616 = tpu.matmul %611, %613, %cst_194 {dimension_numbers = #tpu.dot_dimension_numbers<[1], [0], [0], [1], [0, 0, 1, 1], [], []>} : vector<18x32xf32>, vector<32x128xf32>, vector<18x128xf32> -> vector<18x128xf32>
    %617 = vector.broadcast %614 : vector<1x128xf32> to vector<18x128xf32>
    %618 = arith.addf %616, %617 : vector<18x128xf32>
    %cst_195 = arith.constant dense<0.000000e+00> : vector<18x128xf32>
    %619 = tpu.matmul %612, %615, %cst_195 {dimension_numbers = #tpu.dot_dimension_numbers<[1], [0], [0], [1], [0, 0, 1, 1], [], []>} : vector<18x16xf32>, vector<16x128xf32>, vector<18x128xf32> -> vector<18x128xf32>
    %620 = arith.addf %618, %619 : vector<18x128xf32>
    %c0_196 = arith.constant 0 : index
    %c0_197 = arith.constant 0 : index
    %621 = vector.load %arg4[%c0_196, %c0_197] : memref<18x128xf32, #tpu.memory_space<vmem>>, vector<18x128xf32>
    tpu.vector_store %arg4[%c0_196, %c0_197], %620 {strides = array<i32>} : memref<18x128xf32, #tpu.memory_space<vmem>>, vector<18x128xf32>,
    return
  }
  func.func @transform_0(%arg0: i32) -> (i32, i32, i32) {
    %c0_i32 = arith.constant 0 : i32
    %c0_i32_0 = arith.constant 0 : i32
    %c0_i32_1 = arith.constant 0 : i32
    %c0_i32_2 = arith.constant 0 : i32
    return %c0_i32, %c0_i32_0, %c0_i32_1 : i32, i32, i32
  }
  func.func @transform_1(%arg0: i32) -> (i32, i32, i32) {
    %c0_i32 = arith.constant 0 : i32
    %c0_i32_0 = arith.constant 0 : i32
    %c0_i32_1 = arith.constant 0 : i32
    %c0_i32_2 = arith.constant 0 : i32
    return %c0_i32, %c0_i32_0, %c0_i32_1 : i32, i32, i32
  }
  func.func @transform_2(%arg0: i32) -> (i32, i32) {
    %c0_i32 = arith.constant 0 : i32
    %c0_i32_0 = arith.constant 0 : i32
    %c0_i32_1 = arith.constant 0 : i32
    return %c0_i32, %c0_i32_0 : i32, i32
  }
  func.func @transform_3(%arg0: i32) -> (i32, i32) {
    %c0_i32 = arith.constant 0 : i32
    %c0_i32_0 = arith.constant 0 : i32
    %c0_i32_1 = arith.constant 0 : i32
    return %c0_i32, %c0_i32_0 : i32, i32
  }
}

</mosaic_0001>

<llo_original>
// kernel: tpu_custom_call.1
$region0: #{tpu_custom_call.1}
  #allocation0 [shape = 'u32[]', space=smem, size = 0x4, offset = 0x4, fixed_abs, tag = 'smem constant byte address 0x4 - core index']
  #allocation1 [shape = 'u32[144,128]{1,0:T(1,128)}', space=vmem, size = 0x12000, scoped, tag = 'internal scratch']
  #allocation2 [shape = 'f32[18,32]{1,0:T(8,128)}', space=vmem, size = 0x3000, scoped, tag = 'scratch operand']
  #allocation3 [shape = 'f32[18,16]{1,0:T(8,128)}', space=vmem, size = 0x3000, scoped, tag = 'scratch operand']
  %s0 = inlined_call_operand.hbm [shape: f32[2,16,32], index: 0, kind: input, shape index: {}]
  %s1 = inlined_call_operand.hbm [shape: f32[9,2,128], index: 1, kind: input, shape index: {}]
  %s2 = inlined_call_operand.hbm [shape: f32[88,384], index: 2, kind: input, shape index: {}]
  %s3 = inlined_call_operand.hbm [shape: f32[18,128], index: 3, kind: output, shape index: {}]
  %s4 = sld [smem:[#allocation0]]
  $region34: #{tpu_custom_call.1} parent=0
    _
  %s6 = ssub.s32 1, %s4
  %s7 = scalar_select 0, %s6, %s4
  $region1: #{tpu_custom_call.1} parent=0
    #allocation4 [shape = 'u8[16384]{0}', space=vmem, size = 0x4000, scoped, tag = 'input window, operand 0, single buffered']
    #allocation5 [shape = 's32[1]{0}', space=sflag, size = 0x4, scoped, tag = 'scoped memory for tpu_custom_call.1']
    #allocation6 [shape = 's32[1]{0}', space=sflag, size = 0x4, scoped, tag = 'scoped memory for tpu_custom_call.1']
    #allocation7 [shape = 'u8[9216]{0}', space=vmem, size = 0x2400, scoped, tag = 'input window, operand 1, single buffered']
    #allocation8 [shape = 's32[1]{0}', space=sflag, size = 0x4, scoped, tag = 'scoped memory for tpu_custom_call.1']
    #allocation9 [shape = 'u8[135168]{0}', space=vmem, size = 0x21000, scoped, tag = 'input window, operand 2, single buffered']
    #allocation10 [shape = 'u8[12288]{0}', space=vmem, size = 0x3000, scoped, tag = 'output window, operand 0, single buffered']
    %8 = vsyncpa [#allocation5], 0
    %9 = vsyncpa [#allocation8], 0
    %10 = vsyncpa [#allocation6], 0
    // Predicated region
    $region2: #{tpu_custom_call.1} parent=1 // pred_check
      _
    $region3: #{tpu_custom_call.1} parent=1 // pred_check_branch
      %12 = sbr.rel (0) target = $region5
    $region4: #{tpu_custom_call.1} parent=1 // pred_region
      %s14 = ssub.s32 512, 512
      %15 = vsyncadd [#allocation5], %s14
      %s16 = sshll.u32 [#allocation4], 4
      %s17 = int_to_ptr.vmem [resolvable:$true] %s16
      %22 = dma.hbm_to_vmem [thread:$0]  %s0, 512, %s17, [#allocation5], 128, 128, 8
    $region5: #{tpu_custom_call.1} parent=1 // pred_fallthru
      _
    // Predicated region
    $region6: #{tpu_custom_call.1} parent=1 // pred_check
      _
    $region7: #{tpu_custom_call.1} parent=1 // pred_check_branch
      %24 = sbr.rel (0) target = $region9
    $region8: #{tpu_custom_call.1} parent=1 // pred_region
      %s26 = ssub.s32 288, 288
      %27 = vsyncadd [#allocation8], %s26
      %s28 = sshll.u32 [#allocation7], 4
      %s29 = int_to_ptr.vmem [resolvable:$true] %s28
      %34 = dma.hbm_to_vmem [thread:$0]  %s1, 288, %s29, [#allocation8], 32, 32, 2
    $region9: #{tpu_custom_call.1} parent=1 // pred_fallthru
      _
    // Predicated region
    $region10: #{tpu_custom_call.1} parent=1 // pred_check
      _
    $region11: #{tpu_custom_call.1} parent=1 // pred_check_branch
      %36 = sbr.rel (0) target = $region13
    $region12: #{tpu_custom_call.1} parent=1 // pred_region
      %s38 = ssub.s32 4224, 4224
      %39 = vsyncadd [#allocation8], %s38
      %s40 = sshll.u32 [#allocation9], 4
      %s41 = int_to_ptr.vmem [resolvable:$true] %s40
      %46 = dma.hbm_to_vmem [thread:$0]  %s2, 4224, %s41, [#allocation8], 384, 384, 24
    $region13: #{tpu_custom_call.1} parent=1 // pred_fallthru
      _
    // Predicated region
    $region14: #{tpu_custom_call.1} parent=1 // pred_check
      _
    $region15: #{tpu_custom_call.1} parent=1 // pred_check_branch
      %48 = sbr.rel (0) target = $region17
    $region16: #{tpu_custom_call.1} parent=1 // pred_region
      %49 = dma.done [#allocation5], 512
    $region17: #{tpu_custom_call.1} parent=1 // pred_fallthru
      _
    // Predicated region
    $region18: #{tpu_custom_call.1} parent=1 // pred_check
      _
    $region19: #{tpu_custom_call.1} parent=1 // pred_check_branch
      %51 = sbr.rel (0) target = $region21
    $region20: #{tpu_custom_call.1} parent=1 // pred_region
      %52 = dma.done [#allocation8], 288
    $region21: #{tpu_custom_call.1} parent=1 // pred_fallthru
      _
    // Predicated region
    $region22: #{tpu_custom_call.1} parent=1 // pred_check
      _
    $region23: #{tpu_custom_call.1} parent=1 // pred_check_branch
      %54 = sbr.rel (0) target = $region25
    $region24: #{tpu_custom_call.1} parent=1 // pred_region
      %55 = dma.done [#allocation8], 4224
    $region25: #{tpu_custom_call.1} parent=1 // pred_fallthru
      _
    %v56 = vld [vmem:[#allocation4] sm:$0xff]
    %v57 = vld [vmem:[#allocation4 + $0x8] sm:$0xff]
    %v58 = vld [vmem:[#allocation4 + $0x10] sm:$0xff]
    %v59 = vld [vmem:[#allocation4 + $0x18] sm:$0xff]
    %v60 = vld [vmem:[#allocation9 + $0xf2] ss:$0 sm:$0xff]
    %v61 = vld [vmem:[#allocation9 + $0xf3] ss:$0 sm:$0xff]
    %v62 = vld [vmem:[#allocation9 + $0xf4] ss:$0 sm:$0xff]
    %s63 = scalar_lea.vmem [#allocation9], 240
    %v64 = vld [vmem:[%s63] ss:$8 sm:$0x7]
    %vm65 = vcmask 261120
    %v66 = vsel %vm65, %v56, 0.0
    %v67 = vsel %vm65, %v57, 0.0
    %v68 = vadd.f32 %v66, %v67
    %v69 = vrot.slane %v68, 4
    %v70 = vadd.f32 %v68, %v69
    %v71 = vrot.slane %v70, 2
    %v72 = vadd.f32 %v70, %v71
    %v73 = vrot.slane %v72, 1
    %v74 = vadd.f32 %v72, %v73
    %v75 = vsel %vm65, %v58, 0.0
    %v76 = vsel %vm65, %v59, 0.0
    %v77 = vadd.f32 %v75, %v76
    %v78 = vrot.slane %v77, 4
    %v79 = vadd.f32 %v77, %v78
    %v80 = vrot.slane %v79, 2
    %v81 = vadd.f32 %v79, %v80
    %v82 = vrot.slane %v81, 1
    %v83 = vadd.f32 %v81, %v82
    %v84 = vrcp.pop 16.0
    %v85 = vmul.f32 %v74, %v84
    %v86 = vmul.f32 %v83, %v84
    %v87 = vld [vmem:[#allocation9 + $0x70] sm:$0xff]
    %v88 = vld [vmem:[#allocation9 + $0x88] sm:$0xff]
    %v89 = vld [vmem:[#allocation9 + $0xa0] sm:$0xff]
    %v90 = vld [vmem:[#allocation9 + $0xb8] sm:$0xff]
    %vm93 = vcmask 1041409
    %v94 = vsel %vm93, %v86, %v85
    %99 = vrot.lane.b32.xlu0 %v87, 96
    %v100 = vpop.permute.xlu0 %99
    %101 = vrot.lane.b32.xlu0 %v88, 96
    %v102 = vpop.permute.xlu0 %101
    %103 = vrot.lane.b32.xlu0 %v89, 96
    %v104 = vpop.permute.xlu0 %103
    %105 = vrot.lane.b32.xlu0 %v90, 96
    %v106 = vpop.permute.xlu0 %105
    %v111 = vsel %vm65, %v94, 0
    %113 = vmatprep.subr.mxu0 0.0
    %114 = vmatpush1.msra.mxu0 0.0
    %115 = vmatprep.subr.mxu0 0.0
    %116 = vmatpush1.msra.mxu0 0.0
    %117 = vmatprep.subr.mxu0 0.0
    %118 = vmatpush1.msra.mxu0 0.0
    %119 = vmatprep.subr.mxu0 0.0
    %120 = vmatpush1.msra.mxu0 0.0
    %121 = vmatprep.subr.mxu0 0.0
    %122 = vmatpush1.msra.mxu0 0.0
    %123 = vmatprep.subr.mxu0 0.0
    %124 = vmatpush1.msra.mxu0 0.0
    %125 = vmatprep.subr.mxu0 0.0
    %126 = vmatpush1.msra.mxu0 0.0
    %127 = vmatprep.subr.mxu0 0.0
    %128 = vmatpush1.msra.mxu0 0.0
    %129 = vmatprep.subr.mxu0 0.0
    %130 = vmatpush1.msra.mxu0 0.0
    %131 = vmatprep.subr.mxu0 0.0
    %132 = vmatpush1.msra.mxu0 0.0
    %133 = vmatprep.subr.mxu0 0.0
    %134 = vmatpush1.msra.mxu0 0.0
    %135 = vmatprep.subr.mxu0 0.0
    %136 = vmatpush1.msra.mxu0 0.0
    %137 = vmatprep.subr.mxu0 0.0
    %138 = vmatpush1.msra.mxu0 %v106
    %139 = vmatprep.subr.mxu0 0.0
    %140 = vmatpush1.msra.mxu0 %v104
    %141 = vmatprep.subr.mxu0 0.0
    %142 = vmatpush1.msra.mxu0 %v102
    %143 = vmatprep.subr.mxu0 0.0
    %144 = vmatpush1.msra.mxu0 %v100
    %145 = vmatprep.subr.mxu0 0.0
    %146 = vmatpush2.msra.mxu0 0.0
    %147 = vmatprep.subr.mxu0 0.0
    %148 = vmatpush2.msra.mxu0 0.0
    %149 = vmatprep.subr.mxu0 0.0
    %150 = vmatpush2.msra.mxu0 0.0
    %151 = vmatprep.subr.mxu0 0.0
    %152 = vmatpush2.msra.mxu0 0.0
    %153 = vmatprep.subr.mxu0 0.0
    %154 = vmatpush2.msra.mxu0 0.0
    %155 = vmatprep.subr.mxu0 0.0
    %156 = vmatpush2.msra.mxu0 0.0
    %157 = vmatprep.subr.mxu0 0.0
    %158 = vmatpush2.msra.mxu0 0.0
    %159 = vmatprep.subr.mxu0 0.0
    %160 = vmatpush2.msra.mxu0 0.0
    %161 = vmatprep.subr.mxu0 0.0
    %162 = vmatpush2.msra.mxu0 0.0
    %163 = vmatprep.subr.mxu0 0.0
    %164 = vmatpush2.msra.mxu0 0.0
    %165 = vmatprep.subr.mxu0 0.0
    %166 = vmatpush2.msra.mxu0 0.0
    %167 = vmatprep.subr.mxu0 0.0
    %168 = vmatpush2.msra.mxu0 0.0
    %169 = vmatprep.subr.mxu0 0.0
    %170 = vmatpush2.msra.mxu0 0.0
    %171 = vmatprep.subr.mxu0 0.0
    %172 = vmatpush2.msra.mxu0 0.0
    %173 = vmatprep.subr.mxu0 0.0
    %174 = vmatpush2.msra.mxu0 0.0
    %175 = vmatprep.subr.mxu0 0.0
    %176 = vmatpush2.msra.mxu0 0.0
    %177 = vmatprep.mubr.f32.mxu0 0.0
    %178 = vmatmul.mubr.f32.gmra.mxu0 %v111
    %v179 = vpop.f32.mrf.mxu0
    %v180 = vadd.f32 %v62, %v179
    %v181 = vpop.f32.mrf.mxu0
    %182 = vdwg.mxu0
    %v183 = vtanh.pop %v180
    %v185 = vsel %vm65, %v56, 0
    %v188 = vsel %vm65, %v57, 0
    %v191 = vsel %vm65, %v58, 0
    %v194 = vsel %vm65, %v59, 0
    %196 = vmatprep.subr.mxu0 0.0
    %197 = vmatpush1.msra.mxu0 0.0
    %198 = vmatprep.subr.mxu0 0.0
    %199 = vmatpush1.msra.mxu0 0.0
    %200 = vmatprep.subr.mxu0 0.0
    %201 = vmatpush1.msra.mxu0 0.0
    %202 = vmatprep.subr.mxu0 0.0
    %203 = vmatpush1.msra.mxu0 0.0
    %204 = vmatprep.subr.mxu0 0.0
    %205 = vmatpush1.msra.mxu0 0.0
    %206 = vmatprep.subr.mxu0 0.0
    %207 = vmatpush1.msra.mxu0 0.0
    %208 = vmatprep.subr.mxu0 0.0
    %209 = vmatpush1.msra.mxu0 0.0
    %210 = vmatprep.subr.mxu0 0.0
    %211 = vmatpush1.msra.mxu0 0.0
    %212 = vmatprep.subr.mxu0 0.0
    %213 = vmatpush1.msra.mxu0 0.0
    %214 = vmatprep.subr.mxu0 0.0
    %215 = vmatpush1.msra.mxu0 0.0
    %216 = vmatprep.subr.mxu0 0.0
    %217 = vmatpush1.msra.mxu0 0.0
    %218 = vmatprep.subr.mxu0 0.0
    %219 = vmatpush1.msra.mxu0 0.0
    %220 = vmatprep.subr.mxu0 0.0
    %221 = vmatpush1.msra.mxu0 %v90
    %222 = vmatprep.subr.mxu0 0.0
    %223 = vmatpush1.msra.mxu0 %v89
    %224 = vmatprep.subr.mxu0 0.0
    %225 = vmatpush1.msra.mxu0 %v88
    %226 = vmatprep.subr.mxu0 0.0
    %227 = vmatpush1.msra.mxu0 %v87
    %228 = vmatprep.subr.mxu0 0.0
    %229 = vmatpush2.msra.mxu0 0.0
    %230 = vmatprep.subr.mxu0 0.0
    %231 = vmatpush2.msra.mxu0 0.0
    %232 = vmatprep.subr.mxu0 0.0
    %233 = vmatpush2.msra.mxu0 0.0
    %234 = vmatprep.subr.mxu0 0.0
    %235 = vmatpush2.msra.mxu0 0.0
    %236 = vmatprep.subr.mxu0 0.0
    %237 = vmatpush2.msra.mxu0 0.0
    %238 = vmatprep.subr.mxu0 0.0
    %239 = vmatpush2.msra.mxu0 0.0
    %240 = vmatprep.subr.mxu0 0.0
    %241 = vmatpush2.msra.mxu0 0.0
    %242 = vmatprep.subr.mxu0 0.0
    %243 = vmatpush2.msra.mxu0 0.0
    %244 = vmatprep.subr.mxu0 0.0
    %245 = vmatpush2.msra.mxu0 0.0
    %246 = vmatprep.subr.mxu0 0.0
    %247 = vmatpush2.msra.mxu0 0.0
    %248 = vmatprep.subr.mxu0 0.0
    %249 = vmatpush2.msra.mxu0 0.0
    %250 = vmatprep.subr.mxu0 0.0
    %251 = vmatpush2.msra.mxu0 0.0
    %252 = vmatprep.subr.mxu0 0.0
    %253 = vmatpush2.msra.mxu0 0.0
    %254 = vmatprep.subr.mxu0 0.0
    %255 = vmatpush2.msra.mxu0 0.0
    %256 = vmatprep.subr.mxu0 0.0
    %257 = vmatpush2.msra.mxu0 0.0
    %258 = vmatprep.subr.mxu0 0.0
    %259 = vmatpush2.msra.mxu0 0.0
    %260 = vmatprep.mubr.f32.mxu0 0.0
    %261 = vmatmul.mubr.f32.gmra.mxu0 %v185
    %v262 = vpop.f32.mrf.mxu0
    %v263 = vadd.f32 %v60, %v262
    %v264 = vpop.f32.mrf.mxu0
    %265 = vmatprep.mubr.f32.mxu0 0.0
    %266 = vmatmul.mubr.f32.gmra.mxu0 %v188
    %v267 = vpop.f32.mrf.mxu0
    %v268 = vadd.f32 %v60, %v267
    %v269 = vpop.f32.mrf.mxu0
    %270 = vmatprep.mubr.f32.mxu0 0.0
    %271 = vmatmul.mubr.f32.gmra.mxu0 %v191
    %v272 = vpop.f32.mrf.mxu0
    %v273 = vadd.f32 %v60, %v272
    %v274 = vpop.f32.mrf.mxu0
    %275 = vmatprep.mubr.f32.mxu0 0.0
    %276 = vmatmul.mubr.f32.gmra.mxu0 %v194
    %v277 = vpop.f32.mrf.mxu0
    %v278 = vadd.f32 %v60, %v277
    %v279 = vpop.f32.mrf.mxu0
    %280 = vdwg.mxu0
    %v282 = vlaneseq
    %v283 = vshrl.u32 %v282, 7
    %v284 = vsub.s32 0, %v283
    %v285 = vrot.slane %v64, %v284
    %v286 = vlaneseq
    %v287 = vshrl.u32 %v286, 7
    %v288 = vsub.s32 1, %v287
    %v289 = vrot.slane %v64, %v288
    %v290 = vlaneseq
    %v291 = vshrl.u32 %v290, 7
    %v292 = vsub.s32 2, %v291
    %v293 = vrot.slane %v64, %v292
    %v297 = vld [vmem:[#allocation9] sm:$0xff]
    %v298 = vld [vmem:[#allocation9 + $0x8] sm:$0xff]
    %v299 = vld [vmem:[#allocation9 + $0x10] sm:$0xff]
    %v300 = vld [vmem:[#allocation9 + $0x18] sm:$0xff]
    %v301 = vld [vmem:[#allocation9 + $0x20] sm:$0xff]
    %v302 = vld [vmem:[#allocation9 + $0x28] sm:$0xff]
    %v303 = vld [vmem:[#allocation9 + $0x30] sm:$0xff]
    %v304 = vld [vmem:[#allocation9 + $0x38] sm:$0xff]
    %v305 = vld [vmem:[#allocation9 + $0x40] sm:$0xff]
    %v306 = vld [vmem:[#allocation9 + $0x48] sm:$0xff]
    %v307 = vld [vmem:[#allocation9 + $0x50] sm:$0xff]
    %v308 = vld [vmem:[#allocation9 + $0x58] sm:$0xff]
    %v310 = vsel %vm65, %v183, 0
    %312 = vmatprep.subr.mxu0 0.0
    %313 = vmatpush1.msra.mxu0 0.0
    %314 = vmatprep.subr.mxu0 0.0
    %315 = vmatpush1.msra.mxu0 0.0
    %316 = vmatprep.subr.mxu0 0.0
    %317 = vmatpush1.msra.mxu0 0.0
    %318 = vmatprep.subr.mxu0 0.0
    %319 = vmatpush1.msra.mxu0 0.0
    %320 = vmatprep.subr.mxu0 0.0
    %321 = vmatpush1.msra.mxu0 0.0
    %322 = vmatprep.subr.mxu0 0.0
    %323 = vmatpush1.msra.mxu0 0.0
    %324 = vmatprep.subr.mxu0 0.0
    %325 = vmatpush1.msra.mxu0 0.0
    %326 = vmatprep.subr.mxu0 0.0
    %327 = vmatpush1.msra.mxu0 0.0
    %328 = vmatprep.subr.mxu0 0.0
    %329 = vmatpush1.msra.mxu0 0.0
    %330 = vmatprep.subr.mxu0 0.0
    %331 = vmatpush1.msra.mxu0 0.0
    %332 = vmatprep.subr.mxu0 0.0
    %333 = vmatpush1.msra.mxu0 0.0
    %334 = vmatprep.subr.mxu0 0.0
    %335 = vmatpush1.msra.mxu0 0.0
    %336 = vmatprep.subr.mxu0 %v307
    %337 = vmatpush1.msra.mxu0 %v306
    %338 = vmatprep.subr.mxu0 %v304
    %339 = vmatpush1.msra.mxu0 %v303
    %340 = vmatprep.subr.mxu0 %v301
    %341 = vmatpush1.msra.mxu0 %v300
    %342 = vmatprep.subr.mxu0 %v298
    %343 = vmatpush1.msra.mxu0 %v297
    %344 = vmatprep.subr.mxu0 0.0
    %345 = vmatpush2.msra.mxu0 0.0
    %346 = vmatprep.subr.mxu0 0.0
    %347 = vmatpush2.msra.mxu0 0.0
    %348 = vmatprep.subr.mxu0 0.0
    %349 = vmatpush2.msra.mxu0 0.0
    %350 = vmatprep.subr.mxu0 0.0
    %351 = vmatpush2.msra.mxu0 0.0
    %352 = vmatprep.subr.mxu0 0.0
    %353 = vmatpush2.msra.mxu0 0.0
    %354 = vmatprep.subr.mxu0 0.0
    %355 = vmatpush2.msra.mxu0 0.0
    %356 = vmatprep.subr.mxu0 0.0
    %357 = vmatpush2.msra.mxu0 0.0
    %358 = vmatprep.subr.mxu0 0.0
    %359 = vmatpush2.msra.mxu0 0.0
    %360 = vmatprep.subr.mxu0 0.0
    %361 = vmatpush2.msra.mxu0 0.0
    %362 = vmatprep.subr.mxu0 0.0
    %363 = vmatpush2.msra.mxu0 0.0
    %364 = vmatprep.subr.mxu0 0.0
    %365 = vmatpush2.msra.mxu0 0.0
    %366 = vmatprep.subr.mxu0 0.0
    %367 = vmatpush2.msra.mxu0 0.0
    %368 = vmatprep.subr.mxu0 0.0
    %369 = vmatpush2.msra.mxu0 0.0
    %370 = vmatprep.subr.mxu0 0.0
    %371 = vmatpush2.msra.mxu0 0.0
    %372 = vmatprep.subr.mxu0 0.0
    %373 = vmatpush2.msra.mxu0 0.0
    %374 = vmatprep.subr.mxu0 0.0
    %375 = vmatpush2.msra.mxu0 0.0
    %376 = vmatprep.mubr.f32.mxu0 0.0
    %377 = vmatmul.mubr.f32.gmra.mxu0 %v310
    %v378 = vpop.f32.mrf.mxu0
    %v379 = vadd.f32 %v285, %v378
    %v380 = vpop.f32.mrf.mxu0
    %v381 = vadd.f32 %v289, %v380
    %382 = vdwg.mxu0
    %383 = vmatprep.subr.mxu0 0.0
    %384 = vmatpush1.msra.mxu0 0.0
    %385 = vmatprep.subr.mxu0 0.0
    %386 = vmatpush1.msra.mxu0 0.0
    %387 = vmatprep.subr.mxu0 0.0
    %388 = vmatpush1.msra.mxu0 0.0
    %389 = vmatprep.subr.mxu0 0.0
    %390 = vmatpush1.msra.mxu0 0.0
    %391 = vmatprep.subr.mxu0 0.0
    %392 = vmatpush1.msra.mxu0 0.0
    %393 = vmatprep.subr.mxu0 0.0
    %394 = vmatpush1.msra.mxu0 0.0
    %395 = vmatprep.subr.mxu0 0.0
    %396 = vmatpush1.msra.mxu0 0.0
    %397 = vmatprep.subr.mxu0 0.0
    %398 = vmatpush1.msra.mxu0 0.0
    %399 = vmatprep.subr.mxu0 0.0
    %400 = vmatpush1.msra.mxu0 0.0
    %401 = vmatprep.subr.mxu0 0.0
    %402 = vmatpush1.msra.mxu0 0.0
    %403 = vmatprep.subr.mxu0 0.0
    %404 = vmatpush1.msra.mxu0 0.0
    %405 = vmatprep.subr.mxu0 0.0
    %406 = vmatpush1.msra.mxu0 0.0
    %407 = vmatprep.subr.mxu0 0.0
    %408 = vmatpush1.msra.mxu0 %v308
    %409 = vmatprep.subr.mxu0 0.0
    %410 = vmatpush1.msra.mxu0 %v305
    %411 = vmatprep.subr.mxu0 0.0
    %412 = vmatpush1.msra.mxu0 %v302
    %413 = vmatprep.subr.mxu0 0.0
    %414 = vmatpush1.msra.mxu0 %v299
    %415 = vmatprep.subr.mxu0 0.0
    %416 = vmatpush2.msra.mxu0 0.0
    %417 = vmatprep.subr.mxu0 0.0
    %418 = vmatpush2.msra.mxu0 0.0
    %419 = vmatprep.subr.mxu0 0.0
    %420 = vmatpush2.msra.mxu0 0.0
    %421 = vmatprep.subr.mxu0 0.0
    %422 = vmatpush2.msra.mxu0 0.0
    %423 = vmatprep.subr.mxu0 0.0
    %424 = vmatpush2.msra.mxu0 0.0
    %425 = vmatprep.subr.mxu0 0.0
    %426 = vmatpush2.msra.mxu0 0.0
    %427 = vmatprep.subr.mxu0 0.0
    %428 = vmatpush2.msra.mxu0 0.0
    %429 = vmatprep.subr.mxu0 0.0
    %430 = vmatpush2.msra.mxu0 0.0
    %431 = vmatprep.subr.mxu0 0.0
    %432 = vmatpush2.msra.mxu0 0.0
    %433 = vmatprep.subr.mxu0 0.0
    %434 = vmatpush2.msra.mxu0 0.0
    %435 = vmatprep.subr.mxu0 0.0
    %436 = vmatpush2.msra.mxu0 0.0
    %437 = vmatprep.subr.mxu0 0.0
    %438 = vmatpush2.msra.mxu0 0.0
    %439 = vmatprep.subr.mxu0 0.0
    %440 = vmatpush2.msra.mxu0 0.0
    %441 = vmatprep.subr.mxu0 0.0
    %442 = vmatpush2.msra.mxu0 0.0
    %443 = vmatprep.subr.mxu0 0.0
    %444 = vmatpush2.msra.mxu0 0.0
    %445 = vmatprep.subr.mxu0 0.0
    %446 = vmatpush2.msra.mxu0 0.0
    %447 = vmatprep.mubr.f32.mxu0 0.0
    %448 = vmatmul.mubr.f32.gmra.mxu0 %v310
    %v449 = vpop.f32.mrf.mxu0
    %v450 = vadd.f32 %v293, %v449
    %v451 = vpop.f32.mrf.mxu0
    %452 = vdwg.mxu0
    %v453 = vxor.u32 %v450, 2147483648
    %v454 = vmul.f32 %v453, 1.442695
    %v455 = vpow.pop %v454
    %v456 = vadd.f32 %v455, 1.0
    %v457 = vrcp.pop %v456
    %v458 = vmul.f32 1.0, %v457
    %v461 = vunpack.c.l.s4 1966171168
    %v462 = vunpack.c.0.s8 %v461
    %v463 = vlaneseq
    %v464 = vshrl.u32 %v463, 7
    %v465 = vsub.s32 %v462, %v464
    %v466 = vrot.slane %v381, %v465
    %v467 = vcombine.high %v466, %v466
    %v469 = vunpack.c.l.s4 1966171168
    %v470 = vunpack.c.0.s8 %v469
    %v471 = vlaneseq
    %v472 = vshrl.u32 %v471, 7
    %v473 = vsub.s32 %v470, %v472
    %v474 = vrot.slane %v466, %v473
    %v476 = vunpack.c.l.s4 1966171168
    %v477 = vunpack.c.0.s8 %v476
    %v478 = vlaneseq
    %v479 = vshrl.u32 %v478, 7
    %v480 = vsub.s32 %v477, %v479
    %v481 = vrot.slane %v467, %v480
    %v482 = vlaneseq
    %v483 = vshrl.u32 %v482, 7
    %v484 = vsub.s32 0, %v483
    %v485 = vrot.slane %v474, %v484
    %v486 = vlaneseq
    %v487 = vshrl.u32 %v486, 7
    %v488 = vsub.s32 0, %v487
    %v489 = vrot.slane %v481, %v488
    %v492 = vadd.f32 %v263, %v485
    %v493 = vadd.f32 %v268, %v485
    %v494 = vadd.f32 %v273, %v489
    %v495 = vadd.f32 %v278, %v489
    %v496 = vtanh.pop %v492
    %v497 = vtanh.pop %v493
    %v498 = vtanh.pop %v494
    %v499 = vtanh.pop %v495
    %v500 = vmul.f32 %v496, %v61
    %v501 = vmul.f32 %v497, %v61
    %v502 = vmul.f32 %v498, %v61
    %v503 = vmul.f32 %v499, %v61
    %v504 = vsel %vm65, %v500, 0.0
    %505 = vadd.xlane.f32.xlu0 %v504
    %v506 = vpop.xlane.xlu0 %505
    %v507 = vsel %vm65, %v501, 0.0
    %508 = vadd.xlane.f32.xlu0 %v507
    %v509 = vpop.xlane.xlu0 %508
    %v510 = vsel %vm65, %v502, 0.0
    %511 = vadd.xlane.f32.xlu0 %v510
    %v512 = vpop.xlane.xlu0 %511
    %v513 = vsel %vm65, %v503, 0.0
    %514 = vadd.xlane.f32.xlu0 %v513
    %v515 = vpop.xlane.xlu0 %514
    %v520 = vlaneseq
    %v521 = vand.u32 %v520, 127
    %v522 = vlaneseq
    %v523 = vshrl.u32 %v522, 7
    %v524 = vsub.s32 %v521, %v523
    %v525 = vrot.slane %v506, %v524
    %v526 = vadd.s32 %v521, 4294967288
    %v527 = vlaneseq
    %v528 = vshrl.u32 %v527, 7
    %v529 = vsub.s32 %v526, %v528
    %v530 = vrot.slane %v509, %v529
    %vm531 = vcmask 130112
    %v532 = vsel %vm531, %v530, %v525
    %v533 = vlaneseq
    %v534 = vshrl.u32 %v533, 7
    %v535 = vsub.s32 %v521, %v534
    %v536 = vrot.slane %v512, %v535
    %v537 = vlaneseq
    %v538 = vshrl.u32 %v537, 7
    %v539 = vsub.s32 %v526, %v538
    %v540 = vrot.slane %v515, %v539
    %v541 = vsel %vm531, %v540, %v536
    %v542 = vsel %vm93, %v541, %v532
    %vm544 = vcmask 123904
    %v545 = vsel %vm544, %v542, -inf
    %546 = vmax.xlane.f32.xlu0 %v545
    %v547 = vpop.xlane.xlu0 %546
    %v549 = vlaneseq
    %v550 = vshrl.u32 %v549, 7
    %v551 = vsub.s32 0, %v550
    %v552 = vrot.slane %v547, %v551
    %v553 = vlaneseq
    %v554 = vshrl.u32 %v553, 7
    %v555 = vsub.s32 1, %v554
    %v556 = vrot.slane %v547, %v555
    %v559 = vsub.f32 %v506, %v552
    %v560 = vsub.f32 %v509, %v552
    %v561 = vsub.f32 %v512, %v556
    %v562 = vsub.f32 %v515, %v556
    %v563 = vmul.f32 %v559, 1.442695
    %v564 = vpow.pop %v563
    %v565 = vmul.f32 %v560, 1.442695
    %v566 = vpow.pop %v565
    %v567 = vmul.f32 %v561, 1.442695
    %v568 = vpow.pop %v567
    %v569 = vmul.f32 %v562, 1.442695
    %v570 = vpow.pop %v569
    %575 = vset.pattern.permute.xlu0 0
    %576 = vperm.xlu0 %575, %v564
    %v577 = vpop.permute.xlu0 %576
    %578 = vset.pattern.permute.xlu0 0
    %579 = vperm.xlu0 %578, %v566
    %v580 = vpop.permute.xlu0 %579
    %581 = vset.pattern.permute.xlu0 0
    %582 = vperm.xlu0 %581, %v568
    %v583 = vpop.permute.xlu0 %582
    %584 = vset.pattern.permute.xlu0 0
    %585 = vperm.xlu0 %584, %v570
    %v586 = vpop.permute.xlu0 %585
    %v587 = vlaneseq
    %v588 = vshrl.u32 %v587, 7
    %v589 = vsub.s32 %v521, %v588
    %v590 = vrot.slane %v577, %v589
    %v591 = vlaneseq
    %v592 = vshrl.u32 %v591, 7
    %v593 = vsub.s32 %v526, %v592
    %v594 = vrot.slane %v580, %v593
    %v595 = vsel %vm531, %v594, %v590
    %v596 = vlaneseq
    %v597 = vshrl.u32 %v596, 7
    %v598 = vsub.s32 %v521, %v597
    %v599 = vrot.slane %v583, %v598
    %v600 = vlaneseq
    %v601 = vshrl.u32 %v600, 7
    %v602 = vsub.s32 %v526, %v601
    %v603 = vrot.slane %v586, %v602
    %v604 = vsel %vm531, %v603, %v599
    %v605 = vsel %vm93, %v604, %v595
    %v607 = vsel %vm544, %v605, 0.0
    %608 = vadd.xlane.f32.xlu0 %v607
    %v609 = vpop.xlane.xlu0 %608
    %v610 = vrcp.pop %v609
    %v612 = vlaneseq
    %v613 = vshrl.u32 %v612, 7
    %v614 = vsub.s32 0, %v613
    %v615 = vrot.slane %v610, %v614
    %v616 = vlaneseq
    %v617 = vshrl.u32 %v616, 7
    %v618 = vsub.s32 1, %v617
    %v619 = vrot.slane %v610, %v618
    %v622 = vmul.f32 %v564, %v615
    %v623 = vmul.f32 %v566, %v615
    %v624 = vmul.f32 %v568, %v619
    %v625 = vmul.f32 %v570, %v619
    %627 = vset.pattern.permute.xlu0 0
    %628 = vperm.xlu0 %627, %v622
    %v629 = vpop.permute.xlu0 %628
    %632 = vset.pattern.permute.xlu0 0
    %633 = vperm.xlu0 %632, %v623
    %v634 = vpop.permute.xlu0 %633
    %637 = vset.pattern.permute.xlu0 0
    %638 = vperm.xlu0 %637, %v624
    %v639 = vpop.permute.xlu0 %638
    %642 = vset.pattern.permute.xlu0 0
    %643 = vperm.xlu0 %642, %v625
    %v644 = vpop.permute.xlu0 %643
    %v646 = vmul.f32 %v56, %v629
    %v647 = vmul.f32 %v57, %v634
    %v648 = vmul.f32 %v58, %v639
    %v649 = vmul.f32 %v59, %v644
    %v650 = vsel %vm65, %v646, 0.0
    %v651 = vsel %vm65, %v647, 0.0
    %v652 = vadd.f32 %v650, %v651
    %v653 = vrot.slane %v652, 4
    %v654 = vadd.f32 %v652, %v653
    %v655 = vrot.slane %v654, 2
    %v656 = vadd.f32 %v654, %v655
    %v657 = vrot.slane %v656, 1
    %v658 = vadd.f32 %v656, %v657
    %v659 = vsel %vm65, %v648, 0.0
    %v660 = vsel %vm65, %v649, 0.0
    %v661 = vadd.f32 %v659, %v660
    %v662 = vrot.slane %v661, 4
    %v663 = vadd.f32 %v661, %v662
    %v664 = vrot.slane %v663, 2
    %v665 = vadd.f32 %v663, %v664
    %v666 = vrot.slane %v665, 1
    %v667 = vadd.f32 %v665, %v666
    %v670 = vsel %vm93, %v667, %v658
    %v672 = vmul.f32 %v458, %v670
    %v673 = vld [vmem:[#allocation9 + $0x60] sm:$0xff]
    %v674 = vld [vmem:[#allocation9 + $0x78] sm:$0xff]
    %v675 = vld [vmem:[#allocation9 + $0x90] sm:$0xff]
    %v676 = vld [vmem:[#allocation9 + $0xa8] sm:$0xff]
    %v677 = vld [vmem:[#allocation7] sm:$0x3]
    %v678 = vadd.f32 %v677, %v379
    %v680 = vsel %vm65, %v672, 0
    %682 = vmatprep.subr.mxu0 0.0
    %683 = vmatpush1.msra.mxu0 0.0
    %684 = vmatprep.subr.mxu0 0.0
    %685 = vmatpush1.msra.mxu0 0.0
    %686 = vmatprep.subr.mxu0 0.0
    %687 = vmatpush1.msra.mxu0 0.0
    %688 = vmatprep.subr.mxu0 0.0
    %689 = vmatpush1.msra.mxu0 0.0
    %690 = vmatprep.subr.mxu0 0.0
    %691 = vmatpush1.msra.mxu0 0.0
    %692 = vmatprep.subr.mxu0 0.0
    %693 = vmatpush1.msra.mxu0 0.0
    %694 = vmatprep.subr.mxu0 0.0
    %695 = vmatpush1.msra.mxu0 0.0
    %696 = vmatprep.subr.mxu0 0.0
    %697 = vmatpush1.msra.mxu0 0.0
    %698 = vmatprep.subr.mxu0 0.0
    %699 = vmatpush1.msra.mxu0 0.0
    %700 = vmatprep.subr.mxu0 0.0
    %701 = vmatpush1.msra.mxu0 0.0
    %702 = vmatprep.subr.mxu0 0.0
    %703 = vmatpush1.msra.mxu0 0.0
    %704 = vmatprep.subr.mxu0 0.0
    %705 = vmatpush1.msra.mxu0 0.0
    %706 = vmatprep.subr.mxu0 0.0
    %707 = vmatpush1.msra.mxu0 %v676
    %708 = vmatprep.subr.mxu0 0.0
    %709 = vmatpush1.msra.mxu0 %v675
    %710 = vmatprep.subr.mxu0 0.0
    %711 = vmatpush1.msra.mxu0 %v674
    %712 = vmatprep.subr.mxu0 0.0
    %713 = vmatpush1.msra.mxu0 %v673
    %714 = vmatprep.subr.mxu0 0.0
    %715 = vmatpush2.msra.mxu0 0.0
    %716 = vmatprep.subr.mxu0 0.0
    %717 = vmatpush2.msra.mxu0 0.0
    %718 = vmatprep.subr.mxu0 0.0
    %719 = vmatpush2.msra.mxu0 0.0
    %720 = vmatprep.subr.mxu0 0.0
    %721 = vmatpush2.msra.mxu0 0.0
    %722 = vmatprep.subr.mxu0 0.0
    %723 = vmatpush2.msra.mxu0 0.0
    %724 = vmatprep.subr.mxu0 0.0
    %725 = vmatpush2.msra.mxu0 0.0
    %726 = vmatprep.subr.mxu0 0.0
    %727 = vmatpush2.msra.mxu0 0.0
    %728 = vmatprep.subr.mxu0 0.0
    %729 = vmatpush2.msra.mxu0 0.0
    %730 = vmatprep.subr.mxu0 0.0
    %731 = vmatpush2.msra.mxu0 0.0
    %732 = vmatprep.subr.mxu0 0.0
    %733 = vmatpush2.msra.mxu0 0.0
    %734 = vmatprep.subr.mxu0 0.0
    %735 = vmatpush2.msra.mxu0 0.0
    %736 = vmatprep.subr.mxu0 0.0
    %737 = vmatpush2.msra.mxu0 0.0
    %738 = vmatprep.subr.mxu0 0.0
    %739 = vmatpush2.msra.mxu0 0.0
    %740 = vmatprep.subr.mxu0 0.0
    %741 = vmatpush2.msra.mxu0 0.0
    %742 = vmatprep.subr.mxu0 0.0
    %743 = vmatpush2.msra.mxu0 0.0
    %744 = vmatprep.subr.mxu0 0.0
    %745 = vmatpush2.msra.mxu0 0.0
    %746 = vmatprep.mubr.f32.mxu0 0.0
    %747 = vmatmul.mubr.f32.gmra.mxu0 %v680
    %v748 = vpop.f32.mrf.mxu0
    %v749 = vadd.f32 0.0, %v748
    %v750 = vpop.f32.mrf.mxu0
    %751 = vdwg.mxu0
    %v752 = vadd.f32 %v678, %v749
    %v753 = vxor.u32 %v752, 2147483648
    %v754 = vmul.f32 %v753, 1.442695
    %v755 = vpow.pop %v754
    %v756 = vadd.f32 %v755, 1.0
    %v757 = vrcp.pop %v756
    %v758 = vmul.f32 1.0, %v757
    %v759 = vtanh.pop %v752
    %v760 = vmul.f32 %v758, %v183
    %762 = vrot.lane.b32.xlu0 %v759, 64
    %v763 = vpop.permute.xlu0 %762
    %v765 = vmul.f32 %v758, %v763
    %767 = vrot.lane.b32.xlu0 %v765, 32
    %v768 = vpop.permute.xlu0 %767
    %v770 = vadd.f32 %v760, %v768
    %v771 = vtanh.pop %v770
    %773 = vrot.lane.b32.xlu0 %v771, 64
    %v774 = vpop.permute.xlu0 %773
    %v776 = vmul.f32 %v758, %v774
    %778 = vrot.lane.b32.xlu0 %v776, 32
    %v779 = vpop.permute.xlu0 %778
    %vm781 = vcmask 254976
    %782 = vst.msk [vmem:[#allocation2] sm:$0x3] %vm781, %v779
    %v783 = vlaneseq
    %v784 = vshrl.u32 %v783, 7
    %v785 = vsub.s32 %v521, %v784
    %v786 = vrot.slane %v629, %v785
    %v787 = vlaneseq
    %v788 = vshrl.u32 %v787, 7
    %v789 = vsub.s32 %v526, %v788
    %v790 = vrot.slane %v634, %v789
    %v791 = vsel %vm531, %v790, %v786
    %v792 = vlaneseq
    %v793 = vshrl.u32 %v792, 7
    %v794 = vsub.s32 %v521, %v793
    %v795 = vrot.slane %v639, %v794
    %v796 = vlaneseq
    %v797 = vshrl.u32 %v796, 7
    %v798 = vsub.s32 %v526, %v797
    %v799 = vrot.slane %v644, %v798
    %v800 = vsel %vm531, %v799, %v795
    %v801 = vsel %vm93, %v800, %v791
    %803 = vst.msk [vmem:[#allocation3] sm:$0x3] %vm544, %v801
    %v804 = vld [vmem:[#allocation9] sm:$0xff]
    %v805 = vld [vmem:[#allocation9 + $0x8] sm:$0xff]
    %v806 = vld [vmem:[#allocation9 + $0x10] sm:$0xff]
    %v807 = vld [vmem:[#allocation9 + $0x18] sm:$0xff]
    %v808 = vld [vmem:[#allocation9 + $0x20] sm:$0xff]
    %v809 = vld [vmem:[#allocation9 + $0x28] sm:$0xff]
    %v810 = vld [vmem:[#allocation9 + $0x30] sm:$0xff]
    %v811 = vld [vmem:[#allocation9 + $0x38] sm:$0xff]
    %v812 = vld [vmem:[#allocation9 + $0x40] sm:$0xff]
    %v813 = vld [vmem:[#allocation9 + $0x48] sm:$0xff]
    %v814 = vld [vmem:[#allocation9 + $0x50] sm:$0xff]
    %v815 = vld [vmem:[#allocation9 + $0x58] sm:$0xff]
    %v816 = vsel %vm65, %v779, 0
    %818 = vmatprep.subr.mxu0 0.0
    %819 = vmatpush1.msra.mxu0 0.0
    %820 = vmatprep.subr.mxu0 0.0
    %821 = vmatpush1.msra.mxu0 0.0
    %822 = vmatprep.subr.mxu0 0.0
    %823 = vmatpush1.msra.mxu0 0.0
    %824 = vmatprep.subr.mxu0 0.0
    %825 = vmatpush1.msra.mxu0 0.0
    %826 = vmatprep.subr.mxu0 0.0
    %827 = vmatpush1.msra.mxu0 0.0
    %828 = vmatprep.subr.mxu0 0.0
    %829 = vmatpush1.msra.mxu0 0.0
    %830 = vmatprep.subr.mxu0 0.0
    %831 = vmatpush1.msra.mxu0 0.0
    %832 = vmatprep.subr.mxu0 0.0
    %833 = vmatpush1.msra.mxu0 0.0
    %834 = vmatprep.subr.mxu0 0.0
    %835 = vmatpush1.msra.mxu0 0.0
    %836 = vmatprep.subr.mxu0 0.0
    %837 = vmatpush1.msra.mxu0 0.0
    %838 = vmatprep.subr.mxu0 0.0
    %839 = vmatpush1.msra.mxu0 0.0
    %840 = vmatprep.subr.mxu0 0.0
    %841 = vmatpush1.msra.mxu0 0.0
    %842 = vmatprep.subr.mxu0 %v814
    %843 = vmatpush1.msra.mxu0 %v813
    %844 = vmatprep.subr.mxu0 %v811
    %845 = vmatpush1.msra.mxu0 %v810
    %846 = vmatprep.subr.mxu0 %v808
    %847 = vmatpush1.msra.mxu0 %v807
    %848 = vmatprep.subr.mxu0 %v805
    %849 = vmatpush1.msra.mxu0 %v804
    %850 = vmatprep.subr.mxu0 0.0
    %851 = vmatpush2.msra.mxu0 0.0
    %852 = vmatprep.subr.mxu0 0.0
    %853 = vmatpush2.msra.mxu0 0.0
    %854 = vmatprep.subr.mxu0 0.0
    %855 = vmatpush2.msra.mxu0 0.0
    %856 = vmatprep.subr.mxu0 0.0
    %857 = vmatpush2.msra.mxu0 0.0
    %858 = vmatprep.subr.mxu0 0.0
    %859 = vmatpush2.msra.mxu0 0.0
    %860 = vmatprep.subr.mxu0 0.0
    %861 = vmatpush2.msra.mxu0 0.0
    %862 = vmatprep.subr.mxu0 0.0
    %863 = vmatpush2.msra.mxu0 0.0
    %864 = vmatprep.subr.mxu0 0.0
    %865 = vmatpush2.msra.mxu0 0.0
    %866 = vmatprep.subr.mxu0 0.0
    %867 = vmatpush2.msra.mxu0 0.0
    %868 = vmatprep.subr.mxu0 0.0
    %869 = vmatpush2.msra.mxu0 0.0
    %870 = vmatprep.subr.mxu0 0.0
    %871 = vmatpush2.msra.mxu0 0.0
    %872 = vmatprep.subr.mxu0 0.0
    %873 = vmatpush2.msra.mxu0 0.0
    %874 = vmatprep.subr.mxu0 0.0
    %875 = vmatpush2.msra.mxu0 0.0
    %876 = vmatprep.subr.mxu0 0.0
    %877 = vmatpush2.msra.mxu0 0.0
    %878 = vmatprep.subr.mxu0 0.0
    %879 = vmatpush2.msra.mxu0 0.0
    %880 = vmatprep.subr.mxu0 0.0
    %881 = vmatpush2.msra.mxu0 0.0
    %882 = vmatprep.mubr.f32.mxu0 0.0
    %883 = vmatmul.mubr.f32.gmra.mxu0 %v816
    %v884 = vpop.f32.mrf.mxu0
    %v885 = vadd.f32 %v285, %v884
    %v886 = vpop.f32.mrf.mxu0
    %v887 = vadd.f32 %v289, %v886
    %888 = vdwg.mxu0
    %889 = vmatprep.subr.mxu0 0.0
    %890 = vmatpush1.msra.mxu0 0.0
    %891 = vmatprep.subr.mxu0 0.0
    %892 = vmatpush1.msra.mxu0 0.0
    %893 = vmatprep.subr.mxu0 0.0
    %894 = vmatpush1.msra.mxu0 0.0
    %895 = vmatprep.subr.mxu0 0.0
    %896 = vmatpush1.msra.mxu0 0.0
    %897 = vmatprep.subr.mxu0 0.0
    %898 = vmatpush1.msra.mxu0 0.0
    %899 = vmatprep.subr.mxu0 0.0
    %900 = vmatpush1.msra.mxu0 0.0
    %901 = vmatprep.subr.mxu0 0.0
    %902 = vmatpush1.msra.mxu0 0.0
    %903 = vmatprep.subr.mxu0 0.0
    %904 = vmatpush1.msra.mxu0 0.0
    %905 = vmatprep.subr.mxu0 0.0
    %906 = vmatpush1.msra.mxu0 0.0
    %907 = vmatprep.subr.mxu0 0.0
    %908 = vmatpush1.msra.mxu0 0.0
    %909 = vmatprep.subr.mxu0 0.0
    %910 = vmatpush1.msra.mxu0 0.0
    %911 = vmatprep.subr.mxu0 0.0
    %912 = vmatpush1.msra.mxu0 0.0
    %913 = vmatprep.subr.mxu0 0.0
    %914 = vmatpush1.msra.mxu0 %v815
    %915 = vmatprep.subr.mxu0 0.0
    %916 = vmatpush1.msra.mxu0 %v812
    %917 = vmatprep.subr.mxu0 0.0
    %918 = vmatpush1.msra.mxu0 %v809
    %919 = vmatprep.subr.mxu0 0.0
    %920 = vmatpush1.msra.mxu0 %v806
    %921 = vmatprep.subr.mxu0 0.0
    %922 = vmatpush2.msra.mxu0 0.0
    %923 = vmatprep.subr.mxu0 0.0
    %924 = vmatpush2.msra.mxu0 0.0
    %925 = vmatprep.subr.mxu0 0.0
    %926 = vmatpush2.msra.mxu0 0.0
    %927 = vmatprep.subr.mxu0 0.0
    %928 = vmatpush2.msra.mxu0 0.0
    %929 = vmatprep.subr.mxu0 0.0
    %930 = vmatpush2.msra.mxu0 0.0
    %931 = vmatprep.subr.mxu0 0.0
    %932 = vmatpush2.msra.mxu0 0.0
    %933 = vmatprep.subr.mxu0 0.0
    %934 = vmatpush2.msra.mxu0 0.0
    %935 = vmatprep.subr.mxu0 0.0
    %936 = vmatpush2.msra.mxu0 0.0
    %937 = vmatprep.subr.mxu0 0.0
    %938 = vmatpush2.msra.mxu0 0.0
    %939 = vmatprep.subr.mxu0 0.0
    %940 = vmatpush2.msra.mxu0 0.0
    %941 = vmatprep.subr.mxu0 0.0
    %942 = vmatpush2.msra.mxu0 0.0
    %943 = vmatprep.subr.mxu0 0.0
    %944 = vmatpush2.msra.mxu0 0.0
    %945 = vmatprep.subr.mxu0 0.0
    %946 = vmatpush2.msra.mxu0 0.0
    %947 = vmatprep.subr.mxu0 0.0
    %948 = vmatpush2.msra.mxu0 0.0
    %949 = vmatprep.subr.mxu0 0.0
    %950 = vmatpush2.msra.mxu0 0.0
    %951 = vmatprep.subr.mxu0 0.0
    %952 = vmatpush2.msra.mxu0 0.0
    %953 = vmatprep.mubr.f32.mxu0 0.0
    %954 = vmatmul.mubr.f32.gmra.mxu0 %v816
    %v955 = vpop.f32.mrf.mxu0
    %v956 = vadd.f32 %v293, %v955
    %v957 = vpop.f32.mrf.mxu0
    %958 = vdwg.mxu0
    %v959 = vxor.u32 %v956, 2147483648
    %v960 = vmul.f32 %v959, 1.442695
    %v961 = vpow.pop %v960
    %v962 = vadd.f32 %v961, 1.0
    %v963 = vrcp.pop %v962
    %v964 = vmul.f32 1.0, %v963
    %v967 = vunpack.c.l.s4 1966171168
    %v968 = vunpack.c.0.s8 %v967
    %v969 = vlaneseq
    %v970 = vshrl.u32 %v969, 7
    %v971 = vsub.s32 %v968, %v970
    %v972 = vrot.slane %v887, %v971
    %v973 = vcombine.high %v972, %v972
    %v975 = vunpack.c.l.s4 1966171168
    %v976 = vunpack.c.0.s8 %v975
    %v977 = vlaneseq
    %v978 = vshrl.u32 %v977, 7
    %v979 = vsub.s32 %v976, %v978
    %v980 = vrot.slane %v972, %v979
    %v982 = vunpack.c.l.s4 1966171168
    %v983 = vunpack.c.0.s8 %v982
    %v984 = vlaneseq
    %v985 = vshrl.u32 %v984, 7
    %v986 = vsub.s32 %v983, %v985
    %v987 = vrot.slane %v973, %v986
    %v988 = vlaneseq
    %v989 = vshrl.u32 %v988, 7
    %v990 = vsub.s32 0, %v989
    %v991 = vrot.slane %v980, %v990
    %v992 = vlaneseq
    %v993 = vshrl.u32 %v992, 7
    %v994 = vsub.s32 0, %v993
    %v995 = vrot.slane %v987, %v994
    %v998 = vadd.f32 %v263, %v991
    %v999 = vadd.f32 %v268, %v991
    %v1000 = vadd.f32 %v273, %v995
    %v1001 = vadd.f32 %v278, %v995
    %v1002 = vtanh.pop %v998
    %v1003 = vtanh.pop %v999
    %v1004 = vtanh.pop %v1000
    %v1005 = vtanh.pop %v1001
    %v1006 = vmul.f32 %v1002, %v61
    %v1007 = vmul.f32 %v1003, %v61
    %v1008 = vmul.f32 %v1004, %v61
    %v1009 = vmul.f32 %v1005, %v61
    %v1010 = vsel %vm65, %v1006, 0.0
    %1011 = vadd.xlane.f32.xlu0 %v1010
    %v1012 = vpop.xlane.xlu0 %1011
    %v1013 = vsel %vm65, %v1007, 0.0
    %1014 = vadd.xlane.f32.xlu0 %v1013
    %v1015 = vpop.xlane.xlu0 %1014
    %v1016 = vsel %vm65, %v1008, 0.0
    %1017 = vadd.xlane.f32.xlu0 %v1016
    %v1018 = vpop.xlane.xlu0 %1017
    %v1019 = vsel %vm65, %v1009, 0.0
    %1020 = vadd.xlane.f32.xlu0 %v1019
    %v1021 = vpop.xlane.xlu0 %1020
    %v1026 = vlaneseq
    %v1027 = vshrl.u32 %v1026, 7
    %v1028 = vsub.s32 %v521, %v1027
    %v1029 = vrot.slane %v1012, %v1028
    %v1030 = vlaneseq
    %v1031 = vshrl.u32 %v1030, 7
    %v1032 = vsub.s32 %v526, %v1031
    %v1033 = vrot.slane %v1015, %v1032
    %v1034 = vsel %vm531, %v1033, %v1029
    %v1035 = vlaneseq
    %v1036 = vshrl.u32 %v1035, 7
    %v1037 = vsub.s32 %v521, %v1036
    %v1038 = vrot.slane %v1018, %v1037
    %v1039 = vlaneseq
    %v1040 = vshrl.u32 %v1039, 7
    %v1041 = vsub.s32 %v526, %v1040
    %v1042 = vrot.slane %v1021, %v1041
    %v1043 = vsel %vm531, %v1042, %v1038
    %v1044 = vsel %vm93, %v1043, %v1034
    %v1046 = vsel %vm544, %v1044, -inf
    %1047 = vmax.xlane.f32.xlu0 %v1046
    %v1048 = vpop.xlane.xlu0 %1047
    %v1050 = vlaneseq
    %v1051 = vshrl.u32 %v1050, 7
    %v1052 = vsub.s32 0, %v1051
    %v1053 = vrot.slane %v1048, %v1052
    %v1054 = vlaneseq
    %v1055 = vshrl.u32 %v1054, 7
    %v1056 = vsub.s32 1, %v1055
    %v1057 = vrot.slane %v1048, %v1056
    %v1060 = vsub.f32 %v1012, %v1053
    %v1061 = vsub.f32 %v1015, %v1053
    %v1062 = vsub.f32 %v1018, %v1057
    %v1063 = vsub.f32 %v1021, %v1057
    %v1064 = vmul.f32 %v1060, 1.442695
    %v1065 = vpow.pop %v1064
    %v1066 = vmul.f32 %v1061, 1.442695
    %v1067 = vpow.pop %v1066
    %v1068 = vmul.f32 %v1062, 1.442695
    %v1069 = vpow.pop %v1068
    %v1070 = vmul.f32 %v1063, 1.442695
    %v1071 = vpow.pop %v1070
    %1076 = vset.pattern.permute.xlu0 0
    %1077 = vperm.xlu0 %1076, %v1065
    %v1078 = vpop.permute.xlu0 %1077
    %1079 = vset.pattern.permute.xlu0 0
    %1080 = vperm.xlu0 %1079, %v1067
    %v1081 = vpop.permute.xlu0 %1080
    %1082 = vset.pattern.permute.xlu0 0
    %1083 = vperm.xlu0 %1082, %v1069
    %v1084 = vpop.permute.xlu0 %1083
    %1085 = vset.pattern.permute.xlu0 0
    %1086 = vperm.xlu0 %1085, %v1071
    %v1087 = vpop.permute.xlu0 %1086
    %v1088 = vlaneseq
    %v1089 = vshrl.u32 %v1088, 7
    %v1090 = vsub.s32 %v521, %v1089
    %v1091 = vrot.slane %v1078, %v1090
    %v1092 = vlaneseq
    %v1093 = vshrl.u32 %v1092, 7
    %v1094 = vsub.s32 %v526, %v1093
    %v1095 = vrot.slane %v1081, %v1094
    %v1096 = vsel %vm531, %v1095, %v1091
    %v1097 = vlaneseq
    %v1098 = vshrl.u32 %v1097, 7
    %v1099 = vsub.s32 %v521, %v1098
    %v1100 = vrot.slane %v1084, %v1099
    %v1101 = vlaneseq
    %v1102 = vshrl.u32 %v1101, 7
    %v1103 = vsub.s32 %v526, %v1102
    %v1104 = vrot.slane %v1087, %v1103
    %v1105 = vsel %vm531, %v1104, %v1100
    %v1106 = vsel %vm93, %v1105, %v1096
    %v1108 = vsel %vm544, %v1106, 0.0
    %1109 = vadd.xlane.f32.xlu0 %v1108
    %v1110 = vpop.xlane.xlu0 %1109
    %v1111 = vrcp.pop %v1110
    %v1113 = vlaneseq
    %v1114 = vshrl.u32 %v1113, 7
    %v1115 = vsub.s32 0, %v1114
    %v1116 = vrot.slane %v1111, %v1115
    %v1117 = vlaneseq
    %v1118 = vshrl.u32 %v1117, 7
    %v1119 = vsub.s32 1, %v1118
    %v1120 = vrot.slane %v1111, %v1119
    %v1123 = vmul.f32 %v1065, %v1116
    %v1124 = vmul.f32 %v1067, %v1116
    %v1125 = vmul.f32 %v1069, %v1120
    %v1126 = vmul.f32 %v1071, %v1120
    %1128 = vset.pattern.permute.xlu0 0
    %1129 = vperm.xlu0 %1128, %v1123
    %v1130 = vpop.permute.xlu0 %1129
    %1133 = vset.pattern.permute.xlu0 0
    %1134 = vperm.xlu0 %1133, %v1124
    %v1135 = vpop.permute.xlu0 %1134
    %1138 = vset.pattern.permute.xlu0 0
    %1139 = vperm.xlu0 %1138, %v1125
    %v1140 = vpop.permute.xlu0 %1139
    %1143 = vset.pattern.permute.xlu0 0
    %1144 = vperm.xlu0 %1143, %v1126
    %v1145 = vpop.permute.xlu0 %1144
    %v1147 = vmul.f32 %v56, %v1130
    %v1148 = vmul.f32 %v57, %v1135
    %v1149 = vmul.f32 %v58, %v1140
    %v1150 = vmul.f32 %v59, %v1145
    %v1151 = vsel %vm65, %v1147, 0.0
    %v1152 = vsel %vm65, %v1148, 0.0
    %v1153 = vadd.f32 %v1151, %v1152
    %v1154 = vrot.slane %v1153, 4
    %v1155 = vadd.f32 %v1153, %v1154
    %v1156 = vrot.slane %v1155, 2
    %v1157 = vadd.f32 %v1155, %v1156
    %v1158 = vrot.slane %v1157, 1
    %v1159 = vadd.f32 %v1157, %v1158
    %v1160 = vsel %vm65, %v1149, 0.0
    %v1161 = vsel %vm65, %v1150, 0.0
    %v1162 = vadd.f32 %v1160, %v1161
    %v1163 = vrot.slane %v1162, 4
    %v1164 = vadd.f32 %v1162, %v1163
    %v1165 = vrot.slane %v1164, 2
    %v1166 = vadd.f32 %v1164, %v1165
    %v1167 = vrot.slane %v1166, 1
    %v1168 = vadd.f32 %v1166, %v1167
    %v1171 = vsel %vm93, %v1168, %v1159
    %v1173 = vmul.f32 %v964, %v1171
    %v1174 = vld [vmem:[#allocation9 + $0x60] sm:$0xff]
    %v1175 = vld [vmem:[#allocation9 + $0x78] sm:$0xff]
    %v1176 = vld [vmem:[#allocation9 + $0x90] sm:$0xff]
    %v1177 = vld [vmem:[#allocation9 + $0xa8] sm:$0xff]
    %s1178 = scalar_lea.vmem [#allocation7], 2
    %v1179 = vld [vmem:[%s1178] sm:$0x3]
    %v1180 = vadd.f32 %v1179, %v885
    %v1182 = vsel %vm65, %v1173, 0
    %1184 = vmatprep.subr.mxu0 0.0
    %1185 = vmatpush1.msra.mxu0 0.0
    %1186 = vmatprep.subr.mxu0 0.0
    %1187 = vmatpush1.msra.mxu0 0.0
    %1188 = vmatprep.subr.mxu0 0.0
    %1189 = vmatpush1.msra.mxu0 0.0
    %1190 = vmatprep.subr.mxu0 0.0
    %1191 = vmatpush1.msra.mxu0 0.0
    %1192 = vmatprep.subr.mxu0 0.0
    %1193 = vmatpush1.msra.mxu0 0.0
    %1194 = vmatprep.subr.mxu0 0.0
    %1195 = vmatpush1.msra.mxu0 0.0
    %1196 = vmatprep.subr.mxu0 0.0
    %1197 = vmatpush1.msra.mxu0 0.0
    %1198 = vmatprep.subr.mxu0 0.0
    %1199 = vmatpush1.msra.mxu0 0.0
    %1200 = vmatprep.subr.mxu0 0.0
    %1201 = vmatpush1.msra.mxu0 0.0
    %1202 = vmatprep.subr.mxu0 0.0
    %1203 = vmatpush1.msra.mxu0 0.0
    %1204 = vmatprep.subr.mxu0 0.0
    %1205 = vmatpush1.msra.mxu0 0.0
    %1206 = vmatprep.subr.mxu0 0.0
    %1207 = vmatpush1.msra.mxu0 0.0
    %1208 = vmatprep.subr.mxu0 0.0
    %1209 = vmatpush1.msra.mxu0 %v1177
    %1210 = vmatprep.subr.mxu0 0.0
    %1211 = vmatpush1.msra.mxu0 %v1176
    %1212 = vmatprep.subr.mxu0 0.0
    %1213 = vmatpush1.msra.mxu0 %v1175
    %1214 = vmatprep.subr.mxu0 0.0
    %1215 = vmatpush1.msra.mxu0 %v1174
    %1216 = vmatprep.subr.mxu0 0.0
    %1217 = vmatpush2.msra.mxu0 0.0
    %1218 = vmatprep.subr.mxu0 0.0
    %1219 = vmatpush2.msra.mxu0 0.0
    %1220 = vmatprep.subr.mxu0 0.0
    %1221 = vmatpush2.msra.mxu0 0.0
    %1222 = vmatprep.subr.mxu0 0.0
    %1223 = vmatpush2.msra.mxu0 0.0
    %1224 = vmatprep.subr.mxu0 0.0
    %1225 = vmatpush2.msra.mxu0 0.0
    %1226 = vmatprep.subr.mxu0 0.0
    %1227 = vmatpush2.msra.mxu0 0.0
    %1228 = vmatprep.subr.mxu0 0.0
    %1229 = vmatpush2.msra.mxu0 0.0
    %1230 = vmatprep.subr.mxu0 0.0
    %1231 = vmatpush2.msra.mxu0 0.0
    %1232 = vmatprep.subr.mxu0 0.0
    %1233 = vmatpush2.msra.mxu0 0.0
    %1234 = vmatprep.subr.mxu0 0.0
    %1235 = vmatpush2.msra.mxu0 0.0
    %1236 = vmatprep.subr.mxu0 0.0
    %1237 = vmatpush2.msra.mxu0 0.0
    %1238 = vmatprep.subr.mxu0 0.0
    %1239 = vmatpush2.msra.mxu0 0.0
    %1240 = vmatprep.subr.mxu0 0.0
    %1241 = vmatpush2.msra.mxu0 0.0
    %1242 = vmatprep.subr.mxu0 0.0
    %1243 = vmatpush2.msra.mxu0 0.0
    %1244 = vmatprep.subr.mxu0 0.0
    %1245 = vmatpush2.msra.mxu0 0.0
    %1246 = vmatprep.subr.mxu0 0.0
    %1247 = vmatpush2.msra.mxu0 0.0
    %1248 = vmatprep.mubr.f32.mxu0 0.0
    %1249 = vmatmul.mubr.f32.gmra.mxu0 %v1182
    %v1250 = vpop.f32.mrf.mxu0
    %v1251 = vadd.f32 0.0, %v1250
    %v1252 = vpop.f32.mrf.mxu0
    %1253 = vdwg.mxu0
    %v1254 = vadd.f32 %v1180, %v1251
    %v1255 = vxor.u32 %v1254, 2147483648
    %v1256 = vmul.f32 %v1255, 1.442695
    %v1257 = vpow.pop %v1256
    %v1258 = vadd.f32 %v1257, 1.0
    %v1259 = vrcp.pop %v1258
    %v1260 = vmul.f32 1.0, %v1259
    %v1261 = vtanh.pop %v1254
    %v1262 = vmul.f32 %v1260, %v770
    %1264 = vrot.lane.b32.xlu0 %v1261, 64
    %v1265 = vpop.permute.xlu0 %1264
    %v1267 = vmul.f32 %v1260, %v1265
    %1269 = vrot.lane.b32.xlu0 %v1267, 32
    %v1270 = vpop.permute.xlu0 %1269
    %v1272 = vadd.f32 %v1262, %v1270
    %v1273 = vtanh.pop %v1272
    %1275 = vrot.lane.b32.xlu0 %v1273, 64
    %v1276 = vpop.permute.xlu0 %1275
    %v1278 = vmul.f32 %v1260, %v1276
    %1280 = vrot.lane.b32.xlu0 %v1278, 32
    %v1281 = vpop.permute.xlu0 %1280
    %1283 = vst.msk [vmem:[#allocation2 + $0x2] sm:$0x3] %vm781, %v1281
    %v1284 = vlaneseq
    %v1285 = vshrl.u32 %v1284, 7
    %v1286 = vsub.s32 %v521, %v1285
    %v1287 = vrot.slane %v1130, %v1286
    %v1288 = vlaneseq
    %v1289 = vshrl.u32 %v1288, 7
    %v1290 = vsub.s32 %v526, %v1289
    %v1291 = vrot.slane %v1135, %v1290
    %v1292 = vsel %vm531, %v1291, %v1287
    %v1293 = vlaneseq
    %v1294 = vshrl.u32 %v1293, 7
    %v1295 = vsub.s32 %v521, %v1294
    %v1296 = vrot.slane %v1140, %v1295
    %v1297 = vlaneseq
    %v1298 = vshrl.u32 %v1297, 7
    %v1299 = vsub.s32 %v526, %v1298
    %v1300 = vrot.slane %v1145, %v1299
    %v1301 = vsel %vm531, %v1300, %v1296
    %v1302 = vsel %vm93, %v1301, %v1292
    %1304 = vst.msk [vmem:[#allocation3 + $0x2] sm:$0x3] %vm544, %v1302
    %v1305 = vld [vmem:[#allocation9] sm:$0xff]
    %v1306 = vld [vmem:[#allocation9 + $0x8] sm:$0xff]
    %v1307 = vld [vmem:[#allocation9 + $0x10] sm:$0xff]
    %v1308 = vld [vmem:[#allocation9 + $0x18] sm:$0xff]
    %v1309 = vld [vmem:[#allocation9 + $0x20] sm:$0xff]
    %v1310 = vld [vmem:[#allocation9 + $0x28] sm:$0xff]
    %v1311 = vld [vmem:[#allocation9 + $0x30] sm:$0xff]
    %v1312 = vld [vmem:[#allocation9 + $0x38] sm:$0xff]
    %v1313 = vld [vmem:[#allocation9 + $0x40] sm:$0xff]
    %v1314 = vld [vmem:[#allocation9 + $0x48] sm:$0xff]
    %v1315 = vld [vmem:[#allocation9 + $0x50] sm:$0xff]
    %v1316 = vld [vmem:[#allocation9 + $0x58] sm:$0xff]
    %v1317 = vsel %vm65, %v1281, 0
    %1319 = vmatprep.subr.mxu0 0.0
    %1320 = vmatpush1.msra.mxu0 0.0
    %1321 = vmatprep.subr.mxu0 0.0
    %1322 = vmatpush1.msra.mxu0 0.0
    %1323 = vmatprep.subr.mxu0 0.0
    %1324 = vmatpush1.msra.mxu0 0.0
    %1325 = vmatprep.subr.mxu0 0.0
    %1326 = vmatpush1.msra.mxu0 0.0
    %1327 = vmatprep.subr.mxu0 0.0
    %1328 = vmatpush1.msra.mxu0 0.0
    %1329 = vmatprep.subr.mxu0 0.0
    %1330 = vmatpush1.msra.mxu0 0.0
    %1331 = vmatprep.subr.mxu0 0.0
    %1332 = vmatpush1.msra.mxu0 0.0
    %1333 = vmatprep.subr.mxu0 0.0
    %1334 = vmatpush1.msra.mxu0 0.0
    %1335 = vmatprep.subr.mxu0 0.0
    %1336 = vmatpush1.msra.mxu0 0.0
    %1337 = vmatprep.subr.mxu0 0.0
    %1338 = vmatpush1.msra.mxu0 0.0
    %1339 = vmatprep.subr.mxu0 0.0
    %1340 = vmatpush1.msra.mxu0 0.0
    %1341 = vmatprep.subr.mxu0 0.0
    %1342 = vmatpush1.msra.mxu0 0.0
    %1343 = vmatprep.subr.mxu0 %v1315
    %1344 = vmatpush1.msra.mxu0 %v1314
    %1345 = vmatprep.subr.mxu0 %v1312
    %1346 = vmatpush1.msra.mxu0 %v1311
    %1347 = vmatprep.subr.mxu0 %v1309
    %1348 = vmatpush1.msra.mxu0 %v1308
    %1349 = vmatprep.subr.mxu0 %v1306
    %1350 = vmatpush1.msra.mxu0 %v1305
    %1351 = vmatprep.subr.mxu0 0.0
    %1352 = vmatpush2.msra.mxu0 0.0
    %1353 = vmatprep.subr.mxu0 0.0
    %1354 = vmatpush2.msra.mxu0 0.0
    %1355 = vmatprep.subr.mxu0 0.0
    %1356 = vmatpush2.msra.mxu0 0.0
    %1357 = vmatprep.subr.mxu0 0.0
    %1358 = vmatpush2.msra.mxu0 0.0
    %1359 = vmatprep.subr.mxu0 0.0
    %1360 = vmatpush2.msra.mxu0 0.0
    %1361 = vmatprep.subr.mxu0 0.0
    %1362 = vmatpush2.msra.mxu0 0.0
    %1363 = vmatprep.subr.mxu0 0.0
    %1364 = vmatpush2.msra.mxu0 0.0
    %1365 = vmatprep.subr.mxu0 0.0
    %1366 = vmatpush2.msra.mxu0 0.0
    %1367 = vmatprep.subr.mxu0 0.0
    %1368 = vmatpush2.msra.mxu0 0.0
    %1369 = vmatprep.subr.mxu0 0.0
    %1370 = vmatpush2.msra.mxu0 0.0
    %1371 = vmatprep.subr.mxu0 0.0
    %1372 = vmatpush2.msra.mxu0 0.0
    %1373 = vmatprep.subr.mxu0 0.0
    %1374 = vmatpush2.msra.mxu0 0.0
    %1375 = vmatprep.subr.mxu0 0.0
    %1376 = vmatpush2.msra.mxu0 0.0
    %1377 = vmatprep.subr.mxu0 0.0
    %1378 = vmatpush2.msra.mxu0 0.0
    %1379 = vmatprep.subr.mxu0 0.0
    %1380 = vmatpush2.msra.mxu0 0.0
    %1381 = vmatprep.subr.mxu0 0.0
    %1382 = vmatpush2.msra.mxu0 0.0
    %1383 = vmatprep.mubr.f32.mxu0 0.0
    %1384 = vmatmul.mubr.f32.gmra.mxu0 %v1317
    %v1385 = vpop.f32.mrf.mxu0
    %v1386 = vadd.f32 %v285, %v1385
    %v1387 = vpop.f32.mrf.mxu0
    %v1388 = vadd.f32 %v289, %v1387
    %1389 = vdwg.mxu0
    %1390 = vmatprep.subr.mxu0 0.0
    %1391 = vmatpush1.msra.mxu0 0.0
    %1392 = vmatprep.subr.mxu0 0.0
    %1393 = vmatpush1.msra.mxu0 0.0
    %1394 = vmatprep.subr.mxu0 0.0
    %1395 = vmatpush1.msra.mxu0 0.0
    %1396 = vmatprep.subr.mxu0 0.0
    %1397 = vmatpush1.msra.mxu0 0.0
    %1398 = vmatprep.subr.mxu0 0.0
    %1399 = vmatpush1.msra.mxu0 0.0
    %1400 = vmatprep.subr.mxu0 0.0
    %1401 = vmatpush1.msra.mxu0 0.0
    %1402 = vmatprep.subr.mxu0 0.0
    %1403 = vmatpush1.msra.mxu0 0.0
    %1404 = vmatprep.subr.mxu0 0.0
    %1405 = vmatpush1.msra.mxu0 0.0
    %1406 = vmatprep.subr.mxu0 0.0
    %1407 = vmatpush1.msra.mxu0 0.0
    %1408 = vmatprep.subr.mxu0 0.0
    %1409 = vmatpush1.msra.mxu0 0.0
    %1410 = vmatprep.subr.mxu0 0.0
    %1411 = vmatpush1.msra.mxu0 0.0
    %1412 = vmatprep.subr.mxu0 0.0
    %1413 = vmatpush1.msra.mxu0 0.0
    %1414 = vmatprep.subr.mxu0 0.0
    %1415 = vmatpush1.msra.mxu0 %v1316
    %1416 = vmatprep.subr.mxu0 0.0
    %1417 = vmatpush1.msra.mxu0 %v1313
    %1418 = vmatprep.subr.mxu0 0.0
    %1419 = vmatpush1.msra.mxu0 %v1310
    %1420 = vmatprep.subr.mxu0 0.0
    %1421 = vmatpush1.msra.mxu0 %v1307
    %1422 = vmatprep.subr.mxu0 0.0
    %1423 = vmatpush2.msra.mxu0 0.0
    %1424 = vmatprep.subr.mxu0 0.0
    %1425 = vmatpush2.msra.mxu0 0.0
    %1426 = vmatprep.subr.mxu0 0.0
    %1427 = vmatpush2.msra.mxu0 0.0
    %1428 = vmatprep.subr.mxu0 0.0
    %1429 = vmatpush2.msra.mxu0 0.0
    %1430 = vmatprep.subr.mxu0 0.0
    %1431 = vmatpush2.msra.mxu0 0.0
    %1432 = vmatprep.subr.mxu0 0.0
    %1433 = vmatpush2.msra.mxu0 0.0
    %1434 = vmatprep.subr.mxu0 0.0
    %1435 = vmatpush2.msra.mxu0 0.0
    %1436 = vmatprep.subr.mxu0 0.0
    %1437 = vmatpush2.msra.mxu0 0.0
    %1438 = vmatprep.subr.mxu0 0.0
    %1439 = vmatpush2.msra.mxu0 0.0
    %1440 = vmatprep.subr.mxu0 0.0
    %1441 = vmatpush2.msra.mxu0 0.0
    %1442 = vmatprep.subr.mxu0 0.0
    %1443 = vmatpush2.msra.mxu0 0.0
    %1444 = vmatprep.subr.mxu0 0.0
    %1445 = vmatpush2.msra.mxu0 0.0
    %1446 = vmatprep.subr.mxu0 0.0
    %1447 = vmatpush2.msra.mxu0 0.0
    %1448 = vmatprep.subr.mxu0 0.0
    %1449 = vmatpush2.msra.mxu0 0.0
    %1450 = vmatprep.subr.mxu0 0.0
    %1451 = vmatpush2.msra.mxu0 0.0
    %1452 = vmatprep.subr.mxu0 0.0
    %1453 = vmatpush2.msra.mxu0 0.0
    %1454 = vmatprep.mubr.f32.mxu0 0.0
    %1455 = vmatmul.mubr.f32.gmra.mxu0 %v1317
    %v1456 = vpop.f32.mrf.mxu0
    %v1457 = vadd.f32 %v293, %v1456
    %v1458 = vpop.f32.mrf.mxu0
    %1459 = vdwg.mxu0
    %v1460 = vxor.u32 %v1457, 2147483648
    %v1461 = vmul.f32 %v1460, 1.442695
    %v1462 = vpow.pop %v1461
    %v1463 = vadd.f32 %v1462, 1.0
    %v1464 = vrcp.pop %v1463
    %v1465 = vmul.f32 1.0, %v1464
    %v1468 = vunpack.c.l.s4 1966171168
    %v1469 = vunpack.c.0.s8 %v1468
    %v1470 = vlaneseq
    %v1471 = vshrl.u32 %v1470, 7
    %v1472 = vsub.s32 %v1469, %v1471
    %v1473 = vrot.slane %v1388, %v1472
    %v1474 = vcombine.high %v1473, %v1473
    %v1476 = vunpack.c.l.s4 1966171168
    %v1477 = vunpack.c.0.s8 %v1476
    %v1478 = vlaneseq
    %v1479 = vshrl.u32 %v1478, 7
    %v1480 = vsub.s32 %v1477, %v1479
    %v1481 = vrot.slane %v1473, %v1480
    %v1483 = vunpack.c.l.s4 1966171168
    %v1484 = vunpack.c.0.s8 %v1483
    %v1485 = vlaneseq
    %v1486 = vshrl.u32 %v1485, 7
    %v1487 = vsub.s32 %v1484, %v1486
    %v1488 = vrot.slane %v1474, %v1487
    %v1489 = vlaneseq
    %v1490 = vshrl.u32 %v1489, 7
    %v1491 = vsub.s32 0, %v1490
    %v1492 = vrot.slane %v1481, %v1491
    %v1493 = vlaneseq
    %v1494 = vshrl.u32 %v1493, 7
    %v1495 = vsub.s32 0, %v1494
    %v1496 = vrot.slane %v1488, %v1495
    %v1499 = vadd.f32 %v263, %v1492
    %v1500 = vadd.f32 %v268, %v1492
    %v1501 = vadd.f32 %v273, %v1496
    %v1502 = vadd.f32 %v278, %v1496
    %v1503 = vtanh.pop %v1499
    %v1504 = vtanh.pop %v1500
    %v1505 = vtanh.pop %v1501
    %v1506 = vtanh.pop %v1502
    %v1507 = vmul.f32 %v1503, %v61
    %v1508 = vmul.f32 %v1504, %v61
    %v1509 = vmul.f32 %v1505, %v61
    %v1510 = vmul.f32 %v1506, %v61
    %v1511 = vsel %vm65, %v1507, 0.0
    %1512 = vadd.xlane.f32.xlu0 %v1511
    %v1513 = vpop.xlane.xlu0 %1512
    %v1514 = vsel %vm65, %v1508, 0.0
    %1515 = vadd.xlane.f32.xlu0 %v1514
    %v1516 = vpop.xlane.xlu0 %1515
    %v1517 = vsel %vm65, %v1509, 0.0
    %1518 = vadd.xlane.f32.xlu0 %v1517
    %v1519 = vpop.xlane.xlu0 %1518
    %v1520 = vsel %vm65, %v1510, 0.0
    %1521 = vadd.xlane.f32.xlu0 %v1520
    %v1522 = vpop.xlane.xlu0 %1521
    %v1527 = vlaneseq
    %v1528 = vshrl.u32 %v1527, 7
    %v1529 = vsub.s32 %v521, %v1528
    %v1530 = vrot.slane %v1513, %v1529
    %v1531 = vlaneseq
    %v1532 = vshrl.u32 %v1531, 7
    %v1533 = vsub.s32 %v526, %v1532
    %v1534 = vrot.slane %v1516, %v1533
    %v1535 = vsel %vm531, %v1534, %v1530
    %v1536 = vlaneseq
    %v1537 = vshrl.u32 %v1536, 7
    %v1538 = vsub.s32 %v521, %v1537
    %v1539 = vrot.slane %v1519, %v1538
    %v1540 = vlaneseq
    %v1541 = vshrl.u32 %v1540, 7
    %v1542 = vsub.s32 %v526, %v1541
    %v1543 = vrot.slane %v1522, %v1542
    %v1544 = vsel %vm531, %v1543, %v1539
    %v1545 = vsel %vm93, %v1544, %v1535
    %v1547 = vsel %vm544, %v1545, -inf
    %1548 = vmax.xlane.f32.xlu0 %v1547
    %v1549 = vpop.xlane.xlu0 %1548
    %v1551 = vlaneseq
    %v1552 = vshrl.u32 %v1551, 7
    %v1553 = vsub.s32 0, %v1552
    %v1554 = vrot.slane %v1549, %v1553
    %v1555 = vlaneseq
    %v1556 = vshrl.u32 %v1555, 7
    %v1557 = vsub.s32 1, %v1556
    %v1558 = vrot.slane %v1549, %v1557
    %v1561 = vsub.f32 %v1513, %v1554
    %v1562 = vsub.f32 %v1516, %v1554
    %v1563 = vsub.f32 %v1519, %v1558
    %v1564 = vsub.f32 %v1522, %v1558
    %v1565 = vmul.f32 %v1561, 1.442695
    %v1566 = vpow.pop %v1565
    %v1567 = vmul.f32 %v1562, 1.442695
    %v1568 = vpow.pop %v1567
    %v1569 = vmul.f32 %v1563, 1.442695
    %v1570 = vpow.pop %v1569
    %v1571 = vmul.f32 %v1564, 1.442695
    %v1572 = vpow.pop %v1571
    %1577 = vset.pattern.permute.xlu0 0
    %1578 = vperm.xlu0 %1577, %v1566
    %v1579 = vpop.permute.xlu0 %1578
    %1580 = vset.pattern.permute.xlu0 0
    %1581 = vperm.xlu0 %1580, %v1568
    %v1582 = vpop.permute.xlu0 %1581
    %1583 = vset.pattern.permute.xlu0 0
    %1584 = vperm.xlu0 %1583, %v1570
    %v1585 = vpop.permute.xlu0 %1584
    %1586 = vset.pattern.permute.xlu0 0
    %1587 = vperm.xlu0 %1586, %v1572
    %v1588 = vpop.permute.xlu0 %1587
    %v1589 = vlaneseq
    %v1590 = vshrl.u32 %v1589, 7
    %v1591 = vsub.s32 %v521, %v1590
    %v1592 = vrot.slane %v1579, %v1591
    %v1593 = vlaneseq
    %v1594 = vshrl.u32 %v1593, 7
    %v1595 = vsub.s32 %v526, %v1594
    %v1596 = vrot.slane %v1582, %v1595
    %v1597 = vsel %vm531, %v1596, %v1592
    %v1598 = vlaneseq
    %v1599 = vshrl.u32 %v1598, 7
    %v1600 = vsub.s32 %v521, %v1599
    %v1601 = vrot.slane %v1585, %v1600
    %v1602 = vlaneseq
    %v1603 = vshrl.u32 %v1602, 7
    %v1604 = vsub.s32 %v526, %v1603
    %v1605 = vrot.slane %v1588, %v1604
    %v1606 = vsel %vm531, %v1605, %v1601
    %v1607 = vsel %vm93, %v1606, %v1597
    %v1609 = vsel %vm544, %v1607, 0.0
    %1610 = vadd.xlane.f32.xlu0 %v1609
    %v1611 = vpop.xlane.xlu0 %1610
    %v1612 = vrcp.pop %v1611
    %v1614 = vlaneseq
    %v1615 = vshrl.u32 %v1614, 7
    %v1616 = vsub.s32 0, %v1615
    %v1617 = vrot.slane %v1612, %v1616
    %v1618 = vlaneseq
    %v1619 = vshrl.u32 %v1618, 7
    %v1620 = vsub.s32 1, %v1619
    %v1621 = vrot.slane %v1612, %v1620
    %v1624 = vmul.f32 %v1566, %v1617
    %v1625 = vmul.f32 %v1568, %v1617
    %v1626 = vmul.f32 %v1570, %v1621
    %v1627 = vmul.f32 %v1572, %v1621
    %1629 = vset.pattern.permute.xlu0 0
    %1630 = vperm.xlu0 %1629, %v1624
    %v1631 = vpop.permute.xlu0 %1630
    %1634 = vset.pattern.permute.xlu0 0
    %1635 = vperm.xlu0 %1634, %v1625
    %v1636 = vpop.permute.xlu0 %1635
    %1639 = vset.pattern.permute.xlu0 0
    %1640 = vperm.xlu0 %1639, %v1626
    %v1641 = vpop.permute.xlu0 %1640
    %1644 = vset.pattern.permute.xlu0 0
    %1645 = vperm.xlu0 %1644, %v1627
    %v1646 = vpop.permute.xlu0 %1645
    %v1648 = vmul.f32 %v56, %v1631
    %v1649 = vmul.f32 %v57, %v1636
    %v1650 = vmul.f32 %v58, %v1641
    %v1651 = vmul.f32 %v59, %v1646
    %v1652 = vsel %vm65, %v1648, 0.0
    %v1653 = vsel %vm65, %v1649, 0.0
    %v1654 = vadd.f32 %v1652, %v1653
    %v1655 = vrot.slane %v1654, 4
    %v1656 = vadd.f32 %v1654, %v1655
    %v1657 = vrot.slane %v1656, 2
    %v1658 = vadd.f32 %v1656, %v1657
    %v1659 = vrot.slane %v1658, 1
    %v1660 = vadd.f32 %v1658, %v1659
    %v1661 = vsel %vm65, %v1650, 0.0
    %v1662 = vsel %vm65, %v1651, 0.0
    %v1663 = vadd.f32 %v1661, %v1662
    %v1664 = vrot.slane %v1663, 4
    %v1665 = vadd.f32 %v1663, %v1664
    %v1666 = vrot.slane %v1665, 2
    %v1667 = vadd.f32 %v1665, %v1666
    %v1668 = vrot.slane %v1667, 1
    %v1669 = vadd.f32 %v1667, %v1668
    %v1672 = vsel %vm93, %v1669, %v1660
    %v1674 = vmul.f32 %v1465, %v1672
    %v1675 = vld [vmem:[#allocation9 + $0x60] sm:$0xff]
    %v1676 = vld [vmem:[#allocation9 + $0x78] sm:$0xff]
    %v1677 = vld [vmem:[#allocation9 + $0x90] sm:$0xff]
    %v1678 = vld [vmem:[#allocation9 + $0xa8] sm:$0xff]
    %s1679 = scalar_lea.vmem [#allocation7], 4
    %v1680 = vld [vmem:[%s1679] sm:$0x3]
    %v1681 = vadd.f32 %v1680, %v1386
    %v1683 = vsel %vm65, %v1674, 0
    %1685 = vmatprep.subr.mxu0 0.0
    %1686 = vmatpush1.msra.mxu0 0.0
    %1687 = vmatprep.subr.mxu0 0.0
    %1688 = vmatpush1.msra.mxu0 0.0
    %1689 = vmatprep.subr.mxu0 0.0
    %1690 = vmatpush1.msra.mxu0 0.0
    %1691 = vmatprep.subr.mxu0 0.0
    %1692 = vmatpush1.msra.mxu0 0.0
    %1693 = vmatprep.subr.mxu0 0.0
    %1694 = vmatpush1.msra.mxu0 0.0
    %1695 = vmatprep.subr.mxu0 0.0
    %1696 = vmatpush1.msra.mxu0 0.0
    %1697 = vmatprep.subr.mxu0 0.0
    %1698 = vmatpush1.msra.mxu0 0.0
    %1699 = vmatprep.subr.mxu0 0.0
    %1700 = vmatpush1.msra.mxu0 0.0
    %1701 = vmatprep.subr.mxu0 0.0
    %1702 = vmatpush1.msra.mxu0 0.0
    %1703 = vmatprep.subr.mxu0 0.0
    %1704 = vmatpush1.msra.mxu0 0.0
    %1705 = vmatprep.subr.mxu0 0.0
    %1706 = vmatpush1.msra.mxu0 0.0
    %1707 = vmatprep.subr.mxu0 0.0
    %1708 = vmatpush1.msra.mxu0 0.0
    %1709 = vmatprep.subr.mxu0 0.0
    %1710 = vmatpush1.msra.mxu0 %v1678
    %1711 = vmatprep.subr.mxu0 0.0
    %1712 = vmatpush1.msra.mxu0 %v1677
    %1713 = vmatprep.subr.mxu0 0.0
    %1714 = vmatpush1.msra.mxu0 %v1676
    %1715 = vmatprep.subr.mxu0 0.0
    %1716 = vmatpush1.msra.mxu0 %v1675
    %1717 = vmatprep.subr.mxu0 0.0
    %1718 = vmatpush2.msra.mxu0 0.0
    %1719 = vmatprep.subr.mxu0 0.0
    %1720 = vmatpush2.msra.mxu0 0.0
    %1721 = vmatprep.subr.mxu0 0.0
    %1722 = vmatpush2.msra.mxu0 0.0
    %1723 = vmatprep.subr.mxu0 0.0
    %1724 = vmatpush2.msra.mxu0 0.0
    %1725 = vmatprep.subr.mxu0 0.0
    %1726 = vmatpush2.msra.mxu0 0.0
    %1727 = vmatprep.subr.mxu0 0.0
    %1728 = vmatpush2.msra.mxu0 0.0
    %1729 = vmatprep.subr.mxu0 0.0
    %1730 = vmatpush2.msra.mxu0 0.0
    %1731 = vmatprep.subr.mxu0 0.0
    %1732 = vmatpush2.msra.mxu0 0.0
    %1733 = vmatprep.subr.mxu0 0.0
    %1734 = vmatpush2.msra.mxu0 0.0
    %1735 = vmatprep.subr.mxu0 0.0
    %1736 = vmatpush2.msra.mxu0 0.0
    %1737 = vmatprep.subr.mxu0 0.0
    %1738 = vmatpush2.msra.mxu0 0.0
    %1739 = vmatprep.subr.mxu0 0.0
    %1740 = vmatpush2.msra.mxu0 0.0
    %1741 = vmatprep.subr.mxu0 0.0
    %1742 = vmatpush2.msra.mxu0 0.0
    %1743 = vmatprep.subr.mxu0 0.0
    %1744 = vmatpush2.msra.mxu0 0.0
    %1745 = vmatprep.subr.mxu0 0.0
    %1746 = vmatpush2.msra.mxu0 0.0
    %1747 = vmatprep.subr.mxu0 0.0
    %1748 = vmatpush2.msra.mxu0 0.0
    %1749 = vmatprep.mubr.f32.mxu0 0.0
    %1750 = vmatmul.mubr.f32.gmra.mxu0 %v1683
    %v1751 = vpop.f32.mrf.mxu0
    %v1752 = vadd.f32 0.0, %v1751
    %v1753 = vpop.f32.mrf.mxu0
    %1754 = vdwg.mxu0
    %v1755 = vadd.f32 %v1681, %v1752
    %v1756 = vxor.u32 %v1755, 2147483648
    %v1757 = vmul.f32 %v1756, 1.442695
    %v1758 = vpow.pop %v1757
    %v1759 = vadd.f32 %v1758, 1.0
    %v1760 = vrcp.pop %v1759
    %v1761 = vmul.f32 1.0, %v1760
    %v1762 = vtanh.pop %v1755
    %v1763 = vmul.f32 %v1761, %v1272
    %1765 = vrot.lane.b32.xlu0 %v1762, 64
    %v1766 = vpop.permute.xlu0 %1765
    %v1768 = vmul.f32 %v1761, %v1766
    %1770 = vrot.lane.b32.xlu0 %v1768, 32
    %v1771 = vpop.permute.xlu0 %1770
    %v1773 = vadd.f32 %v1763, %v1771
    %v1774 = vtanh.pop %v1773
    %1776 = vrot.lane.b32.xlu0 %v1774, 64
    %v1777 = vpop.permute.xlu0 %1776
    %v1779 = vmul.f32 %v1761, %v1777
    %1781 = vrot.lane.b32.xlu0 %v1779, 32
    %v1782 = vpop.permute.xlu0 %1781
    %1784 = vst.msk [vmem:[#allocation2 + $0x4] sm:$0x3] %vm781, %v1782
    %v1785 = vlaneseq
    %v1786 = vshrl.u32 %v1785, 7
    %v1787 = vsub.s32 %v521, %v1786
    %v1788 = vrot.slane %v1631, %v1787
    %v1789 = vlaneseq
    %v1790 = vshrl.u32 %v1789, 7
    %v1791 = vsub.s32 %v526, %v1790
    %v1792 = vrot.slane %v1636, %v1791
    %v1793 = vsel %vm531, %v1792, %v1788
    %v1794 = vlaneseq
    %v1795 = vshrl.u32 %v1794, 7
    %v1796 = vsub.s32 %v521, %v1795
    %v1797 = vrot.slane %v1641, %v1796
    %v1798 = vlaneseq
    %v1799 = vshrl.u32 %v1798, 7
    %v1800 = vsub.s32 %v526, %v1799
    %v1801 = vrot.slane %v1646, %v1800
    %v1802 = vsel %vm531, %v1801, %v1797
    %v1803 = vsel %vm93, %v1802, %v1793
    %1805 = vst.msk [vmem:[#allocation3 + $0x4] sm:$0x3] %vm544, %v1803
    %v1806 = vld [vmem:[#allocation9] sm:$0xff]
    %v1807 = vld [vmem:[#allocation9 + $0x8] sm:$0xff]
    %v1808 = vld [vmem:[#allocation9 + $0x10] sm:$0xff]
    %v1809 = vld [vmem:[#allocation9 + $0x18] sm:$0xff]
    %v1810 = vld [vmem:[#allocation9 + $0x20] sm:$0xff]
    %v1811 = vld [vmem:[#allocation9 + $0x28] sm:$0xff]
    %v1812 = vld [vmem:[#allocation9 + $0x30] sm:$0xff]
    %v1813 = vld [vmem:[#allocation9 + $0x38] sm:$0xff]
    %v1814 = vld [vmem:[#allocation9 + $0x40] sm:$0xff]
    %v1815 = vld [vmem:[#allocation9 + $0x48] sm:$0xff]
    %v1816 = vld [vmem:[#allocation9 + $0x50] sm:$0xff]
    %v1817 = vld [vmem:[#allocation9 + $0x58] sm:$0xff]
    %v1818 = vsel %vm65, %v1782, 0
    %1820 = vmatprep.subr.mxu0 0.0
    %1821 = vmatpush1.msra.mxu0 0.0
    %1822 = vmatprep.subr.mxu0 0.0
    %1823 = vmatpush1.msra.mxu0 0.0
    %1824 = vmatprep.subr.mxu0 0.0
    %1825 = vmatpush1.msra.mxu0 0.0
    %1826 = vmatprep.subr.mxu0 0.0
    %1827 = vmatpush1.msra.mxu0 0.0
    %1828 = vmatprep.subr.mxu0 0.0
    %1829 = vmatpush1.msra.mxu0 0.0
    %1830 = vmatprep.subr.mxu0 0.0
    %1831 = vmatpush1.msra.mxu0 0.0
    %1832 = vmatprep.subr.mxu0 0.0
    %1833 = vmatpush1.msra.mxu0 0.0
    %1834 = vmatprep.subr.mxu0 0.0
    %1835 = vmatpush1.msra.mxu0 0.0
    %1836 = vmatprep.subr.mxu0 0.0
    %1837 = vmatpush1.msra.mxu0 0.0
    %1838 = vmatprep.subr.mxu0 0.0
    %1839 = vmatpush1.msra.mxu0 0.0
    %1840 = vmatprep.subr.mxu0 0.0
    %1841 = vmatpush1.msra.mxu0 0.0
    %1842 = vmatprep.subr.mxu0 0.0
    %1843 = vmatpush1.msra.mxu0 0.0
    %1844 = vmatprep.subr.mxu0 %v1816
    %1845 = vmatpush1.msra.mxu0 %v1815
    %1846 = vmatprep.subr.mxu0 %v1813
    %1847 = vmatpush1.msra.mxu0 %v1812
    %1848 = vmatprep.subr.mxu0 %v1810
    %1849 = vmatpush1.msra.mxu0 %v1809
    %1850 = vmatprep.subr.mxu0 %v1807
    %1851 = vmatpush1.msra.mxu0 %v1806
    %1852 = vmatprep.subr.mxu0 0.0
    %1853 = vmatpush2.msra.mxu0 0.0
    %1854 = vmatprep.subr.mxu0 0.0
    %1855 = vmatpush2.msra.mxu0 0.0
    %1856 = vmatprep.subr.mxu0 0.0
    %1857 = vmatpush2.msra.mxu0 0.0
    %1858 = vmatprep.subr.mxu0 0.0
    %1859 = vmatpush2.msra.mxu0 0.0
    %1860 = vmatprep.subr.mxu0 0.0
    %1861 = vmatpush2.msra.mxu0 0.0
    %1862 = vmatprep.subr.mxu0 0.0
    %1863 = vmatpush2.msra.mxu0 0.0
    %1864 = vmatprep.subr.mxu0 0.0
    %1865 = vmatpush2.msra.mxu0 0.0
    %1866 = vmatprep.subr.mxu0 0.0
    %1867 = vmatpush2.msra.mxu0 0.0
    %1868 = vmatprep.subr.mxu0 0.0
    %1869 = vmatpush2.msra.mxu0 0.0
    %1870 = vmatprep.subr.mxu0 0.0
    %1871 = vmatpush2.msra.mxu0 0.0
    %1872 = vmatprep.subr.mxu0 0.0
    %1873 = vmatpush2.msra.mxu0 0.0
    %1874 = vmatprep.subr.mxu0 0.0
    %1875 = vmatpush2.msra.mxu0 0.0
    %1876 = vmatprep.subr.mxu0 0.0
    %1877 = vmatpush2.msra.mxu0 0.0
    %1878 = vmatprep.subr.mxu0 0.0
    %1879 = vmatpush2.msra.mxu0 0.0
    %1880 = vmatprep.subr.mxu0 0.0
    %1881 = vmatpush2.msra.mxu0 0.0
    %1882 = vmatprep.subr.mxu0 0.0
    %1883 = vmatpush2.msra.mxu0 0.0
    %1884 = vmatprep.mubr.f32.mxu0 0.0
    %1885 = vmatmul.mubr.f32.gmra.mxu0 %v1818
    %v1886 = vpop.f32.mrf.mxu0
    %v1887 = vadd.f32 %v285, %v1886
    %v1888 = vpop.f32.mrf.mxu0
    %v1889 = vadd.f32 %v289, %v1888
    %1890 = vdwg.mxu0
    %1891 = vmatprep.subr.mxu0 0.0
    %1892 = vmatpush1.msra.mxu0 0.0
    %1893 = vmatprep.subr.mxu0 0.0
    %1894 = vmatpush1.msra.mxu0 0.0
    %1895 = vmatprep.subr.mxu0 0.0
    %1896 = vmatpush1.msra.mxu0 0.0
    %1897 = vmatprep.subr.mxu0 0.0
    %1898 = vmatpush1.msra.mxu0 0.0
    %1899 = vmatprep.subr.mxu0 0.0
    %1900 = vmatpush1.msra.mxu0 0.0
    %1901 = vmatprep.subr.mxu0 0.0
    %1902 = vmatpush1.msra.mxu0 0.0
    %1903 = vmatprep.subr.mxu0 0.0
    %1904 = vmatpush1.msra.mxu0 0.0
    %1905 = vmatprep.subr.mxu0 0.0
    %1906 = vmatpush1.msra.mxu0 0.0
    %1907 = vmatprep.subr.mxu0 0.0
    %1908 = vmatpush1.msra.mxu0 0.0
    %1909 = vmatprep.subr.mxu0 0.0
    %1910 = vmatpush1.msra.mxu0 0.0
    %1911 = vmatprep.subr.mxu0 0.0
    %1912 = vmatpush1.msra.mxu0 0.0
    %1913 = vmatprep.subr.mxu0 0.0
    %1914 = vmatpush1.msra.mxu0 0.0
    %1915 = vmatprep.subr.mxu0 0.0
    %1916 = vmatpush1.msra.mxu0 %v1817
    %1917 = vmatprep.subr.mxu0 0.0
    %1918 = vmatpush1.msra.mxu0 %v1814
    %1919 = vmatprep.subr.mxu0 0.0
    %1920 = vmatpush1.msra.mxu0 %v1811
    %1921 = vmatprep.subr.mxu0 0.0
    %1922 = vmatpush1.msra.mxu0 %v1808
    %1923 = vmatprep.subr.mxu0 0.0
    %1924 = vmatpush2.msra.mxu0 0.0
    %1925 = vmatprep.subr.mxu0 0.0
    %1926 = vmatpush2.msra.mxu0 0.0
    %1927 = vmatprep.subr.mxu0 0.0
    %1928 = vmatpush2.msra.mxu0 0.0
    %1929 = vmatprep.subr.mxu0 0.0
    %1930 = vmatpush2.msra.mxu0 0.0
    %1931 = vmatprep.subr.mxu0 0.0
    %1932 = vmatpush2.msra.mxu0 0.0
    %1933 = vmatprep.subr.mxu0 0.0
    %1934 = vmatpush2.msra.mxu0 0.0
    %1935 = vmatprep.subr.mxu0 0.0
    %1936 = vmatpush2.msra.mxu0 0.0
    %1937 = vmatprep.subr.mxu0 0.0
    %1938 = vmatpush2.msra.mxu0 0.0
    %1939 = vmatprep.subr.mxu0 0.0
    %1940 = vmatpush2.msra.mxu0 0.0
    %1941 = vmatprep.subr.mxu0 0.0
    %1942 = vmatpush2.msra.mxu0 0.0
    %1943 = vmatprep.subr.mxu0 0.0
    %1944 = vmatpush2.msra.mxu0 0.0
    %1945 = vmatprep.subr.mxu0 0.0
    %1946 = vmatpush2.msra.mxu0 0.0
    %1947 = vmatprep.subr.mxu0 0.0
    %1948 = vmatpush2.msra.mxu0 0.0
    %1949 = vmatprep.subr.mxu0 0.0
    %1950 = vmatpush2.msra.mxu0 0.0
    %1951 = vmatprep.subr.mxu0 0.0
    %1952 = vmatpush2.msra.mxu0 0.0
    %1953 = vmatprep.subr.mxu0 0.0
    %1954 = vmatpush2.msra.mxu0 0.0
    %1955 = vmatprep.mubr.f32.mxu0 0.0
    %1956 = vmatmul.mubr.f32.gmra.mxu0 %v1818
    %v1957 = vpop.f32.mrf.mxu0
    %v1958 = vadd.f32 %v293, %v1957
    %v1959 = vpop.f32.mrf.mxu0
    %1960 = vdwg.mxu0
    %v1961 = vxor.u32 %v1958, 2147483648
    %v1962 = vmul.f32 %v1961, 1.442695
    %v1963 = vpow.pop %v1962
    %v1964 = vadd.f32 %v1963, 1.0
    %v1965 = vrcp.pop %v1964
    %v1966 = vmul.f32 1.0, %v1965
    %v1969 = vunpack.c.l.s4 1966171168
    %v1970 = vunpack.c.0.s8 %v1969
    %v1971 = vlaneseq
    %v1972 = vshrl.u32 %v1971, 7
    %v1973 = vsub.s32 %v1970, %v1972
    %v1974 = vrot.slane %v1889, %v1973
    %v1975 = vcombine.high %v1974, %v1974
    %v1977 = vunpack.c.l.s4 1966171168
    %v1978 = vunpack.c.0.s8 %v1977
    %v1979 = vlaneseq
    %v1980 = vshrl.u32 %v1979, 7
    %v1981 = vsub.s32 %v1978, %v1980
    %v1982 = vrot.slane %v1974, %v1981
    %v1984 = vunpack.c.l.s4 1966171168
    %v1985 = vunpack.c.0.s8 %v1984
    %v1986 = vlaneseq
    %v1987 = vshrl.u32 %v1986, 7
    %v1988 = vsub.s32 %v1985, %v1987
    %v1989 = vrot.slane %v1975, %v1988
    %v1990 = vlaneseq
    %v1991 = vshrl.u32 %v1990, 7
    %v1992 = vsub.s32 0, %v1991
    %v1993 = vrot.slane %v1982, %v1992
    %v1994 = vlaneseq
    %v1995 = vshrl.u32 %v1994, 7
    %v1996 = vsub.s32 0, %v1995
    %v1997 = vrot.slane %v1989, %v1996
    %v2000 = vadd.f32 %v263, %v1993
    %v2001 = vadd.f32 %v268, %v1993
    %v2002 = vadd.f32 %v273, %v1997
    %v2003 = vadd.f32 %v278, %v1997
    %v2004 = vtanh.pop %v2000
    %v2005 = vtanh.pop %v2001
    %v2006 = vtanh.pop %v2002
    %v2007 = vtanh.pop %v2003
    %v2008 = vmul.f32 %v2004, %v61
    %v2009 = vmul.f32 %v2005, %v61
    %v2010 = vmul.f32 %v2006, %v61
    %v2011 = vmul.f32 %v2007, %v61
    %v2012 = vsel %vm65, %v2008, 0.0
    %2013 = vadd.xlane.f32.xlu0 %v2012
    %v2014 = vpop.xlane.xlu0 %2013
    %v2015 = vsel %vm65, %v2009, 0.0
    %2016 = vadd.xlane.f32.xlu0 %v2015
    %v2017 = vpop.xlane.xlu0 %2016
    %v2018 = vsel %vm65, %v2010, 0.0
    %2019 = vadd.xlane.f32.xlu0 %v2018
    %v2020 = vpop.xlane.xlu0 %2019
    %v2021 = vsel %vm65, %v2011, 0.0
    %2022 = vadd.xlane.f32.xlu0 %v2021
    %v2023 = vpop.xlane.xlu0 %2022
    %v2028 = vlaneseq
    %v2029 = vshrl.u32 %v2028, 7
    %v2030 = vsub.s32 %v521, %v2029
    %v2031 = vrot.slane %v2014, %v2030
    %v2032 = vlaneseq
    %v2033 = vshrl.u32 %v2032, 7
    %v2034 = vsub.s32 %v526, %v2033
    %v2035 = vrot.slane %v2017, %v2034
    %v2036 = vsel %vm531, %v2035, %v2031
    %v2037 = vlaneseq
    %v2038 = vshrl.u32 %v2037, 7
    %v2039 = vsub.s32 %v521, %v2038
    %v2040 = vrot.slane %v2020, %v2039
    %v2041 = vlaneseq
    %v2042 = vshrl.u32 %v2041, 7
    %v2043 = vsub.s32 %v526, %v2042
    %v2044 = vrot.slane %v2023, %v2043
    %v2045 = vsel %vm531, %v2044, %v2040
    %v2046 = vsel %vm93, %v2045, %v2036
    %v2048 = vsel %vm544, %v2046, -inf
    %2049 = vmax.xlane.f32.xlu0 %v2048
    %v2050 = vpop.xlane.xlu0 %2049
    %v2052 = vlaneseq
    %v2053 = vshrl.u32 %v2052, 7
    %v2054 = vsub.s32 0, %v2053
    %v2055 = vrot.slane %v2050, %v2054
    %v2056 = vlaneseq
    %v2057 = vshrl.u32 %v2056, 7
    %v2058 = vsub.s32 1, %v2057
    %v2059 = vrot.slane %v2050, %v2058
    %v2062 = vsub.f32 %v2014, %v2055
    %v2063 = vsub.f32 %v2017, %v2055
    %v2064 = vsub.f32 %v2020, %v2059
    %v2065 = vsub.f32 %v2023, %v2059
    %v2066 = vmul.f32 %v2062, 1.442695
    %v2067 = vpow.pop %v2066
    %v2068 = vmul.f32 %v2063, 1.442695
    %v2069 = vpow.pop %v2068
    %v2070 = vmul.f32 %v2064, 1.442695
    %v2071 = vpow.pop %v2070
    %v2072 = vmul.f32 %v2065, 1.442695
    %v2073 = vpow.pop %v2072
    %2078 = vset.pattern.permute.xlu0 0
    %2079 = vperm.xlu0 %2078, %v2067
    %v2080 = vpop.permute.xlu0 %2079
    %2081 = vset.pattern.permute.xlu0 0
    %2082 = vperm.xlu0 %2081, %v2069
    %v2083 = vpop.permute.xlu0 %2082
    %2084 = vset.pattern.permute.xlu0 0
    %2085 = vperm.xlu0 %2084, %v2071
    %v2086 = vpop.permute.xlu0 %2085
    %2087 = vset.pattern.permute.xlu0 0
    %2088 = vperm.xlu0 %2087, %v2073
    %v2089 = vpop.permute.xlu0 %2088
    %v2090 = vlaneseq
    %v2091 = vshrl.u32 %v2090, 7
    %v2092 = vsub.s32 %v521, %v2091
    %v2093 = vrot.slane %v2080, %v2092
    %v2094 = vlaneseq
    %v2095 = vshrl.u32 %v2094, 7
    %v2096 = vsub.s32 %v526, %v2095
    %v2097 = vrot.slane %v2083, %v2096
    %v2098 = vsel %vm531, %v2097, %v2093
    %v2099 = vlaneseq
    %v2100 = vshrl.u32 %v2099, 7
    %v2101 = vsub.s32 %v521, %v2100
    %v2102 = vrot.slane %v2086, %v2101
    %v2103 = vlaneseq
    %v2104 = vshrl.u32 %v2103, 7
    %v2105 = vsub.s32 %v526, %v2104
    %v2106 = vrot.slane %v2089, %v2105
    %v2107 = vsel %vm531, %v2106, %v2102
    %v2108 = vsel %vm93, %v2107, %v2098
    %v2110 = vsel %vm544, %v2108, 0.0
    %2111 = vadd.xlane.f32.xlu0 %v2110
    %v2112 = vpop.xlane.xlu0 %2111
    %v2113 = vrcp.pop %v2112
    %v2115 = vlaneseq
    %v2116 = vshrl.u32 %v2115, 7
    %v2117 = vsub.s32 0, %v2116
    %v2118 = vrot.slane %v2113, %v2117
    %v2119 = vlaneseq
    %v2120 = vshrl.u32 %v2119, 7
    %v2121 = vsub.s32 1, %v2120
    %v2122 = vrot.slane %v2113, %v2121
    %v2125 = vmul.f32 %v2067, %v2118
    %v2126 = vmul.f32 %v2069, %v2118
    %v2127 = vmul.f32 %v2071, %v2122
    %v2128 = vmul.f32 %v2073, %v2122
    %2130 = vset.pattern.permute.xlu0 0
    %2131 = vperm.xlu0 %2130, %v2125
    %v2132 = vpop.permute.xlu0 %2131
    %2135 = vset.pattern.permute.xlu0 0
    %2136 = vperm.xlu0 %2135, %v2126
    %v2137 = vpop.permute.xlu0 %2136
    %2140 = vset.pattern.permute.xlu0 0
    %2141 = vperm.xlu0 %2140, %v2127
    %v2142 = vpop.permute.xlu0 %2141
    %2145 = vset.pattern.permute.xlu0 0
    %2146 = vperm.xlu0 %2145, %v2128
    %v2147 = vpop.permute.xlu0 %2146
    %v2149 = vmul.f32 %v56, %v2132
    %v2150 = vmul.f32 %v57, %v2137
    %v2151 = vmul.f32 %v58, %v2142
    %v2152 = vmul.f32 %v59, %v2147
    %v2153 = vsel %vm65, %v2149, 0.0
    %v2154 = vsel %vm65, %v2150, 0.0
    %v2155 = vadd.f32 %v2153, %v2154
    %v2156 = vrot.slane %v2155, 4
    %v2157 = vadd.f32 %v2155, %v2156
    %v2158 = vrot.slane %v2157, 2
    %v2159 = vadd.f32 %v2157, %v2158
    %v2160 = vrot.slane %v2159, 1
    %v2161 = vadd.f32 %v2159, %v2160
    %v2162 = vsel %vm65, %v2151, 0.0
    %v2163 = vsel %vm65, %v2152, 0.0
    %v2164 = vadd.f32 %v2162, %v2163
    %v2165 = vrot.slane %v2164, 4
    %v2166 = vadd.f32 %v2164, %v2165
    %v2167 = vrot.slane %v2166, 2
    %v2168 = vadd.f32 %v2166, %v2167
    %v2169 = vrot.slane %v2168, 1
    %v2170 = vadd.f32 %v2168, %v2169
    %v2173 = vsel %vm93, %v2170, %v2161
    %v2175 = vmul.f32 %v1966, %v2173
    %v2176 = vld [vmem:[#allocation9 + $0x60] sm:$0xff]
    %v2177 = vld [vmem:[#allocation9 + $0x78] sm:$0xff]
    %v2178 = vld [vmem:[#allocation9 + $0x90] sm:$0xff]
    %v2179 = vld [vmem:[#allocation9 + $0xa8] sm:$0xff]
    %s2180 = scalar_lea.vmem [#allocation7], 6
    %v2181 = vld [vmem:[%s2180] sm:$0x3]
    %v2182 = vadd.f32 %v2181, %v1887
    %v2184 = vsel %vm65, %v2175, 0
    %2186 = vmatprep.subr.mxu0 0.0
    %2187 = vmatpush1.msra.mxu0 0.0
    %2188 = vmatprep.subr.mxu0 0.0
    %2189 = vmatpush1.msra.mxu0 0.0
    %2190 = vmatprep.subr.mxu0 0.0
    %2191 = vmatpush1.msra.mxu0 0.0
    %2192 = vmatprep.subr.mxu0 0.0
    %2193 = vmatpush1.msra.mxu0 0.0
    %2194 = vmatprep.subr.mxu0 0.0
    %2195 = vmatpush1.msra.mxu0 0.0
    %2196 = vmatprep.subr.mxu0 0.0
    %2197 = vmatpush1.msra.mxu0 0.0
    %2198 = vmatprep.subr.mxu0 0.0
    %2199 = vmatpush1.msra.mxu0 0.0
    %2200 = vmatprep.subr.mxu0 0.0
    %2201 = vmatpush1.msra.mxu0 0.0
    %2202 = vmatprep.subr.mxu0 0.0
    %2203 = vmatpush1.msra.mxu0 0.0
    %2204 = vmatprep.subr.mxu0 0.0
    %2205 = vmatpush1.msra.mxu0 0.0
    %2206 = vmatprep.subr.mxu0 0.0
    %2207 = vmatpush1.msra.mxu0 0.0
    %2208 = vmatprep.subr.mxu0 0.0
    %2209 = vmatpush1.msra.mxu0 0.0
    %2210 = vmatprep.subr.mxu0 0.0
    %2211 = vmatpush1.msra.mxu0 %v2179
    %2212 = vmatprep.subr.mxu0 0.0
    %2213 = vmatpush1.msra.mxu0 %v2178
    %2214 = vmatprep.subr.mxu0 0.0
    %2215 = vmatpush1.msra.mxu0 %v2177
    %2216 = vmatprep.subr.mxu0 0.0
    %2217 = vmatpush1.msra.mxu0 %v2176
    %2218 = vmatprep.subr.mxu0 0.0
    %2219 = vmatpush2.msra.mxu0 0.0
    %2220 = vmatprep.subr.mxu0 0.0
    %2221 = vmatpush2.msra.mxu0 0.0
    %2222 = vmatprep.subr.mxu0 0.0
    %2223 = vmatpush2.msra.mxu0 0.0
    %2224 = vmatprep.subr.mxu0 0.0
    %2225 = vmatpush2.msra.mxu0 0.0
    %2226 = vmatprep.subr.mxu0 0.0
    %2227 = vmatpush2.msra.mxu0 0.0
    %2228 = vmatprep.subr.mxu0 0.0
    %2229 = vmatpush2.msra.mxu0 0.0
    %2230 = vmatprep.subr.mxu0 0.0
    %2231 = vmatpush2.msra.mxu0 0.0
    %2232 = vmatprep.subr.mxu0 0.0
    %2233 = vmatpush2.msra.mxu0 0.0
    %2234 = vmatprep.subr.mxu0 0.0
    %2235 = vmatpush2.msra.mxu0 0.0
    %2236 = vmatprep.subr.mxu0 0.0
    %2237 = vmatpush2.msra.mxu0 0.0
    %2238 = vmatprep.subr.mxu0 0.0
    %2239 = vmatpush2.msra.mxu0 0.0
    %2240 = vmatprep.subr.mxu0 0.0
    %2241 = vmatpush2.msra.mxu0 0.0
    %2242 = vmatprep.subr.mxu0 0.0
    %2243 = vmatpush2.msra.mxu0 0.0
    %2244 = vmatprep.subr.mxu0 0.0
    %2245 = vmatpush2.msra.mxu0 0.0
    %2246 = vmatprep.subr.mxu0 0.0
    %2247 = vmatpush2.msra.mxu0 0.0
    %2248 = vmatprep.subr.mxu0 0.0
    %2249 = vmatpush2.msra.mxu0 0.0
    %2250 = vmatprep.mubr.f32.mxu0 0.0
    %2251 = vmatmul.mubr.f32.gmra.mxu0 %v2184
    %v2252 = vpop.f32.mrf.mxu0
    %v2253 = vadd.f32 0.0, %v2252
    %v2254 = vpop.f32.mrf.mxu0
    %2255 = vdwg.mxu0
    %v2256 = vadd.f32 %v2182, %v2253
    %v2257 = vxor.u32 %v2256, 2147483648
    %v2258 = vmul.f32 %v2257, 1.442695
    %v2259 = vpow.pop %v2258
    %v2260 = vadd.f32 %v2259, 1.0
    %v2261 = vrcp.pop %v2260
    %v2262 = vmul.f32 1.0, %v2261
    %v2263 = vtanh.pop %v2256
    %v2264 = vmul.f32 %v2262, %v1773
    %2266 = vrot.lane.b32.xlu0 %v2263, 64
    %v2267 = vpop.permute.xlu0 %2266
    %v2269 = vmul.f32 %v2262, %v2267
    %2271 = vrot.lane.b32.xlu0 %v2269, 32
    %v2272 = vpop.permute.xlu0 %2271
    %v2274 = vadd.f32 %v2264, %v2272
    %v2275 = vtanh.pop %v2274
    %2277 = vrot.lane.b32.xlu0 %v2275, 64
    %v2278 = vpop.permute.xlu0 %2277
    %v2280 = vmul.f32 %v2262, %v2278
    %2282 = vrot.lane.b32.xlu0 %v2280, 32
    %v2283 = vpop.permute.xlu0 %2282
    %2285 = vst.msk [vmem:[#allocation2 + $0x6] sm:$0x3] %vm781, %v2283
    %v2286 = vlaneseq
    %v2287 = vshrl.u32 %v2286, 7
    %v2288 = vsub.s32 %v521, %v2287
    %v2289 = vrot.slane %v2132, %v2288
    %v2290 = vlaneseq
    %v2291 = vshrl.u32 %v2290, 7
    %v2292 = vsub.s32 %v526, %v2291
    %v2293 = vrot.slane %v2137, %v2292
    %v2294 = vsel %vm531, %v2293, %v2289
    %v2295 = vlaneseq
    %v2296 = vshrl.u32 %v2295, 7
    %v2297 = vsub.s32 %v521, %v2296
    %v2298 = vrot.slane %v2142, %v2297
    %v2299 = vlaneseq
    %v2300 = vshrl.u32 %v2299, 7
    %v2301 = vsub.s32 %v526, %v2300
    %v2302 = vrot.slane %v2147, %v2301
    %v2303 = vsel %vm531, %v2302, %v2298
    %v2304 = vsel %vm93, %v2303, %v2294
    %2306 = vst.msk [vmem:[#allocation3 + $0x6] sm:$0x3] %vm544, %v2304
    %v2307 = vld [vmem:[#allocation9] sm:$0xff]
    %v2308 = vld [vmem:[#allocation9 + $0x8] sm:$0xff]
    %v2309 = vld [vmem:[#allocation9 + $0x10] sm:$0xff]
    %v2310 = vld [vmem:[#allocation9 + $0x18] sm:$0xff]
    %v2311 = vld [vmem:[#allocation9 + $0x20] sm:$0xff]
    %v2312 = vld [vmem:[#allocation9 + $0x28] sm:$0xff]
    %v2313 = vld [vmem:[#allocation9 + $0x30] sm:$0xff]
    %v2314 = vld [vmem:[#allocation9 + $0x38] sm:$0xff]
    %v2315 = vld [vmem:[#allocation9 + $0x40] sm:$0xff]
    %v2316 = vld [vmem:[#allocation9 + $0x48] sm:$0xff]
    %v2317 = vld [vmem:[#allocation9 + $0x50] sm:$0xff]
    %v2318 = vld [vmem:[#allocation9 + $0x58] sm:$0xff]
    %v2319 = vsel %vm65, %v2283, 0
    %2321 = vmatprep.subr.mxu0 0.0
    %2322 = vmatpush1.msra.mxu0 0.0
    %2323 = vmatprep.subr.mxu0 0.0
    %2324 = vmatpush1.msra.mxu0 0.0
    %2325 = vmatprep.subr.mxu0 0.0
    %2326 = vmatpush1.msra.mxu0 0.0
    %2327 = vmatprep.subr.mxu0 0.0
    %2328 = vmatpush1.msra.mxu0 0.0
    %2329 = vmatprep.subr.mxu0 0.0
    %2330 = vmatpush1.msra.mxu0 0.0
    %2331 = vmatprep.subr.mxu0 0.0
    %2332 = vmatpush1.msra.mxu0 0.0
    %2333 = vmatprep.subr.mxu0 0.0
    %2334 = vmatpush1.msra.mxu0 0.0
    %2335 = vmatprep.subr.mxu0 0.0
    %2336 = vmatpush1.msra.mxu0 0.0
    %2337 = vmatprep.subr.mxu0 0.0
    %2338 = vmatpush1.msra.mxu0 0.0
    %2339 = vmatprep.subr.mxu0 0.0
    %2340 = vmatpush1.msra.mxu0 0.0
    %2341 = vmatprep.subr.mxu0 0.0
    %2342 = vmatpush1.msra.mxu0 0.0
    %2343 = vmatprep.subr.mxu0 0.0
    %2344 = vmatpush1.msra.mxu0 0.0
    %2345 = vmatprep.subr.mxu0 %v2317
    %2346 = vmatpush1.msra.mxu0 %v2316
    %2347 = vmatprep.subr.mxu0 %v2314
    %2348 = vmatpush1.msra.mxu0 %v2313
    %2349 = vmatprep.subr.mxu0 %v2311
    %2350 = vmatpush1.msra.mxu0 %v2310
    %2351 = vmatprep.subr.mxu0 %v2308
    %2352 = vmatpush1.msra.mxu0 %v2307
    %2353 = vmatprep.subr.mxu0 0.0
    %2354 = vmatpush2.msra.mxu0 0.0
    %2355 = vmatprep.subr.mxu0 0.0
    %2356 = vmatpush2.msra.mxu0 0.0
    %2357 = vmatprep.subr.mxu0 0.0
    %2358 = vmatpush2.msra.mxu0 0.0
    %2359 = vmatprep.subr.mxu0 0.0
    %2360 = vmatpush2.msra.mxu0 0.0
    %2361 = vmatprep.subr.mxu0 0.0
    %2362 = vmatpush2.msra.mxu0 0.0
    %2363 = vmatprep.subr.mxu0 0.0
    %2364 = vmatpush2.msra.mxu0 0.0
    %2365 = vmatprep.subr.mxu0 0.0
    %2366 = vmatpush2.msra.mxu0 0.0
    %2367 = vmatprep.subr.mxu0 0.0
    %2368 = vmatpush2.msra.mxu0 0.0
    %2369 = vmatprep.subr.mxu0 0.0
    %2370 = vmatpush2.msra.mxu0 0.0
    %2371 = vmatprep.subr.mxu0 0.0
    %2372 = vmatpush2.msra.mxu0 0.0
    %2373 = vmatprep.subr.mxu0 0.0
    %2374 = vmatpush2.msra.mxu0 0.0
    %2375 = vmatprep.subr.mxu0 0.0
    %2376 = vmatpush2.msra.mxu0 0.0
    %2377 = vmatprep.subr.mxu0 0.0
    %2378 = vmatpush2.msra.mxu0 0.0
    %2379 = vmatprep.subr.mxu0 0.0
    %2380 = vmatpush2.msra.mxu0 0.0
    %2381 = vmatprep.subr.mxu0 0.0
    %2382 = vmatpush2.msra.mxu0 0.0
    %2383 = vmatprep.subr.mxu0 0.0
    %2384 = vmatpush2.msra.mxu0 0.0
    %2385 = vmatprep.mubr.f32.mxu0 0.0
    %2386 = vmatmul.mubr.f32.gmra.mxu0 %v2319
    %v2387 = vpop.f32.mrf.mxu0
    %v2388 = vadd.f32 %v285, %v2387
    %v2389 = vpop.f32.mrf.mxu0
    %v2390 = vadd.f32 %v289, %v2389
    %2391 = vdwg.mxu0
    %2392 = vmatprep.subr.mxu0 0.0
    %2393 = vmatpush1.msra.mxu0 0.0
    %2394 = vmatprep.subr.mxu0 0.0
    %2395 = vmatpush1.msra.mxu0 0.0
    %2396 = vmatprep.subr.mxu0 0.0
    %2397 = vmatpush1.msra.mxu0 0.0
    %2398 = vmatprep.subr.mxu0 0.0
    %2399 = vmatpush1.msra.mxu0 0.0
    %2400 = vmatprep.subr.mxu0 0.0
    %2401 = vmatpush1.msra.mxu0 0.0
    %2402 = vmatprep.subr.mxu0 0.0
    %2403 = vmatpush1.msra.mxu0 0.0
    %2404 = vmatprep.subr.mxu0 0.0
    %2405 = vmatpush1.msra.mxu0 0.0
    %2406 = vmatprep.subr.mxu0 0.0
    %2407 = vmatpush1.msra.mxu0 0.0
    %2408 = vmatprep.subr.mxu0 0.0
    %2409 = vmatpush1.msra.mxu0 0.0
    %2410 = vmatprep.subr.mxu0 0.0
    %2411 = vmatpush1.msra.mxu0 0.0
    %2412 = vmatprep.subr.mxu0 0.0
    %2413 = vmatpush1.msra.mxu0 0.0
    %2414 = vmatprep.subr.mxu0 0.0
    %2415 = vmatpush1.msra.mxu0 0.0
    %2416 = vmatprep.subr.mxu0 0.0
    %2417 = vmatpush1.msra.mxu0 %v2318
    %2418 = vmatprep.subr.mxu0 0.0
    %2419 = vmatpush1.msra.mxu0 %v2315
    %2420 = vmatprep.subr.mxu0 0.0
    %2421 = vmatpush1.msra.mxu0 %v2312
    %2422 = vmatprep.subr.mxu0 0.0
    %2423 = vmatpush1.msra.mxu0 %v2309
    %2424 = vmatprep.subr.mxu0 0.0
    %2425 = vmatpush2.msra.mxu0 0.0
    %2426 = vmatprep.subr.mxu0 0.0
    %2427 = vmatpush2.msra.mxu0 0.0
    %2428 = vmatprep.subr.mxu0 0.0
    %2429 = vmatpush2.msra.mxu0 0.0
    %2430 = vmatprep.subr.mxu0 0.0
    %2431 = vmatpush2.msra.mxu0 0.0
    %2432 = vmatprep.subr.mxu0 0.0
    %2433 = vmatpush2.msra.mxu0 0.0
    %2434 = vmatprep.subr.mxu0 0.0
    %2435 = vmatpush2.msra.mxu0 0.0
    %2436 = vmatprep.subr.mxu0 0.0
    %2437 = vmatpush2.msra.mxu0 0.0
    %2438 = vmatprep.subr.mxu0 0.0
    %2439 = vmatpush2.msra.mxu0 0.0
    %2440 = vmatprep.subr.mxu0 0.0
    %2441 = vmatpush2.msra.mxu0 0.0
    %2442 = vmatprep.subr.mxu0 0.0
    %2443 = vmatpush2.msra.mxu0 0.0
    %2444 = vmatprep.subr.mxu0 0.0
    %2445 = vmatpush2.msra.mxu0 0.0
    %2446 = vmatprep.subr.mxu0 0.0
    %2447 = vmatpush2.msra.mxu0 0.0
    %2448 = vmatprep.subr.mxu0 0.0
    %2449 = vmatpush2.msra.mxu0 0.0
    %2450 = vmatprep.subr.mxu0 0.0
    %2451 = vmatpush2.msra.mxu0 0.0
    %2452 = vmatprep.subr.mxu0 0.0
    %2453 = vmatpush2.msra.mxu0 0.0
    %2454 = vmatprep.subr.mxu0 0.0
    %2455 = vmatpush2.msra.mxu0 0.0
    %2456 = vmatprep.mubr.f32.mxu0 0.0
    %2457 = vmatmul.mubr.f32.gmra.mxu0 %v2319
    %v2458 = vpop.f32.mrf.mxu0
    %v2459 = vadd.f32 %v293, %v2458
    %v2460 = vpop.f32.mrf.mxu0
    %2461 = vdwg.mxu0
    %v2462 = vxor.u32 %v2459, 2147483648
    %v2463 = vmul.f32 %v2462, 1.442695
    %v2464 = vpow.pop %v2463
    %v2465 = vadd.f32 %v2464, 1.0
    %v2466 = vrcp.pop %v2465
    %v2467 = vmul.f32 1.0, %v2466
    %v2470 = vunpack.c.l.s4 1966171168
    %v2471 = vunpack.c.0.s8 %v2470
    %v2472 = vlaneseq
    %v2473 = vshrl.u32 %v2472, 7
    %v2474 = vsub.s32 %v2471, %v2473
    %v2475 = vrot.slane %v2390, %v2474
    %v2476 = vcombine.high %v2475, %v2475
    %v2478 = vunpack.c.l.s4 1966171168
    %v2479 = vunpack.c.0.s8 %v2478
    %v2480 = vlaneseq
    %v2481 = vshrl.u32 %v2480, 7
    %v2482 = vsub.s32 %v2479, %v2481
    %v2483 = vrot.slane %v2475, %v2482
    %v2485 = vunpack.c.l.s4 1966171168
    %v2486 = vunpack.c.0.s8 %v2485
    %v2487 = vlaneseq
    %v2488 = vshrl.u32 %v2487, 7
    %v2489 = vsub.s32 %v2486, %v2488
    %v2490 = vrot.slane %v2476, %v2489
    %v2491 = vlaneseq
    %v2492 = vshrl.u32 %v2491, 7
    %v2493 = vsub.s32 0, %v2492
    %v2494 = vrot.slane %v2483, %v2493
    %v2495 = vlaneseq
    %v2496 = vshrl.u32 %v2495, 7
    %v2497 = vsub.s32 0, %v2496
    %v2498 = vrot.slane %v2490, %v2497
    %v2501 = vadd.f32 %v263, %v2494
    %v2502 = vadd.f32 %v268, %v2494
    %v2503 = vadd.f32 %v273, %v2498
    %v2504 = vadd.f32 %v278, %v2498
    %v2505 = vtanh.pop %v2501
    %v2506 = vtanh.pop %v2502
    %v2507 = vtanh.pop %v2503
    %v2508 = vtanh.pop %v2504
    %v2509 = vmul.f32 %v2505, %v61
    %v2510 = vmul.f32 %v2506, %v61
    %v2511 = vmul.f32 %v2507, %v61
    %v2512 = vmul.f32 %v2508, %v61
    %v2513 = vsel %vm65, %v2509, 0.0
    %2514 = vadd.xlane.f32.xlu0 %v2513
    %v2515 = vpop.xlane.xlu0 %2514
    %v2516 = vsel %vm65, %v2510, 0.0
    %2517 = vadd.xlane.f32.xlu0 %v2516
    %v2518 = vpop.xlane.xlu0 %2517
    %v2519 = vsel %vm65, %v2511, 0.0
    %2520 = vadd.xlane.f32.xlu0 %v2519
    %v2521 = vpop.xlane.xlu0 %2520
    %v2522 = vsel %vm65, %v2512, 0.0
    %2523 = vadd.xlane.f32.xlu0 %v2522
    %v2524 = vpop.xlane.xlu0 %2523
    %v2529 = vlaneseq
    %v2530 = vshrl.u32 %v2529, 7
    %v2531 = vsub.s32 %v521, %v2530
    %v2532 = vrot.slane %v2515, %v2531
    %v2533 = vlaneseq
    %v2534 = vshrl.u32 %v2533, 7
    %v2535 = vsub.s32 %v526, %v2534
    %v2536 = vrot.slane %v2518, %v2535
    %v2537 = vsel %vm531, %v2536, %v2532
    %v2538 = vlaneseq
    %v2539 = vshrl.u32 %v2538, 7
    %v2540 = vsub.s32 %v521, %v2539
    %v2541 = vrot.slane %v2521, %v2540
    %v2542 = vlaneseq
    %v2543 = vshrl.u32 %v2542, 7
    %v2544 = vsub.s32 %v526, %v2543
    %v2545 = vrot.slane %v2524, %v2544
    %v2546 = vsel %vm531, %v2545, %v2541
    %v2547 = vsel %vm93, %v2546, %v2537
    %v2549 = vsel %vm544, %v2547, -inf
    %2550 = vmax.xlane.f32.xlu0 %v2549
    %v2551 = vpop.xlane.xlu0 %2550
    %v2553 = vlaneseq
    %v2554 = vshrl.u32 %v2553, 7
    %v2555 = vsub.s32 0, %v2554
    %v2556 = vrot.slane %v2551, %v2555
    %v2557 = vlaneseq
    %v2558 = vshrl.u32 %v2557, 7
    %v2559 = vsub.s32 1, %v2558
    %v2560 = vrot.slane %v2551, %v2559
    %v2563 = vsub.f32 %v2515, %v2556
    %v2564 = vsub.f32 %v2518, %v2556
    %v2565 = vsub.f32 %v2521, %v2560
    %v2566 = vsub.f32 %v2524, %v2560
    %v2567 = vmul.f32 %v2563, 1.442695
    %v2568 = vpow.pop %v2567
    %v2569 = vmul.f32 %v2564, 1.442695
    %v2570 = vpow.pop %v2569
    %v2571 = vmul.f32 %v2565, 1.442695
    %v2572 = vpow.pop %v2571
    %v2573 = vmul.f32 %v2566, 1.442695
    %v2574 = vpow.pop %v2573
    %2579 = vset.pattern.permute.xlu0 0
    %2580 = vperm.xlu0 %2579, %v2568
    %v2581 = vpop.permute.xlu0 %2580
    %2582 = vset.pattern.permute.xlu0 0
    %2583 = vperm.xlu0 %2582, %v2570
    %v2584 = vpop.permute.xlu0 %2583
    %2585 = vset.pattern.permute.xlu0 0
    %2586 = vperm.xlu0 %2585, %v2572
    %v2587 = vpop.permute.xlu0 %2586
    %2588 = vset.pattern.permute.xlu0 0
    %2589 = vperm.xlu0 %2588, %v2574
    %v2590 = vpop.permute.xlu0 %2589
    %v2591 = vlaneseq
    %v2592 = vshrl.u32 %v2591, 7
    %v2593 = vsub.s32 %v521, %v2592
    %v2594 = vrot.slane %v2581, %v2593
    %v2595 = vlaneseq
    %v2596 = vshrl.u32 %v2595, 7
    %v2597 = vsub.s32 %v526, %v2596
    %v2598 = vrot.slane %v2584, %v2597
    %v2599 = vsel %vm531, %v2598, %v2594
    %v2600 = vlaneseq
    %v2601 = vshrl.u32 %v2600, 7
    %v2602 = vsub.s32 %v521, %v2601
    %v2603 = vrot.slane %v2587, %v2602
    %v2604 = vlaneseq
    %v2605 = vshrl.u32 %v2604, 7
    %v2606 = vsub.s32 %v526, %v2605
    %v2607 = vrot.slane %v2590, %v2606
    %v2608 = vsel %vm531, %v2607, %v2603
    %v2609 = vsel %vm93, %v2608, %v2599
    %v2611 = vsel %vm544, %v2609, 0.0
    %2612 = vadd.xlane.f32.xlu0 %v2611
    %v2613 = vpop.xlane.xlu0 %2612
    %v2614 = vrcp.pop %v2613
    %v2616 = vlaneseq
    %v2617 = vshrl.u32 %v2616, 7
    %v2618 = vsub.s32 0, %v2617
    %v2619 = vrot.slane %v2614, %v2618
    %v2620 = vlaneseq
    %v2621 = vshrl.u32 %v2620, 7
    %v2622 = vsub.s32 1, %v2621
    %v2623 = vrot.slane %v2614, %v2622
    %v2626 = vmul.f32 %v2568, %v2619
    %v2627 = vmul.f32 %v2570, %v2619
    %v2628 = vmul.f32 %v2572, %v2623
    %v2629 = vmul.f32 %v2574, %v2623
    %2631 = vset.pattern.permute.xlu0 0
    %2632 = vperm.xlu0 %2631, %v2626
    %v2633 = vpop.permute.xlu0 %2632
    %2636 = vset.pattern.permute.xlu0 0
    %2637 = vperm.xlu0 %2636, %v2627
    %v2638 = vpop.permute.xlu0 %2637
    %2641 = vset.pattern.permute.xlu0 0
    %2642 = vperm.xlu0 %2641, %v2628
    %v2643 = vpop.permute.xlu0 %2642
    %2646 = vset.pattern.permute.xlu0 0
    %2647 = vperm.xlu0 %2646, %v2629
    %v2648 = vpop.permute.xlu0 %2647
    %v2650 = vmul.f32 %v56, %v2633
    %v2651 = vmul.f32 %v57, %v2638
    %v2652 = vmul.f32 %v58, %v2643
    %v2653 = vmul.f32 %v59, %v2648
    %v2654 = vsel %vm65, %v2650, 0.0
    %v2655 = vsel %vm65, %v2651, 0.0
    %v2656 = vadd.f32 %v2654, %v2655
    %v2657 = vrot.slane %v2656, 4
    %v2658 = vadd.f32 %v2656, %v2657
    %v2659 = vrot.slane %v2658, 2
    %v2660 = vadd.f32 %v2658, %v2659
    %v2661 = vrot.slane %v2660, 1
    %v2662 = vadd.f32 %v2660, %v2661
    %v2663 = vsel %vm65, %v2652, 0.0
    %v2664 = vsel %vm65, %v2653, 0.0
    %v2665 = vadd.f32 %v2663, %v2664
    %v2666 = vrot.slane %v2665, 4
    %v2667 = vadd.f32 %v2665, %v2666
    %v2668 = vrot.slane %v2667, 2
    %v2669 = vadd.f32 %v2667, %v2668
    %v2670 = vrot.slane %v2669, 1
    %v2671 = vadd.f32 %v2669, %v2670
    %v2674 = vsel %vm93, %v2671, %v2662
    %v2676 = vmul.f32 %v2467, %v2674
    %v2677 = vld [vmem:[#allocation9 + $0x60] sm:$0xff]
    %v2678 = vld [vmem:[#allocation9 + $0x78] sm:$0xff]
    %v2679 = vld [vmem:[#allocation9 + $0x90] sm:$0xff]
    %v2680 = vld [vmem:[#allocation9 + $0xa8] sm:$0xff]
    %s2681 = scalar_lea.vmem [#allocation7], 8
    %v2682 = vld [vmem:[%s2681] sm:$0x3]
    %v2683 = vadd.f32 %v2682, %v2388
    %v2685 = vsel %vm65, %v2676, 0
    %2687 = vmatprep.subr.mxu0 0.0
    %2688 = vmatpush1.msra.mxu0 0.0
    %2689 = vmatprep.subr.mxu0 0.0
    %2690 = vmatpush1.msra.mxu0 0.0
    %2691 = vmatprep.subr.mxu0 0.0
    %2692 = vmatpush1.msra.mxu0 0.0
    %2693 = vmatprep.subr.mxu0 0.0
    %2694 = vmatpush1.msra.mxu0 0.0
    %2695 = vmatprep.subr.mxu0 0.0
    %2696 = vmatpush1.msra.mxu0 0.0
    %2697 = vmatprep.subr.mxu0 0.0
    %2698 = vmatpush1.msra.mxu0 0.0
    %2699 = vmatprep.subr.mxu0 0.0
    %2700 = vmatpush1.msra.mxu0 0.0
    %2701 = vmatprep.subr.mxu0 0.0
    %2702 = vmatpush1.msra.mxu0 0.0
    %2703 = vmatprep.subr.mxu0 0.0
    %2704 = vmatpush1.msra.mxu0 0.0
    %2705 = vmatprep.subr.mxu0 0.0
    %2706 = vmatpush1.msra.mxu0 0.0
    %2707 = vmatprep.subr.mxu0 0.0
    %2708 = vmatpush1.msra.mxu0 0.0
    %2709 = vmatprep.subr.mxu0 0.0
    %2710 = vmatpush1.msra.mxu0 0.0
    %2711 = vmatprep.subr.mxu0 0.0
    %2712 = vmatpush1.msra.mxu0 %v2680
    %2713 = vmatprep.subr.mxu0 0.0
    %2714 = vmatpush1.msra.mxu0 %v2679
    %2715 = vmatprep.subr.mxu0 0.0
    %2716 = vmatpush1.msra.mxu0 %v2678
    %2717 = vmatprep.subr.mxu0 0.0
    %2718 = vmatpush1.msra.mxu0 %v2677
    %2719 = vmatprep.subr.mxu0 0.0
    %2720 = vmatpush2.msra.mxu0 0.0
    %2721 = vmatprep.subr.mxu0 0.0
    %2722 = vmatpush2.msra.mxu0 0.0
    %2723 = vmatprep.subr.mxu0 0.0
    %2724 = vmatpush2.msra.mxu0 0.0
    %2725 = vmatprep.subr.mxu0 0.0
    %2726 = vmatpush2.msra.mxu0 0.0
    %2727 = vmatprep.subr.mxu0 0.0
    %2728 = vmatpush2.msra.mxu0 0.0
    %2729 = vmatprep.subr.mxu0 0.0
    %2730 = vmatpush2.msra.mxu0 0.0
    %2731 = vmatprep.subr.mxu0 0.0
    %2732 = vmatpush2.msra.mxu0 0.0
    %2733 = vmatprep.subr.mxu0 0.0
    %2734 = vmatpush2.msra.mxu0 0.0
    %2735 = vmatprep.subr.mxu0 0.0
    %2736 = vmatpush2.msra.mxu0 0.0
    %2737 = vmatprep.subr.mxu0 0.0
    %2738 = vmatpush2.msra.mxu0 0.0
    %2739 = vmatprep.subr.mxu0 0.0
    %2740 = vmatpush2.msra.mxu0 0.0
    %2741 = vmatprep.subr.mxu0 0.0
    %2742 = vmatpush2.msra.mxu0 0.0
    %2743 = vmatprep.subr.mxu0 0.0
    %2744 = vmatpush2.msra.mxu0 0.0
    %2745 = vmatprep.subr.mxu0 0.0
    %2746 = vmatpush2.msra.mxu0 0.0
    %2747 = vmatprep.subr.mxu0 0.0
    %2748 = vmatpush2.msra.mxu0 0.0
    %2749 = vmatprep.subr.mxu0 0.0
    %2750 = vmatpush2.msra.mxu0 0.0
    %2751 = vmatprep.mubr.f32.mxu0 0.0
    %2752 = vmatmul.mubr.f32.gmra.mxu0 %v2685
    %v2753 = vpop.f32.mrf.mxu0
    %v2754 = vadd.f32 0.0, %v2753
    %v2755 = vpop.f32.mrf.mxu0
    %2756 = vdwg.mxu0
    %v2757 = vadd.f32 %v2683, %v2754
    %v2758 = vxor.u32 %v2757, 2147483648
    %v2759 = vmul.f32 %v2758, 1.442695
    %v2760 = vpow.pop %v2759
    %v2761 = vadd.f32 %v2760, 1.0
    %v2762 = vrcp.pop %v2761
    %v2763 = vmul.f32 1.0, %v2762
    %v2764 = vtanh.pop %v2757
    %v2765 = vmul.f32 %v2763, %v2274
    %2767 = vrot.lane.b32.xlu0 %v2764, 64
    %v2768 = vpop.permute.xlu0 %2767
    %v2770 = vmul.f32 %v2763, %v2768
    %2772 = vrot.lane.b32.xlu0 %v2770, 32
    %v2773 = vpop.permute.xlu0 %2772
    %v2775 = vadd.f32 %v2765, %v2773
    %v2776 = vtanh.pop %v2775
    %2778 = vrot.lane.b32.xlu0 %v2776, 64
    %v2779 = vpop.permute.xlu0 %2778
    %v2781 = vmul.f32 %v2763, %v2779
    %2783 = vrot.lane.b32.xlu0 %v2781, 32
    %v2784 = vpop.permute.xlu0 %2783
    %2786 = vst.msk [vmem:[#allocation2 + $0x8] sm:$0x3] %vm781, %v2784
    %v2787 = vlaneseq
    %v2788 = vshrl.u32 %v2787, 7
    %v2789 = vsub.s32 %v521, %v2788
    %v2790 = vrot.slane %v2633, %v2789
    %v2791 = vlaneseq
    %v2792 = vshrl.u32 %v2791, 7
    %v2793 = vsub.s32 %v526, %v2792
    %v2794 = vrot.slane %v2638, %v2793
    %v2795 = vsel %vm531, %v2794, %v2790
    %v2796 = vlaneseq
    %v2797 = vshrl.u32 %v2796, 7
    %v2798 = vsub.s32 %v521, %v2797
    %v2799 = vrot.slane %v2643, %v2798
    %v2800 = vlaneseq
    %v2801 = vshrl.u32 %v2800, 7
    %v2802 = vsub.s32 %v526, %v2801
    %v2803 = vrot.slane %v2648, %v2802
    %v2804 = vsel %vm531, %v2803, %v2799
    %v2805 = vsel %vm93, %v2804, %v2795
    %2807 = vst.msk [vmem:[#allocation3 + $0x8] sm:$0x3] %vm544, %v2805
    %v2808 = vld [vmem:[#allocation9] sm:$0xff]
    %v2809 = vld [vmem:[#allocation9 + $0x8] sm:$0xff]
    %v2810 = vld [vmem:[#allocation9 + $0x10] sm:$0xff]
    %v2811 = vld [vmem:[#allocation9 + $0x18] sm:$0xff]
    %v2812 = vld [vmem:[#allocation9 + $0x20] sm:$0xff]
    %v2813 = vld [vmem:[#allocation9 + $0x28] sm:$0xff]
    %v2814 = vld [vmem:[#allocation9 + $0x30] sm:$0xff]
    %v2815 = vld [vmem:[#allocation9 + $0x38] sm:$0xff]
    %v2816 = vld [vmem:[#allocation9 + $0x40] sm:$0xff]
    %v2817 = vld [vmem:[#allocation9 + $0x48] sm:$0xff]
    %v2818 = vld [vmem:[#allocation9 + $0x50] sm:$0xff]
    %v2819 = vld [vmem:[#allocation9 + $0x58] sm:$0xff]
    %v2820 = vsel %vm65, %v2784, 0
    %2822 = vmatprep.subr.mxu0 0.0
    %2823 = vmatpush1.msra.mxu0 0.0
    %2824 = vmatprep.subr.mxu0 0.0
    %2825 = vmatpush1.msra.mxu0 0.0
    %2826 = vmatprep.subr.mxu0 0.0
    %2827 = vmatpush1.msra.mxu0 0.0
    %2828 = vmatprep.subr.mxu0 0.0
    %2829 = vmatpush1.msra.mxu0 0.0
    %2830 = vmatprep.subr.mxu0 0.0
    %2831 = vmatpush1.msra.mxu0 0.0
    %2832 = vmatprep.subr.mxu0 0.0
    %2833 = vmatpush1.msra.mxu0 0.0
    %2834 = vmatprep.subr.mxu0 0.0
    %2835 = vmatpush1.msra.mxu0 0.0
    %2836 = vmatprep.subr.mxu0 0.0
    %2837 = vmatpush1.msra.mxu0 0.0
    %2838 = vmatprep.subr.mxu0 0.0
    %2839 = vmatpush1.msra.mxu0 0.0
    %2840 = vmatprep.subr.mxu0 0.0
    %2841 = vmatpush1.msra.mxu0 0.0
    %2842 = vmatprep.subr.mxu0 0.0
    %2843 = vmatpush1.msra.mxu0 0.0
    %2844 = vmatprep.subr.mxu0 0.0
    %2845 = vmatpush1.msra.mxu0 0.0
    %2846 = vmatprep.subr.mxu0 %v2818
    %2847 = vmatpush1.msra.mxu0 %v2817
    %2848 = vmatprep.subr.mxu0 %v2815
    %2849 = vmatpush1.msra.mxu0 %v2814
    %2850 = vmatprep.subr.mxu0 %v2812
    %2851 = vmatpush1.msra.mxu0 %v2811
    %2852 = vmatprep.subr.mxu0 %v2809
    %2853 = vmatpush1.msra.mxu0 %v2808
    %2854 = vmatprep.subr.mxu0 0.0
    %2855 = vmatpush2.msra.mxu0 0.0
    %2856 = vmatprep.subr.mxu0 0.0
    %2857 = vmatpush2.msra.mxu0 0.0
    %2858 = vmatprep.subr.mxu0 0.0
    %2859 = vmatpush2.msra.mxu0 0.0
    %2860 = vmatprep.subr.mxu0 0.0
    %2861 = vmatpush2.msra.mxu0 0.0
    %2862 = vmatprep.subr.mxu0 0.0
    %2863 = vmatpush2.msra.mxu0 0.0
    %2864 = vmatprep.subr.mxu0 0.0
    %2865 = vmatpush2.msra.mxu0 0.0
    %2866 = vmatprep.subr.mxu0 0.0
    %2867 = vmatpush2.msra.mxu0 0.0
    %2868 = vmatprep.subr.mxu0 0.0
    %2869 = vmatpush2.msra.mxu0 0.0
    %2870 = vmatprep.subr.mxu0 0.0
    %2871 = vmatpush2.msra.mxu0 0.0
    %2872 = vmatprep.subr.mxu0 0.0
    %2873 = vmatpush2.msra.mxu0 0.0
    %2874 = vmatprep.subr.mxu0 0.0
    %2875 = vmatpush2.msra.mxu0 0.0
    %2876 = vmatprep.subr.mxu0 0.0
    %2877 = vmatpush2.msra.mxu0 0.0
    %2878 = vmatprep.subr.mxu0 0.0
    %2879 = vmatpush2.msra.mxu0 0.0
    %2880 = vmatprep.subr.mxu0 0.0
    %2881 = vmatpush2.msra.mxu0 0.0
    %2882 = vmatprep.subr.mxu0 0.0
    %2883 = vmatpush2.msra.mxu0 0.0
    %2884 = vmatprep.subr.mxu0 0.0
    %2885 = vmatpush2.msra.mxu0 0.0
    %2886 = vmatprep.mubr.f32.mxu0 0.0
    %2887 = vmatmul.mubr.f32.gmra.mxu0 %v2820
    %v2888 = vpop.f32.mrf.mxu0
    %v2889 = vadd.f32 %v285, %v2888
    %v2890 = vpop.f32.mrf.mxu0
    %v2891 = vadd.f32 %v289, %v2890
    %2892 = vdwg.mxu0
    %2893 = vmatprep.subr.mxu0 0.0
    %2894 = vmatpush1.msra.mxu0 0.0
    %2895 = vmatprep.subr.mxu0 0.0
    %2896 = vmatpush1.msra.mxu0 0.0
    %2897 = vmatprep.subr.mxu0 0.0
    %2898 = vmatpush1.msra.mxu0 0.0
    %2899 = vmatprep.subr.mxu0 0.0
    %2900 = vmatpush1.msra.mxu0 0.0
    %2901 = vmatprep.subr.mxu0 0.0
    %2902 = vmatpush1.msra.mxu0 0.0
    %2903 = vmatprep.subr.mxu0 0.0
    %2904 = vmatpush1.msra.mxu0 0.0
    %2905 = vmatprep.subr.mxu0 0.0
    %2906 = vmatpush1.msra.mxu0 0.0
    %2907 = vmatprep.subr.mxu0 0.0
    %2908 = vmatpush1.msra.mxu0 0.0
    %2909 = vmatprep.subr.mxu0 0.0
    %2910 = vmatpush1.msra.mxu0 0.0
    %2911 = vmatprep.subr.mxu0 0.0
    %2912 = vmatpush1.msra.mxu0 0.0
    %2913 = vmatprep.subr.mxu0 0.0
    %2914 = vmatpush1.msra.mxu0 0.0
    %2915 = vmatprep.subr.mxu0 0.0
    %2916 = vmatpush1.msra.mxu0 0.0
    %2917 = vmatprep.subr.mxu0 0.0
    %2918 = vmatpush1.msra.mxu0 %v2819
    %2919 = vmatprep.subr.mxu0 0.0
    %2920 = vmatpush1.msra.mxu0 %v2816
    %2921 = vmatprep.subr.mxu0 0.0
    %2922 = vmatpush1.msra.mxu0 %v2813
    %2923 = vmatprep.subr.mxu0 0.0
    %2924 = vmatpush1.msra.mxu0 %v2810
    %2925 = vmatprep.subr.mxu0 0.0
    %2926 = vmatpush2.msra.mxu0 0.0
    %2927 = vmatprep.subr.mxu0 0.0
    %2928 = vmatpush2.msra.mxu0 0.0
    %2929 = vmatprep.subr.mxu0 0.0
    %2930 = vmatpush2.msra.mxu0 0.0
    %2931 = vmatprep.subr.mxu0 0.0
    %2932 = vmatpush2.msra.mxu0 0.0
    %2933 = vmatprep.subr.mxu0 0.0
    %2934 = vmatpush2.msra.mxu0 0.0
    %2935 = vmatprep.subr.mxu0 0.0
    %2936 = vmatpush2.msra.mxu0 0.0
    %2937 = vmatprep.subr.mxu0 0.0
    %2938 = vmatpush2.msra.mxu0 0.0
    %2939 = vmatprep.subr.mxu0 0.0
    %2940 = vmatpush2.msra.mxu0 0.0
    %2941 = vmatprep.subr.mxu0 0.0
    %2942 = vmatpush2.msra.mxu0 0.0
    %2943 = vmatprep.subr.mxu0 0.0
    %2944 = vmatpush2.msra.mxu0 0.0
    %2945 = vmatprep.subr.mxu0 0.0
    %2946 = vmatpush2.msra.mxu0 0.0
    %2947 = vmatprep.subr.mxu0 0.0
    %2948 = vmatpush2.msra.mxu0 0.0
    %2949 = vmatprep.subr.mxu0 0.0
    %2950 = vmatpush2.msra.mxu0 0.0
    %2951 = vmatprep.subr.mxu0 0.0
    %2952 = vmatpush2.msra.mxu0 0.0
    %2953 = vmatprep.subr.mxu0 0.0
    %2954 = vmatpush2.msra.mxu0 0.0
    %2955 = vmatprep.subr.mxu0 0.0
    %2956 = vmatpush2.msra.mxu0 0.0
    %2957 = vmatprep.mubr.f32.mxu0 0.0
    %2958 = vmatmul.mubr.f32.gmra.mxu0 %v2820
    %v2959 = vpop.f32.mrf.mxu0
    %v2960 = vadd.f32 %v293, %v2959
    %v2961 = vpop.f32.mrf.mxu0
    %2962 = vdwg.mxu0
    %v2963 = vxor.u32 %v2960, 2147483648
    %v2964 = vmul.f32 %v2963, 1.442695
    %v2965 = vpow.pop %v2964
    %v2966 = vadd.f32 %v2965, 1.0
    %v2967 = vrcp.pop %v2966
    %v2968 = vmul.f32 1.0, %v2967
    %v2971 = vunpack.c.l.s4 1966171168
    %v2972 = vunpack.c.0.s8 %v2971
    %v2973 = vlaneseq
    %v2974 = vshrl.u32 %v2973, 7
    %v2975 = vsub.s32 %v2972, %v2974
    %v2976 = vrot.slane %v2891, %v2975
    %v2977 = vcombine.high %v2976, %v2976
    %v2979 = vunpack.c.l.s4 1966171168
    %v2980 = vunpack.c.0.s8 %v2979
    %v2981 = vlaneseq
    %v2982 = vshrl.u32 %v2981, 7
    %v2983 = vsub.s32 %v2980, %v2982
    %v2984 = vrot.slane %v2976, %v2983
    %v2986 = vunpack.c.l.s4 1966171168
    %v2987 = vunpack.c.0.s8 %v2986
    %v2988 = vlaneseq
    %v2989 = vshrl.u32 %v2988, 7
    %v2990 = vsub.s32 %v2987, %v2989
    %v2991 = vrot.slane %v2977, %v2990
    %v2992 = vlaneseq
    %v2993 = vshrl.u32 %v2992, 7
    %v2994 = vsub.s32 0, %v2993
    %v2995 = vrot.slane %v2984, %v2994
    %v2996 = vlaneseq
    %v2997 = vshrl.u32 %v2996, 7
    %v2998 = vsub.s32 0, %v2997
    %v2999 = vrot.slane %v2991, %v2998
    %v3002 = vadd.f32 %v263, %v2995
    %v3003 = vadd.f32 %v268, %v2995
    %v3004 = vadd.f32 %v273, %v2999
    %v3005 = vadd.f32 %v278, %v2999
    %v3006 = vtanh.pop %v3002
    %v3007 = vtanh.pop %v3003
    %v3008 = vtanh.pop %v3004
    %v3009 = vtanh.pop %v3005
    %v3010 = vmul.f32 %v3006, %v61
    %v3011 = vmul.f32 %v3007, %v61
    %v3012 = vmul.f32 %v3008, %v61
    %v3013 = vmul.f32 %v3009, %v61
    %v3014 = vsel %vm65, %v3010, 0.0
    %3015 = vadd.xlane.f32.xlu0 %v3014
    %v3016 = vpop.xlane.xlu0 %3015
    %v3017 = vsel %vm65, %v3011, 0.0
    %3018 = vadd.xlane.f32.xlu0 %v3017
    %v3019 = vpop.xlane.xlu0 %3018
    %v3020 = vsel %vm65, %v3012, 0.0
    %3021 = vadd.xlane.f32.xlu0 %v3020
    %v3022 = vpop.xlane.xlu0 %3021
    %v3023 = vsel %vm65, %v3013, 0.0
    %3024 = vadd.xlane.f32.xlu0 %v3023
    %v3025 = vpop.xlane.xlu0 %3024
    %v3030 = vlaneseq
    %v3031 = vshrl.u32 %v3030, 7
    %v3032 = vsub.s32 %v521, %v3031
    %v3033 = vrot.slane %v3016, %v3032
    %v3034 = vlaneseq
    %v3035 = vshrl.u32 %v3034, 7
    %v3036 = vsub.s32 %v526, %v3035
    %v3037 = vrot.slane %v3019, %v3036
    %v3038 = vsel %vm531, %v3037, %v3033
    %v3039 = vlaneseq
    %v3040 = vshrl.u32 %v3039, 7
    %v3041 = vsub.s32 %v521, %v3040
    %v3042 = vrot.slane %v3022, %v3041
    %v3043 = vlaneseq
    %v3044 = vshrl.u32 %v3043, 7
    %v3045 = vsub.s32 %v526, %v3044
    %v3046 = vrot.slane %v3025, %v3045
    %v3047 = vsel %vm531, %v3046, %v3042
    %v3048 = vsel %vm93, %v3047, %v3038
    %v3050 = vsel %vm544, %v3048, -inf
    %3051 = vmax.xlane.f32.xlu0 %v3050
    %v3052 = vpop.xlane.xlu0 %3051
    %v3054 = vlaneseq
    %v3055 = vshrl.u32 %v3054, 7
    %v3056 = vsub.s32 0, %v3055
    %v3057 = vrot.slane %v3052, %v3056
    %v3058 = vlaneseq
    %v3059 = vshrl.u32 %v3058, 7
    %v3060 = vsub.s32 1, %v3059
    %v3061 = vrot.slane %v3052, %v3060
    %v3064 = vsub.f32 %v3016, %v3057
    %v3065 = vsub.f32 %v3019, %v3057
    %v3066 = vsub.f32 %v3022, %v3061
    %v3067 = vsub.f32 %v3025, %v3061
    %v3068 = vmul.f32 %v3064, 1.442695
    %v3069 = vpow.pop %v3068
    %v3070 = vmul.f32 %v3065, 1.442695
    %v3071 = vpow.pop %v3070
    %v3072 = vmul.f32 %v3066, 1.442695
    %v3073 = vpow.pop %v3072
    %v3074 = vmul.f32 %v3067, 1.442695
    %v3075 = vpow.pop %v3074
    %3080 = vset.pattern.permute.xlu0 0
    %3081 = vperm.xlu0 %3080, %v3069
    %v3082 = vpop.permute.xlu0 %3081
    %3083 = vset.pattern.permute.xlu0 0
    %3084 = vperm.xlu0 %3083, %v3071
    %v3085 = vpop.permute.xlu0 %3084
    %3086 = vset.pattern.permute.xlu0 0
    %3087 = vperm.xlu0 %3086, %v3073
    %v3088 = vpop.permute.xlu0 %3087
    %3089 = vset.pattern.permute.xlu0 0
    %3090 = vperm.xlu0 %3089, %v3075
    %v3091 = vpop.permute.xlu0 %3090
    %v3092 = vlaneseq
    %v3093 = vshrl.u32 %v3092, 7
    %v3094 = vsub.s32 %v521, %v3093
    %v3095 = vrot.slane %v3082, %v3094
    %v3096 = vlaneseq
    %v3097 = vshrl.u32 %v3096, 7
    %v3098 = vsub.s32 %v526, %v3097
    %v3099 = vrot.slane %v3085, %v3098
    %v3100 = vsel %vm531, %v3099, %v3095
    %v3101 = vlaneseq
    %v3102 = vshrl.u32 %v3101, 7
    %v3103 = vsub.s32 %v521, %v3102
    %v3104 = vrot.slane %v3088, %v3103
    %v3105 = vlaneseq
    %v3106 = vshrl.u32 %v3105, 7
    %v3107 = vsub.s32 %v526, %v3106
    %v3108 = vrot.slane %v3091, %v3107
    %v3109 = vsel %vm531, %v3108, %v3104
    %v3110 = vsel %vm93, %v3109, %v3100
    %v3112 = vsel %vm544, %v3110, 0.0
    %3113 = vadd.xlane.f32.xlu0 %v3112
    %v3114 = vpop.xlane.xlu0 %3113
    %v3115 = vrcp.pop %v3114
    %v3117 = vlaneseq
    %v3118 = vshrl.u32 %v3117, 7
    %v3119 = vsub.s32 0, %v3118
    %v3120 = vrot.slane %v3115, %v3119
    %v3121 = vlaneseq
    %v3122 = vshrl.u32 %v3121, 7
    %v3123 = vsub.s32 1, %v3122
    %v3124 = vrot.slane %v3115, %v3123
    %v3127 = vmul.f32 %v3069, %v3120
    %v3128 = vmul.f32 %v3071, %v3120
    %v3129 = vmul.f32 %v3073, %v3124
    %v3130 = vmul.f32 %v3075, %v3124
    %3132 = vset.pattern.permute.xlu0 0
    %3133 = vperm.xlu0 %3132, %v3127
    %v3134 = vpop.permute.xlu0 %3133
    %3137 = vset.pattern.permute.xlu0 0
    %3138 = vperm.xlu0 %3137, %v3128
    %v3139 = vpop.permute.xlu0 %3138
    %3142 = vset.pattern.permute.xlu0 0
    %3143 = vperm.xlu0 %3142, %v3129
    %v3144 = vpop.permute.xlu0 %3143
    %3147 = vset.pattern.permute.xlu0 0
    %3148 = vperm.xlu0 %3147, %v3130
    %v3149 = vpop.permute.xlu0 %3148
    %v3151 = vmul.f32 %v56, %v3134
    %v3152 = vmul.f32 %v57, %v3139
    %v3153 = vmul.f32 %v58, %v3144
    %v3154 = vmul.f32 %v59, %v3149
    %v3155 = vsel %vm65, %v3151, 0.0
    %v3156 = vsel %vm65, %v3152, 0.0
    %v3157 = vadd.f32 %v3155, %v3156
    %v3158 = vrot.slane %v3157, 4
    %v3159 = vadd.f32 %v3157, %v3158
    %v3160 = vrot.slane %v3159, 2
    %v3161 = vadd.f32 %v3159, %v3160
    %v3162 = vrot.slane %v3161, 1
    %v3163 = vadd.f32 %v3161, %v3162
    %v3164 = vsel %vm65, %v3153, 0.0
    %v3165 = vsel %vm65, %v3154, 0.0
    %v3166 = vadd.f32 %v3164, %v3165
    %v3167 = vrot.slane %v3166, 4
    %v3168 = vadd.f32 %v3166, %v3167
    %v3169 = vrot.slane %v3168, 2
    %v3170 = vadd.f32 %v3168, %v3169
    %v3171 = vrot.slane %v3170, 1
    %v3172 = vadd.f32 %v3170, %v3171
    %v3175 = vsel %vm93, %v3172, %v3163
    %v3177 = vmul.f32 %v2968, %v3175
    %v3178 = vld [vmem:[#allocation9 + $0x60] sm:$0xff]
    %v3179 = vld [vmem:[#allocation9 + $0x78] sm:$0xff]
    %v3180 = vld [vmem:[#allocation9 + $0x90] sm:$0xff]
    %v3181 = vld [vmem:[#allocation9 + $0xa8] sm:$0xff]
    %s3182 = scalar_lea.vmem [#allocation7], 10
    %v3183 = vld [vmem:[%s3182] sm:$0x3]
    %v3184 = vadd.f32 %v3183, %v2889
    %v3186 = vsel %vm65, %v3177, 0
    %3188 = vmatprep.subr.mxu0 0.0
    %3189 = vmatpush1.msra.mxu0 0.0
    %3190 = vmatprep.subr.mxu0 0.0
    %3191 = vmatpush1.msra.mxu0 0.0
    %3192 = vmatprep.subr.mxu0 0.0
    %3193 = vmatpush1.msra.mxu0 0.0
    %3194 = vmatprep.subr.mxu0 0.0
    %3195 = vmatpush1.msra.mxu0 0.0
    %3196 = vmatprep.subr.mxu0 0.0
    %3197 = vmatpush1.msra.mxu0 0.0
    %3198 = vmatprep.subr.mxu0 0.0
    %3199 = vmatpush1.msra.mxu0 0.0
    %3200 = vmatprep.subr.mxu0 0.0
    %3201 = vmatpush1.msra.mxu0 0.0
    %3202 = vmatprep.subr.mxu0 0.0
    %3203 = vmatpush1.msra.mxu0 0.0
    %3204 = vmatprep.subr.mxu0 0.0
    %3205 = vmatpush1.msra.mxu0 0.0
    %3206 = vmatprep.subr.mxu0 0.0
    %3207 = vmatpush1.msra.mxu0 0.0
    %3208 = vmatprep.subr.mxu0 0.0
    %3209 = vmatpush1.msra.mxu0 0.0
    %3210 = vmatprep.subr.mxu0 0.0
    %3211 = vmatpush1.msra.mxu0 0.0
    %3212 = vmatprep.subr.mxu0 0.0
    %3213 = vmatpush1.msra.mxu0 %v3181
    %3214 = vmatprep.subr.mxu0 0.0
    %3215 = vmatpush1.msra.mxu0 %v3180
    %3216 = vmatprep.subr.mxu0 0.0
    %3217 = vmatpush1.msra.mxu0 %v3179
    %3218 = vmatprep.subr.mxu0 0.0
    %3219 = vmatpush1.msra.mxu0 %v3178
    %3220 = vmatprep.subr.mxu0 0.0
    %3221 = vmatpush2.msra.mxu0 0.0
    %3222 = vmatprep.subr.mxu0 0.0
    %3223 = vmatpush2.msra.mxu0 0.0
    %3224 = vmatprep.subr.mxu0 0.0
    %3225 = vmatpush2.msra.mxu0 0.0
    %3226 = vmatprep.subr.mxu0 0.0
    %3227 = vmatpush2.msra.mxu0 0.0
    %3228 = vmatprep.subr.mxu0 0.0
    %3229 = vmatpush2.msra.mxu0 0.0
    %3230 = vmatprep.subr.mxu0 0.0
    %3231 = vmatpush2.msra.mxu0 0.0
    %3232 = vmatprep.subr.mxu0 0.0
    %3233 = vmatpush2.msra.mxu0 0.0
    %3234 = vmatprep.subr.mxu0 0.0
    %3235 = vmatpush2.msra.mxu0 0.0
    %3236 = vmatprep.subr.mxu0 0.0
    %3237 = vmatpush2.msra.mxu0 0.0
    %3238 = vmatprep.subr.mxu0 0.0
    %3239 = vmatpush2.msra.mxu0 0.0
    %3240 = vmatprep.subr.mxu0 0.0
    %3241 = vmatpush2.msra.mxu0 0.0
    %3242 = vmatprep.subr.mxu0 0.0
    %3243 = vmatpush2.msra.mxu0 0.0
    %3244 = vmatprep.subr.mxu0 0.0
    %3245 = vmatpush2.msra.mxu0 0.0
    %3246 = vmatprep.subr.mxu0 0.0
    %3247 = vmatpush2.msra.mxu0 0.0
    %3248 = vmatprep.subr.mxu0 0.0
    %3249 = vmatpush2.msra.mxu0 0.0
    %3250 = vmatprep.subr.mxu0 0.0
    %3251 = vmatpush2.msra.mxu0 0.0
    %3252 = vmatprep.mubr.f32.mxu0 0.0
    %3253 = vmatmul.mubr.f32.gmra.mxu0 %v3186
    %v3254 = vpop.f32.mrf.mxu0
    %v3255 = vadd.f32 0.0, %v3254
    %v3256 = vpop.f32.mrf.mxu0
    %3257 = vdwg.mxu0
    %v3258 = vadd.f32 %v3184, %v3255
    %v3259 = vxor.u32 %v3258, 2147483648
    %v3260 = vmul.f32 %v3259, 1.442695
    %v3261 = vpow.pop %v3260
    %v3262 = vadd.f32 %v3261, 1.0
    %v3263 = vrcp.pop %v3262
    %v3264 = vmul.f32 1.0, %v3263
    %v3265 = vtanh.pop %v3258
    %v3266 = vmul.f32 %v3264, %v2775
    %3268 = vrot.lane.b32.xlu0 %v3265, 64
    %v3269 = vpop.permute.xlu0 %3268
    %v3271 = vmul.f32 %v3264, %v3269
    %3273 = vrot.lane.b32.xlu0 %v3271, 32
    %v3274 = vpop.permute.xlu0 %3273
    %v3276 = vadd.f32 %v3266, %v3274
    %v3277 = vtanh.pop %v3276
    %3279 = vrot.lane.b32.xlu0 %v3277, 64
    %v3280 = vpop.permute.xlu0 %3279
    %v3282 = vmul.f32 %v3264, %v3280
    %3284 = vrot.lane.b32.xlu0 %v3282, 32
    %v3285 = vpop.permute.xlu0 %3284
    %3287 = vst.msk [vmem:[#allocation2 + $0xa] sm:$0x3] %vm781, %v3285
    %v3288 = vlaneseq
    %v3289 = vshrl.u32 %v3288, 7
    %v3290 = vsub.s32 %v521, %v3289
    %v3291 = vrot.slane %v3134, %v3290
    %v3292 = vlaneseq
    %v3293 = vshrl.u32 %v3292, 7
    %v3294 = vsub.s32 %v526, %v3293
    %v3295 = vrot.slane %v3139, %v3294
    %v3296 = vsel %vm531, %v3295, %v3291
    %v3297 = vlaneseq
    %v3298 = vshrl.u32 %v3297, 7
    %v3299 = vsub.s32 %v521, %v3298
    %v3300 = vrot.slane %v3144, %v3299
    %v3301 = vlaneseq
    %v3302 = vshrl.u32 %v3301, 7
    %v3303 = vsub.s32 %v526, %v3302
    %v3304 = vrot.slane %v3149, %v3303
    %v3305 = vsel %vm531, %v3304, %v3300
    %v3306 = vsel %vm93, %v3305, %v3296
    %3308 = vst.msk [vmem:[#allocation3 + $0xa] sm:$0x3] %vm544, %v3306
    %v3309 = vld [vmem:[#allocation9] sm:$0xff]
    %v3310 = vld [vmem:[#allocation9 + $0x8] sm:$0xff]
    %v3311 = vld [vmem:[#allocation9 + $0x10] sm:$0xff]
    %v3312 = vld [vmem:[#allocation9 + $0x18] sm:$0xff]
    %v3313 = vld [vmem:[#allocation9 + $0x20] sm:$0xff]
    %v3314 = vld [vmem:[#allocation9 + $0x28] sm:$0xff]
    %v3315 = vld [vmem:[#allocation9 + $0x30] sm:$0xff]
    %v3316 = vld [vmem:[#allocation9 + $0x38] sm:$0xff]
    %v3317 = vld [vmem:[#allocation9 + $0x40] sm:$0xff]
    %v3318 = vld [vmem:[#allocation9 + $0x48] sm:$0xff]
    %v3319 = vld [vmem:[#allocation9 + $0x50] sm:$0xff]
    %v3320 = vld [vmem:[#allocation9 + $0x58] sm:$0xff]
    %v3321 = vsel %vm65, %v3285, 0
    %3323 = vmatprep.subr.mxu0 0.0
    %3324 = vmatpush1.msra.mxu0 0.0
    %3325 = vmatprep.subr.mxu0 0.0
    %3326 = vmatpush1.msra.mxu0 0.0
    %3327 = vmatprep.subr.mxu0 0.0
    %3328 = vmatpush1.msra.mxu0 0.0
    %3329 = vmatprep.subr.mxu0 0.0
    %3330 = vmatpush1.msra.mxu0 0.0
    %3331 = vmatprep.subr.mxu0 0.0
    %3332 = vmatpush1.msra.mxu0 0.0
    %3333 = vmatprep.subr.mxu0 0.0
    %3334 = vmatpush1.msra.mxu0 0.0
    %3335 = vmatprep.subr.mxu0 0.0
    %3336 = vmatpush1.msra.mxu0 0.0
    %3337 = vmatprep.subr.mxu0 0.0
    %3338 = vmatpush1.msra.mxu0 0.0
    %3339 = vmatprep.subr.mxu0 0.0
    %3340 = vmatpush1.msra.mxu0 0.0
    %3341 = vmatprep.subr.mxu0 0.0
    %3342 = vmatpush1.msra.mxu0 0.0
    %3343 = vmatprep.subr.mxu0 0.0
    %3344 = vmatpush1.msra.mxu0 0.0
    %3345 = vmatprep.subr.mxu0 0.0
    %3346 = vmatpush1.msra.mxu0 0.0
    %3347 = vmatprep.subr.mxu0 %v3319
    %3348 = vmatpush1.msra.mxu0 %v3318
    %3349 = vmatprep.subr.mxu0 %v3316
    %3350 = vmatpush1.msra.mxu0 %v3315
    %3351 = vmatprep.subr.mxu0 %v3313
    %3352 = vmatpush1.msra.mxu0 %v3312
    %3353 = vmatprep.subr.mxu0 %v3310
    %3354 = vmatpush1.msra.mxu0 %v3309
    %3355 = vmatprep.subr.mxu0 0.0
    %3356 = vmatpush2.msra.mxu0 0.0
    %3357 = vmatprep.subr.mxu0 0.0
    %3358 = vmatpush2.msra.mxu0 0.0
    %3359 = vmatprep.subr.mxu0 0.0
    %3360 = vmatpush2.msra.mxu0 0.0
    %3361 = vmatprep.subr.mxu0 0.0
    %3362 = vmatpush2.msra.mxu0 0.0
    %3363 = vmatprep.subr.mxu0 0.0
    %3364 = vmatpush2.msra.mxu0 0.0
    %3365 = vmatprep.subr.mxu0 0.0
    %3366 = vmatpush2.msra.mxu0 0.0
    %3367 = vmatprep.subr.mxu0 0.0
    %3368 = vmatpush2.msra.mxu0 0.0
    %3369 = vmatprep.subr.mxu0 0.0
    %3370 = vmatpush2.msra.mxu0 0.0
    %3371 = vmatprep.subr.mxu0 0.0
    %3372 = vmatpush2.msra.mxu0 0.0
    %3373 = vmatprep.subr.mxu0 0.0
    %3374 = vmatpush2.msra.mxu0 0.0
    %3375 = vmatprep.subr.mxu0 0.0
    %3376 = vmatpush2.msra.mxu0 0.0
    %3377 = vmatprep.subr.mxu0 0.0
    %3378 = vmatpush2.msra.mxu0 0.0
    %3379 = vmatprep.subr.mxu0 0.0
    %3380 = vmatpush2.msra.mxu0 0.0
    %3381 = vmatprep.subr.mxu0 0.0
    %3382 = vmatpush2.msra.mxu0 0.0
    %3383 = vmatprep.subr.mxu0 0.0
    %3384 = vmatpush2.msra.mxu0 0.0
    %3385 = vmatprep.subr.mxu0 0.0
    %3386 = vmatpush2.msra.mxu0 0.0
    %3387 = vmatprep.mubr.f32.mxu0 0.0
    %3388 = vmatmul.mubr.f32.gmra.mxu0 %v3321
    %v3389 = vpop.f32.mrf.mxu0
    %v3390 = vadd.f32 %v285, %v3389
    %v3391 = vpop.f32.mrf.mxu0
    %v3392 = vadd.f32 %v289, %v3391
    %3393 = vdwg.mxu0
    %3394 = vmatprep.subr.mxu0 0.0
    %3395 = vmatpush1.msra.mxu0 0.0
    %3396 = vmatprep.subr.mxu0 0.0
    %3397 = vmatpush1.msra.mxu0 0.0
    %3398 = vmatprep.subr.mxu0 0.0
    %3399 = vmatpush1.msra.mxu0 0.0
    %3400 = vmatprep.subr.mxu0 0.0
    %3401 = vmatpush1.msra.mxu0 0.0
    %3402 = vmatprep.subr.mxu0 0.0
    %3403 = vmatpush1.msra.mxu0 0.0
    %3404 = vmatprep.subr.mxu0 0.0
    %3405 = vmatpush1.msra.mxu0 0.0
    %3406 = vmatprep.subr.mxu0 0.0
    %3407 = vmatpush1.msra.mxu0 0.0
    %3408 = vmatprep.subr.mxu0 0.0
    %3409 = vmatpush1.msra.mxu0 0.0
    %3410 = vmatprep.subr.mxu0 0.0
    %3411 = vmatpush1.msra.mxu0 0.0
    %3412 = vmatprep.subr.mxu0 0.0
    %3413 = vmatpush1.msra.mxu0 0.0
    %3414 = vmatprep.subr.mxu0 0.0
    %3415 = vmatpush1.msra.mxu0 0.0
    %3416 = vmatprep.subr.mxu0 0.0
    %3417 = vmatpush1.msra.mxu0 0.0
    %3418 = vmatprep.subr.mxu0 0.0
    %3419 = vmatpush1.msra.mxu0 %v3320
    %3420 = vmatprep.subr.mxu0 0.0
    %3421 = vmatpush1.msra.mxu0 %v3317
    %3422 = vmatprep.subr.mxu0 0.0
    %3423 = vmatpush1.msra.mxu0 %v3314
    %3424 = vmatprep.subr.mxu0 0.0
    %3425 = vmatpush1.msra.mxu0 %v3311
    %3426 = vmatprep.subr.mxu0 0.0
    %3427 = vmatpush2.msra.mxu0 0.0
    %3428 = vmatprep.subr.mxu0 0.0
    %3429 = vmatpush2.msra.mxu0 0.0
    %3430 = vmatprep.subr.mxu0 0.0
    %3431 = vmatpush2.msra.mxu0 0.0
    %3432 = vmatprep.subr.mxu0 0.0
    %3433 = vmatpush2.msra.mxu0 0.0
    %3434 = vmatprep.subr.mxu0 0.0
    %3435 = vmatpush2.msra.mxu0 0.0
    %3436 = vmatprep.subr.mxu0 0.0
    %3437 = vmatpush2.msra.mxu0 0.0
    %3438 = vmatprep.subr.mxu0 0.0
    %3439 = vmatpush2.msra.mxu0 0.0
    %3440 = vmatprep.subr.mxu0 0.0
    %3441 = vmatpush2.msra.mxu0 0.0
    %3442 = vmatprep.subr.mxu0 0.0
    %3443 = vmatpush2.msra.mxu0 0.0
    %3444 = vmatprep.subr.mxu0 0.0
    %3445 = vmatpush2.msra.mxu0 0.0
    %3446 = vmatprep.subr.mxu0 0.0
    %3447 = vmatpush2.msra.mxu0 0.0
    %3448 = vmatprep.subr.mxu0 0.0
    %3449 = vmatpush2.msra.mxu0 0.0
    %3450 = vmatprep.subr.mxu0 0.0
    %3451 = vmatpush2.msra.mxu0 0.0
    %3452 = vmatprep.subr.mxu0 0.0
    %3453 = vmatpush2.msra.mxu0 0.0
    %3454 = vmatprep.subr.mxu0 0.0
    %3455 = vmatpush2.msra.mxu0 0.0
    %3456 = vmatprep.subr.mxu0 0.0
    %3457 = vmatpush2.msra.mxu0 0.0
    %3458 = vmatprep.mubr.f32.mxu0 0.0
    %3459 = vmatmul.mubr.f32.gmra.mxu0 %v3321
    %v3460 = vpop.f32.mrf.mxu0
    %v3461 = vadd.f32 %v293, %v3460
    %v3462 = vpop.f32.mrf.mxu0
    %3463 = vdwg.mxu0
    %v3464 = vxor.u32 %v3461, 2147483648
    %v3465 = vmul.f32 %v3464, 1.442695
    %v3466 = vpow.pop %v3465
    %v3467 = vadd.f32 %v3466, 1.0
    %v3468 = vrcp.pop %v3467
    %v3469 = vmul.f32 1.0, %v3468
    %v3472 = vunpack.c.l.s4 1966171168
    %v3473 = vunpack.c.0.s8 %v3472
    %v3474 = vlaneseq
    %v3475 = vshrl.u32 %v3474, 7
    %v3476 = vsub.s32 %v3473, %v3475
    %v3477 = vrot.slane %v3392, %v3476
    %v3478 = vcombine.high %v3477, %v3477
    %v3480 = vunpack.c.l.s4 1966171168
    %v3481 = vunpack.c.0.s8 %v3480
    %v3482 = vlaneseq
    %v3483 = vshrl.u32 %v3482, 7
    %v3484 = vsub.s32 %v3481, %v3483
    %v3485 = vrot.slane %v3477, %v3484
    %v3487 = vunpack.c.l.s4 1966171168
    %v3488 = vunpack.c.0.s8 %v3487
    %v3489 = vlaneseq
    %v3490 = vshrl.u32 %v3489, 7
    %v3491 = vsub.s32 %v3488, %v3490
    %v3492 = vrot.slane %v3478, %v3491
    %v3493 = vlaneseq
    %v3494 = vshrl.u32 %v3493, 7
    %v3495 = vsub.s32 0, %v3494
    %v3496 = vrot.slane %v3485, %v3495
    %v3497 = vlaneseq
    %v3498 = vshrl.u32 %v3497, 7
    %v3499 = vsub.s32 0, %v3498
    %v3500 = vrot.slane %v3492, %v3499
    %v3503 = vadd.f32 %v263, %v3496
    %v3504 = vadd.f32 %v268, %v3496
    %v3505 = vadd.f32 %v273, %v3500
    %v3506 = vadd.f32 %v278, %v3500
    %v3507 = vtanh.pop %v3503
    %v3508 = vtanh.pop %v3504
    %v3509 = vtanh.pop %v3505
    %v3510 = vtanh.pop %v3506
    %v3511 = vmul.f32 %v3507, %v61
    %v3512 = vmul.f32 %v3508, %v61
    %v3513 = vmul.f32 %v3509, %v61
    %v3514 = vmul.f32 %v3510, %v61
    %v3515 = vsel %vm65, %v3511, 0.0
    %3516 = vadd.xlane.f32.xlu0 %v3515
    %v3517 = vpop.xlane.xlu0 %3516
    %v3518 = vsel %vm65, %v3512, 0.0
    %3519 = vadd.xlane.f32.xlu0 %v3518
    %v3520 = vpop.xlane.xlu0 %3519
    %v3521 = vsel %vm65, %v3513, 0.0
    %3522 = vadd.xlane.f32.xlu0 %v3521
    %v3523 = vpop.xlane.xlu0 %3522
    %v3524 = vsel %vm65, %v3514, 0.0
    %3525 = vadd.xlane.f32.xlu0 %v3524
    %v3526 = vpop.xlane.xlu0 %3525
    %v3531 = vlaneseq
    %v3532 = vshrl.u32 %v3531, 7
    %v3533 = vsub.s32 %v521, %v3532
    %v3534 = vrot.slane %v3517, %v3533
    %v3535 = vlaneseq
    %v3536 = vshrl.u32 %v3535, 7
    %v3537 = vsub.s32 %v526, %v3536
    %v3538 = vrot.slane %v3520, %v3537
    %v3539 = vsel %vm531, %v3538, %v3534
    %v3540 = vlaneseq
    %v3541 = vshrl.u32 %v3540, 7
    %v3542 = vsub.s32 %v521, %v3541
    %v3543 = vrot.slane %v3523, %v3542
    %v3544 = vlaneseq
    %v3545 = vshrl.u32 %v3544, 7
    %v3546 = vsub.s32 %v526, %v3545
    %v3547 = vrot.slane %v3526, %v3546
    %v3548 = vsel %vm531, %v3547, %v3543
    %v3549 = vsel %vm93, %v3548, %v3539
    %v3551 = vsel %vm544, %v3549, -inf
    %3552 = vmax.xlane.f32.xlu0 %v3551
    %v3553 = vpop.xlane.xlu0 %3552
    %v3555 = vlaneseq
    %v3556 = vshrl.u32 %v3555, 7
    %v3557 = vsub.s32 0, %v3556
    %v3558 = vrot.slane %v3553, %v3557
    %v3559 = vlaneseq
    %v3560 = vshrl.u32 %v3559, 7
    %v3561 = vsub.s32 1, %v3560
    %v3562 = vrot.slane %v3553, %v3561
    %v3565 = vsub.f32 %v3517, %v3558
    %v3566 = vsub.f32 %v3520, %v3558
    %v3567 = vsub.f32 %v3523, %v3562
    %v3568 = vsub.f32 %v3526, %v3562
    %v3569 = vmul.f32 %v3565, 1.442695
    %v3570 = vpow.pop %v3569
    %v3571 = vmul.f32 %v3566, 1.442695
    %v3572 = vpow.pop %v3571
    %v3573 = vmul.f32 %v3567, 1.442695
    %v3574 = vpow.pop %v3573
    %v3575 = vmul.f32 %v3568, 1.442695
    %v3576 = vpow.pop %v3575
    %3581 = vset.pattern.permute.xlu0 0
    %3582 = vperm.xlu0 %3581, %v3570
    %v3583 = vpop.permute.xlu0 %3582
    %3584 = vset.pattern.permute.xlu0 0
    %3585 = vperm.xlu0 %3584, %v3572
    %v3586 = vpop.permute.xlu0 %3585
    %3587 = vset.pattern.permute.xlu0 0
    %3588 = vperm.xlu0 %3587, %v3574
    %v3589 = vpop.permute.xlu0 %3588
    %3590 = vset.pattern.permute.xlu0 0
    %3591 = vperm.xlu0 %3590, %v3576
    %v3592 = vpop.permute.xlu0 %3591
    %v3593 = vlaneseq
    %v3594 = vshrl.u32 %v3593, 7
    %v3595 = vsub.s32 %v521, %v3594
    %v3596 = vrot.slane %v3583, %v3595
    %v3597 = vlaneseq
    %v3598 = vshrl.u32 %v3597, 7
    %v3599 = vsub.s32 %v526, %v3598
    %v3600 = vrot.slane %v3586, %v3599
    %v3601 = vsel %vm531, %v3600, %v3596
    %v3602 = vlaneseq
    %v3603 = vshrl.u32 %v3602, 7
    %v3604 = vsub.s32 %v521, %v3603
    %v3605 = vrot.slane %v3589, %v3604
    %v3606 = vlaneseq
    %v3607 = vshrl.u32 %v3606, 7
    %v3608 = vsub.s32 %v526, %v3607
    %v3609 = vrot.slane %v3592, %v3608
    %v3610 = vsel %vm531, %v3609, %v3605
    %v3611 = vsel %vm93, %v3610, %v3601
    %v3613 = vsel %vm544, %v3611, 0.0
    %3614 = vadd.xlane.f32.xlu0 %v3613
    %v3615 = vpop.xlane.xlu0 %3614
    %v3616 = vrcp.pop %v3615
    %v3618 = vlaneseq
    %v3619 = vshrl.u32 %v3618, 7
    %v3620 = vsub.s32 0, %v3619
    %v3621 = vrot.slane %v3616, %v3620
    %v3622 = vlaneseq
    %v3623 = vshrl.u32 %v3622, 7
    %v3624 = vsub.s32 1, %v3623
    %v3625 = vrot.slane %v3616, %v3624
    %v3628 = vmul.f32 %v3570, %v3621
    %v3629 = vmul.f32 %v3572, %v3621
    %v3630 = vmul.f32 %v3574, %v3625
    %v3631 = vmul.f32 %v3576, %v3625
    %3633 = vset.pattern.permute.xlu0 0
    %3634 = vperm.xlu0 %3633, %v3628
    %v3635 = vpop.permute.xlu0 %3634
    %3638 = vset.pattern.permute.xlu0 0
    %3639 = vperm.xlu0 %3638, %v3629
    %v3640 = vpop.permute.xlu0 %3639
    %3643 = vset.pattern.permute.xlu0 0
    %3644 = vperm.xlu0 %3643, %v3630
    %v3645 = vpop.permute.xlu0 %3644
    %3648 = vset.pattern.permute.xlu0 0
    %3649 = vperm.xlu0 %3648, %v3631
    %v3650 = vpop.permute.xlu0 %3649
    %v3652 = vmul.f32 %v56, %v3635
    %v3653 = vmul.f32 %v57, %v3640
    %v3654 = vmul.f32 %v58, %v3645
    %v3655 = vmul.f32 %v59, %v3650
    %v3656 = vsel %vm65, %v3652, 0.0
    %v3657 = vsel %vm65, %v3653, 0.0
    %v3658 = vadd.f32 %v3656, %v3657
    %v3659 = vrot.slane %v3658, 4
    %v3660 = vadd.f32 %v3658, %v3659
    %v3661 = vrot.slane %v3660, 2
    %v3662 = vadd.f32 %v3660, %v3661
    %v3663 = vrot.slane %v3662, 1
    %v3664 = vadd.f32 %v3662, %v3663
    %v3665 = vsel %vm65, %v3654, 0.0
    %v3666 = vsel %vm65, %v3655, 0.0
    %v3667 = vadd.f32 %v3665, %v3666
    %v3668 = vrot.slane %v3667, 4
    %v3669 = vadd.f32 %v3667, %v3668
    %v3670 = vrot.slane %v3669, 2
    %v3671 = vadd.f32 %v3669, %v3670
    %v3672 = vrot.slane %v3671, 1
    %v3673 = vadd.f32 %v3671, %v3672
    %v3676 = vsel %vm93, %v3673, %v3664
    %v3678 = vmul.f32 %v3469, %v3676
    %v3679 = vld [vmem:[#allocation9 + $0x60] sm:$0xff]
    %v3680 = vld [vmem:[#allocation9 + $0x78] sm:$0xff]
    %v3681 = vld [vmem:[#allocation9 + $0x90] sm:$0xff]
    %v3682 = vld [vmem:[#allocation9 + $0xa8] sm:$0xff]
    %s3683 = scalar_lea.vmem [#allocation7], 12
    %v3684 = vld [vmem:[%s3683] sm:$0x3]
    %v3685 = vadd.f32 %v3684, %v3390
    %v3687 = vsel %vm65, %v3678, 0
    %3689 = vmatprep.subr.mxu0 0.0
    %3690 = vmatpush1.msra.mxu0 0.0
    %3691 = vmatprep.subr.mxu0 0.0
    %3692 = vmatpush1.msra.mxu0 0.0
    %3693 = vmatprep.subr.mxu0 0.0
    %3694 = vmatpush1.msra.mxu0 0.0
    %3695 = vmatprep.subr.mxu0 0.0
    %3696 = vmatpush1.msra.mxu0 0.0
    %3697 = vmatprep.subr.mxu0 0.0
    %3698 = vmatpush1.msra.mxu0 0.0
    %3699 = vmatprep.subr.mxu0 0.0
    %3700 = vmatpush1.msra.mxu0 0.0
    %3701 = vmatprep.subr.mxu0 0.0
    %3702 = vmatpush1.msra.mxu0 0.0
    %3703 = vmatprep.subr.mxu0 0.0
    %3704 = vmatpush1.msra.mxu0 0.0
    %3705 = vmatprep.subr.mxu0 0.0
    %3706 = vmatpush1.msra.mxu0 0.0
    %3707 = vmatprep.subr.mxu0 0.0
    %3708 = vmatpush1.msra.mxu0 0.0
    %3709 = vmatprep.subr.mxu0 0.0
    %3710 = vmatpush1.msra.mxu0 0.0
    %3711 = vmatprep.subr.mxu0 0.0
    %3712 = vmatpush1.msra.mxu0 0.0
    %3713 = vmatprep.subr.mxu0 0.0
    %3714 = vmatpush1.msra.mxu0 %v3682
    %3715 = vmatprep.subr.mxu0 0.0
    %3716 = vmatpush1.msra.mxu0 %v3681
    %3717 = vmatprep.subr.mxu0 0.0
    %3718 = vmatpush1.msra.mxu0 %v3680
    %3719 = vmatprep.subr.mxu0 0.0
    %3720 = vmatpush1.msra.mxu0 %v3679
    %3721 = vmatprep.subr.mxu0 0.0
    %3722 = vmatpush2.msra.mxu0 0.0
    %3723 = vmatprep.subr.mxu0 0.0
    %3724 = vmatpush2.msra.mxu0 0.0
    %3725 = vmatprep.subr.mxu0 0.0
    %3726 = vmatpush2.msra.mxu0 0.0
    %3727 = vmatprep.subr.mxu0 0.0
    %3728 = vmatpush2.msra.mxu0 0.0
    %3729 = vmatprep.subr.mxu0 0.0
    %3730 = vmatpush2.msra.mxu0 0.0
    %3731 = vmatprep.subr.mxu0 0.0
    %3732 = vmatpush2.msra.mxu0 0.0
    %3733 = vmatprep.subr.mxu0 0.0
    %3734 = vmatpush2.msra.mxu0 0.0
    %3735 = vmatprep.subr.mxu0 0.0
    %3736 = vmatpush2.msra.mxu0 0.0
    %3737 = vmatprep.subr.mxu0 0.0
    %3738 = vmatpush2.msra.mxu0 0.0
    %3739 = vmatprep.subr.mxu0 0.0
    %3740 = vmatpush2.msra.mxu0 0.0
    %3741 = vmatprep.subr.mxu0 0.0
    %3742 = vmatpush2.msra.mxu0 0.0
    %3743 = vmatprep.subr.mxu0 0.0
    %3744 = vmatpush2.msra.mxu0 0.0
    %3745 = vmatprep.subr.mxu0 0.0
    %3746 = vmatpush2.msra.mxu0 0.0
    %3747 = vmatprep.subr.mxu0 0.0
    %3748 = vmatpush2.msra.mxu0 0.0
    %3749 = vmatprep.subr.mxu0 0.0
    %3750 = vmatpush2.msra.mxu0 0.0
    %3751 = vmatprep.subr.mxu0 0.0
    %3752 = vmatpush2.msra.mxu0 0.0
    %3753 = vmatprep.mubr.f32.mxu0 0.0
    %3754 = vmatmul.mubr.f32.gmra.mxu0 %v3687
    %v3755 = vpop.f32.mrf.mxu0
    %v3756 = vadd.f32 0.0, %v3755
    %v3757 = vpop.f32.mrf.mxu0
    %3758 = vdwg.mxu0
    %v3759 = vadd.f32 %v3685, %v3756
    %v3760 = vxor.u32 %v3759, 2147483648
    %v3761 = vmul.f32 %v3760, 1.442695
    %v3762 = vpow.pop %v3761
    %v3763 = vadd.f32 %v3762, 1.0
    %v3764 = vrcp.pop %v3763
    %v3765 = vmul.f32 1.0, %v3764
    %v3766 = vtanh.pop %v3759
    %v3767 = vmul.f32 %v3765, %v3276
    %3769 = vrot.lane.b32.xlu0 %v3766, 64
    %v3770 = vpop.permute.xlu0 %3769
    %v3772 = vmul.f32 %v3765, %v3770
    %3774 = vrot.lane.b32.xlu0 %v3772, 32
    %v3775 = vpop.permute.xlu0 %3774
    %v3777 = vadd.f32 %v3767, %v3775
    %v3778 = vtanh.pop %v3777
    %3780 = vrot.lane.b32.xlu0 %v3778, 64
    %v3781 = vpop.permute.xlu0 %3780
    %v3783 = vmul.f32 %v3765, %v3781
    %3785 = vrot.lane.b32.xlu0 %v3783, 32
    %v3786 = vpop.permute.xlu0 %3785
    %3788 = vst.msk [vmem:[#allocation2 + $0xc] sm:$0x3] %vm781, %v3786
    %v3789 = vlaneseq
    %v3790 = vshrl.u32 %v3789, 7
    %v3791 = vsub.s32 %v521, %v3790
    %v3792 = vrot.slane %v3635, %v3791
    %v3793 = vlaneseq
    %v3794 = vshrl.u32 %v3793, 7
    %v3795 = vsub.s32 %v526, %v3794
    %v3796 = vrot.slane %v3640, %v3795
    %v3797 = vsel %vm531, %v3796, %v3792
    %v3798 = vlaneseq
    %v3799 = vshrl.u32 %v3798, 7
    %v3800 = vsub.s32 %v521, %v3799
    %v3801 = vrot.slane %v3645, %v3800
    %v3802 = vlaneseq
    %v3803 = vshrl.u32 %v3802, 7
    %v3804 = vsub.s32 %v526, %v3803
    %v3805 = vrot.slane %v3650, %v3804
    %v3806 = vsel %vm531, %v3805, %v3801
    %v3807 = vsel %vm93, %v3806, %v3797
    %3809 = vst.msk [vmem:[#allocation3 + $0xc] sm:$0x3] %vm544, %v3807
    %v3810 = vld [vmem:[#allocation9] sm:$0xff]
    %v3811 = vld [vmem:[#allocation9 + $0x8] sm:$0xff]
    %v3812 = vld [vmem:[#allocation9 + $0x10] sm:$0xff]
    %v3813 = vld [vmem:[#allocation9 + $0x18] sm:$0xff]
    %v3814 = vld [vmem:[#allocation9 + $0x20] sm:$0xff]
    %v3815 = vld [vmem:[#allocation9 + $0x28] sm:$0xff]
    %v3816 = vld [vmem:[#allocation9 + $0x30] sm:$0xff]
    %v3817 = vld [vmem:[#allocation9 + $0x38] sm:$0xff]
    %v3818 = vld [vmem:[#allocation9 + $0x40] sm:$0xff]
    %v3819 = vld [vmem:[#allocation9 + $0x48] sm:$0xff]
    %v3820 = vld [vmem:[#allocation9 + $0x50] sm:$0xff]
    %v3821 = vld [vmem:[#allocation9 + $0x58] sm:$0xff]
    %v3822 = vsel %vm65, %v3786, 0
    %3824 = vmatprep.subr.mxu0 0.0
    %3825 = vmatpush1.msra.mxu0 0.0
    %3826 = vmatprep.subr.mxu0 0.0
    %3827 = vmatpush1.msra.mxu0 0.0
    %3828 = vmatprep.subr.mxu0 0.0
    %3829 = vmatpush1.msra.mxu0 0.0
    %3830 = vmatprep.subr.mxu0 0.0
    %3831 = vmatpush1.msra.mxu0 0.0
    %3832 = vmatprep.subr.mxu0 0.0
    %3833 = vmatpush1.msra.mxu0 0.0
    %3834 = vmatprep.subr.mxu0 0.0
    %3835 = vmatpush1.msra.mxu0 0.0
    %3836 = vmatprep.subr.mxu0 0.0
    %3837 = vmatpush1.msra.mxu0 0.0
    %3838 = vmatprep.subr.mxu0 0.0
    %3839 = vmatpush1.msra.mxu0 0.0
    %3840 = vmatprep.subr.mxu0 0.0
    %3841 = vmatpush1.msra.mxu0 0.0
    %3842 = vmatprep.subr.mxu0 0.0
    %3843 = vmatpush1.msra.mxu0 0.0
    %3844 = vmatprep.subr.mxu0 0.0
    %3845 = vmatpush1.msra.mxu0 0.0
    %3846 = vmatprep.subr.mxu0 0.0
    %3847 = vmatpush1.msra.mxu0 0.0
    %3848 = vmatprep.subr.mxu0 %v3820
    %3849 = vmatpush1.msra.mxu0 %v3819
    %3850 = vmatprep.subr.mxu0 %v3817
    %3851 = vmatpush1.msra.mxu0 %v3816
    %3852 = vmatprep.subr.mxu0 %v3814
    %3853 = vmatpush1.msra.mxu0 %v3813
    %3854 = vmatprep.subr.mxu0 %v3811
    %3855 = vmatpush1.msra.mxu0 %v3810
    %3856 = vmatprep.subr.mxu0 0.0
    %3857 = vmatpush2.msra.mxu0 0.0
    %3858 = vmatprep.subr.mxu0 0.0
    %3859 = vmatpush2.msra.mxu0 0.0
    %3860 = vmatprep.subr.mxu0 0.0
    %3861 = vmatpush2.msra.mxu0 0.0
    %3862 = vmatprep.subr.mxu0 0.0
    %3863 = vmatpush2.msra.mxu0 0.0
    %3864 = vmatprep.subr.mxu0 0.0
    %3865 = vmatpush2.msra.mxu0 0.0
    %3866 = vmatprep.subr.mxu0 0.0
    %3867 = vmatpush2.msra.mxu0 0.0
    %3868 = vmatprep.subr.mxu0 0.0
    %3869 = vmatpush2.msra.mxu0 0.0
    %3870 = vmatprep.subr.mxu0 0.0
    %3871 = vmatpush2.msra.mxu0 0.0
    %3872 = vmatprep.subr.mxu0 0.0
    %3873 = vmatpush2.msra.mxu0 0.0
    %3874 = vmatprep.subr.mxu0 0.0
    %3875 = vmatpush2.msra.mxu0 0.0
    %3876 = vmatprep.subr.mxu0 0.0
    %3877 = vmatpush2.msra.mxu0 0.0
    %3878 = vmatprep.subr.mxu0 0.0
    %3879 = vmatpush2.msra.mxu0 0.0
    %3880 = vmatprep.subr.mxu0 0.0
    %3881 = vmatpush2.msra.mxu0 0.0
    %3882 = vmatprep.subr.mxu0 0.0
    %3883 = vmatpush2.msra.mxu0 0.0
    %3884 = vmatprep.subr.mxu0 0.0
    %3885 = vmatpush2.msra.mxu0 0.0
    %3886 = vmatprep.subr.mxu0 0.0
    %3887 = vmatpush2.msra.mxu0 0.0
    %3888 = vmatprep.mubr.f32.mxu0 0.0
    %3889 = vmatmul.mubr.f32.gmra.mxu0 %v3822
    %v3890 = vpop.f32.mrf.mxu0
    %v3891 = vadd.f32 %v285, %v3890
    %v3892 = vpop.f32.mrf.mxu0
    %v3893 = vadd.f32 %v289, %v3892
    %3894 = vdwg.mxu0
    %3895 = vmatprep.subr.mxu0 0.0
    %3896 = vmatpush1.msra.mxu0 0.0
    %3897 = vmatprep.subr.mxu0 0.0
    %3898 = vmatpush1.msra.mxu0 0.0
    %3899 = vmatprep.subr.mxu0 0.0
    %3900 = vmatpush1.msra.mxu0 0.0
    %3901 = vmatprep.subr.mxu0 0.0
    %3902 = vmatpush1.msra.mxu0 0.0
    %3903 = vmatprep.subr.mxu0 0.0
    %3904 = vmatpush1.msra.mxu0 0.0
    %3905 = vmatprep.subr.mxu0 0.0
    %3906 = vmatpush1.msra.mxu0 0.0
    %3907 = vmatprep.subr.mxu0 0.0
    %3908 = vmatpush1.msra.mxu0 0.0
    %3909 = vmatprep.subr.mxu0 0.0
    %3910 = vmatpush1.msra.mxu0 0.0
    %3911 = vmatprep.subr.mxu0 0.0
    %3912 = vmatpush1.msra.mxu0 0.0
    %3913 = vmatprep.subr.mxu0 0.0
    %3914 = vmatpush1.msra.mxu0 0.0
    %3915 = vmatprep.subr.mxu0 0.0
    %3916 = vmatpush1.msra.mxu0 0.0
    %3917 = vmatprep.subr.mxu0 0.0
    %3918 = vmatpush1.msra.mxu0 0.0
    %3919 = vmatprep.subr.mxu0 0.0
    %3920 = vmatpush1.msra.mxu0 %v3821
    %3921 = vmatprep.subr.mxu0 0.0
    %3922 = vmatpush1.msra.mxu0 %v3818
    %3923 = vmatprep.subr.mxu0 0.0
    %3924 = vmatpush1.msra.mxu0 %v3815
    %3925 = vmatprep.subr.mxu0 0.0
    %3926 = vmatpush1.msra.mxu0 %v3812
    %3927 = vmatprep.subr.mxu0 0.0
    %3928 = vmatpush2.msra.mxu0 0.0
    %3929 = vmatprep.subr.mxu0 0.0
    %3930 = vmatpush2.msra.mxu0 0.0
    %3931 = vmatprep.subr.mxu0 0.0
    %3932 = vmatpush2.msra.mxu0 0.0
    %3933 = vmatprep.subr.mxu0 0.0
    %3934 = vmatpush2.msra.mxu0 0.0
    %3935 = vmatprep.subr.mxu0 0.0
    %3936 = vmatpush2.msra.mxu0 0.0
    %3937 = vmatprep.subr.mxu0 0.0
    %3938 = vmatpush2.msra.mxu0 0.0
    %3939 = vmatprep.subr.mxu0 0.0
    %3940 = vmatpush2.msra.mxu0 0.0
    %3941 = vmatprep.subr.mxu0 0.0
    %3942 = vmatpush2.msra.mxu0 0.0
    %3943 = vmatprep.subr.mxu0 0.0
    %3944 = vmatpush2.msra.mxu0 0.0
    %3945 = vmatprep.subr.mxu0 0.0
    %3946 = vmatpush2.msra.mxu0 0.0
    %3947 = vmatprep.subr.mxu0 0.0
    %3948 = vmatpush2.msra.mxu0 0.0
    %3949 = vmatprep.subr.mxu0 0.0
    %3950 = vmatpush2.msra.mxu0 0.0
    %3951 = vmatprep.subr.mxu0 0.0
    %3952 = vmatpush2.msra.mxu0 0.0
    %3953 = vmatprep.subr.mxu0 0.0
    %3954 = vmatpush2.msra.mxu0 0.0
    %3955 = vmatprep.subr.mxu0 0.0
    %3956 = vmatpush2.msra.mxu0 0.0
    %3957 = vmatprep.subr.mxu0 0.0
    %3958 = vmatpush2.msra.mxu0 0.0
    %3959 = vmatprep.mubr.f32.mxu0 0.0
    %3960 = vmatmul.mubr.f32.gmra.mxu0 %v3822
    %v3961 = vpop.f32.mrf.mxu0
    %v3962 = vadd.f32 %v293, %v3961
    %v3963 = vpop.f32.mrf.mxu0
    %3964 = vdwg.mxu0
    %v3965 = vxor.u32 %v3962, 2147483648
    %v3966 = vmul.f32 %v3965, 1.442695
    %v3967 = vpow.pop %v3966
    %v3968 = vadd.f32 %v3967, 1.0
    %v3969 = vrcp.pop %v3968
    %v3970 = vmul.f32 1.0, %v3969
    %v3973 = vunpack.c.l.s4 1966171168
    %v3974 = vunpack.c.0.s8 %v3973
    %v3975 = vlaneseq
    %v3976 = vshrl.u32 %v3975, 7
    %v3977 = vsub.s32 %v3974, %v3976
    %v3978 = vrot.slane %v3893, %v3977
    %v3979 = vcombine.high %v3978, %v3978
    %v3981 = vunpack.c.l.s4 1966171168
    %v3982 = vunpack.c.0.s8 %v3981
    %v3983 = vlaneseq
    %v3984 = vshrl.u32 %v3983, 7
    %v3985 = vsub.s32 %v3982, %v3984
    %v3986 = vrot.slane %v3978, %v3985
    %v3988 = vunpack.c.l.s4 1966171168
    %v3989 = vunpack.c.0.s8 %v3988
    %v3990 = vlaneseq
    %v3991 = vshrl.u32 %v3990, 7
    %v3992 = vsub.s32 %v3989, %v3991
    %v3993 = vrot.slane %v3979, %v3992
    %v3994 = vlaneseq
    %v3995 = vshrl.u32 %v3994, 7
    %v3996 = vsub.s32 0, %v3995
    %v3997 = vrot.slane %v3986, %v3996
    %v3998 = vlaneseq
    %v3999 = vshrl.u32 %v3998, 7
    %v4000 = vsub.s32 0, %v3999
    %v4001 = vrot.slane %v3993, %v4000
    %v4004 = vadd.f32 %v263, %v3997
    %v4005 = vadd.f32 %v268, %v3997
    %v4006 = vadd.f32 %v273, %v4001
    %v4007 = vadd.f32 %v278, %v4001
    %v4008 = vtanh.pop %v4004
    %v4009 = vtanh.pop %v4005
    %v4010 = vtanh.pop %v4006
    %v4011 = vtanh.pop %v4007
    %v4012 = vmul.f32 %v4008, %v61
    %v4013 = vmul.f32 %v4009, %v61
    %v4014 = vmul.f32 %v4010, %v61
    %v4015 = vmul.f32 %v4011, %v61
    %v4016 = vsel %vm65, %v4012, 0.0
    %4017 = vadd.xlane.f32.xlu0 %v4016
    %v4018 = vpop.xlane.xlu0 %4017
    %v4019 = vsel %vm65, %v4013, 0.0
    %4020 = vadd.xlane.f32.xlu0 %v4019
    %v4021 = vpop.xlane.xlu0 %4020
    %v4022 = vsel %vm65, %v4014, 0.0
    %4023 = vadd.xlane.f32.xlu0 %v4022
    %v4024 = vpop.xlane.xlu0 %4023
    %v4025 = vsel %vm65, %v4015, 0.0
    %4026 = vadd.xlane.f32.xlu0 %v4025
    %v4027 = vpop.xlane.xlu0 %4026
    %v4032 = vlaneseq
    %v4033 = vshrl.u32 %v4032, 7
    %v4034 = vsub.s32 %v521, %v4033
    %v4035 = vrot.slane %v4018, %v4034
    %v4036 = vlaneseq
    %v4037 = vshrl.u32 %v4036, 7
    %v4038 = vsub.s32 %v526, %v4037
    %v4039 = vrot.slane %v4021, %v4038
    %v4040 = vsel %vm531, %v4039, %v4035
    %v4041 = vlaneseq
    %v4042 = vshrl.u32 %v4041, 7
    %v4043 = vsub.s32 %v521, %v4042
    %v4044 = vrot.slane %v4024, %v4043
    %v4045 = vlaneseq
    %v4046 = vshrl.u32 %v4045, 7
    %v4047 = vsub.s32 %v526, %v4046
    %v4048 = vrot.slane %v4027, %v4047
    %v4049 = vsel %vm531, %v4048, %v4044
    %v4050 = vsel %vm93, %v4049, %v4040
    %v4052 = vsel %vm544, %v4050, -inf
    %4053 = vmax.xlane.f32.xlu0 %v4052
    %v4054 = vpop.xlane.xlu0 %4053
    %v4056 = vlaneseq
    %v4057 = vshrl.u32 %v4056, 7
    %v4058 = vsub.s32 0, %v4057
    %v4059 = vrot.slane %v4054, %v4058
    %v4060 = vlaneseq
    %v4061 = vshrl.u32 %v4060, 7
    %v4062 = vsub.s32 1, %v4061
    %v4063 = vrot.slane %v4054, %v4062
    %v4066 = vsub.f32 %v4018, %v4059
    %v4067 = vsub.f32 %v4021, %v4059
    %v4068 = vsub.f32 %v4024, %v4063
    %v4069 = vsub.f32 %v4027, %v4063
    %v4070 = vmul.f32 %v4066, 1.442695
    %v4071 = vpow.pop %v4070
    %v4072 = vmul.f32 %v4067, 1.442695
    %v4073 = vpow.pop %v4072
    %v4074 = vmul.f32 %v4068, 1.442695
    %v4075 = vpow.pop %v4074
    %v4076 = vmul.f32 %v4069, 1.442695
    %v4077 = vpow.pop %v4076
    %4082 = vset.pattern.permute.xlu0 0
    %4083 = vperm.xlu0 %4082, %v4071
    %v4084 = vpop.permute.xlu0 %4083
    %4085 = vset.pattern.permute.xlu0 0
    %4086 = vperm.xlu0 %4085, %v4073
    %v4087 = vpop.permute.xlu0 %4086
    %4088 = vset.pattern.permute.xlu0 0
    %4089 = vperm.xlu0 %4088, %v4075
    %v4090 = vpop.permute.xlu0 %4089
    %4091 = vset.pattern.permute.xlu0 0
    %4092 = vperm.xlu0 %4091, %v4077
    %v4093 = vpop.permute.xlu0 %4092
    %v4094 = vlaneseq
    %v4095 = vshrl.u32 %v4094, 7
    %v4096 = vsub.s32 %v521, %v4095
    %v4097 = vrot.slane %v4084, %v4096
    %v4098 = vlaneseq
    %v4099 = vshrl.u32 %v4098, 7
    %v4100 = vsub.s32 %v526, %v4099
    %v4101 = vrot.slane %v4087, %v4100
    %v4102 = vsel %vm531, %v4101, %v4097
    %v4103 = vlaneseq
    %v4104 = vshrl.u32 %v4103, 7
    %v4105 = vsub.s32 %v521, %v4104
    %v4106 = vrot.slane %v4090, %v4105
    %v4107 = vlaneseq
    %v4108 = vshrl.u32 %v4107, 7
    %v4109 = vsub.s32 %v526, %v4108
    %v4110 = vrot.slane %v4093, %v4109
    %v4111 = vsel %vm531, %v4110, %v4106
    %v4112 = vsel %vm93, %v4111, %v4102
    %v4114 = vsel %vm544, %v4112, 0.0
    %4115 = vadd.xlane.f32.xlu0 %v4114
    %v4116 = vpop.xlane.xlu0 %4115
    %v4117 = vrcp.pop %v4116
    %v4119 = vlaneseq
    %v4120 = vshrl.u32 %v4119, 7
    %v4121 = vsub.s32 0, %v4120
    %v4122 = vrot.slane %v4117, %v4121
    %v4123 = vlaneseq
    %v4124 = vshrl.u32 %v4123, 7
    %v4125 = vsub.s32 1, %v4124
    %v4126 = vrot.slane %v4117, %v4125
    %v4129 = vmul.f32 %v4071, %v4122
    %v4130 = vmul.f32 %v4073, %v4122
    %v4131 = vmul.f32 %v4075, %v4126
    %v4132 = vmul.f32 %v4077, %v4126
    %4134 = vset.pattern.permute.xlu0 0
    %4135 = vperm.xlu0 %4134, %v4129
    %v4136 = vpop.permute.xlu0 %4135
    %4139 = vset.pattern.permute.xlu0 0
    %4140 = vperm.xlu0 %4139, %v4130
    %v4141 = vpop.permute.xlu0 %4140
    %4144 = vset.pattern.permute.xlu0 0
    %4145 = vperm.xlu0 %4144, %v4131
    %v4146 = vpop.permute.xlu0 %4145
    %4149 = vset.pattern.permute.xlu0 0
    %4150 = vperm.xlu0 %4149, %v4132
    %v4151 = vpop.permute.xlu0 %4150
    %v4153 = vmul.f32 %v56, %v4136
    %v4154 = vmul.f32 %v57, %v4141
    %v4155 = vmul.f32 %v58, %v4146
    %v4156 = vmul.f32 %v59, %v4151
    %v4157 = vsel %vm65, %v4153, 0.0
    %v4158 = vsel %vm65, %v4154, 0.0
    %v4159 = vadd.f32 %v4157, %v4158
    %v4160 = vrot.slane %v4159, 4
    %v4161 = vadd.f32 %v4159, %v4160
    %v4162 = vrot.slane %v4161, 2
    %v4163 = vadd.f32 %v4161, %v4162
    %v4164 = vrot.slane %v4163, 1
    %v4165 = vadd.f32 %v4163, %v4164
    %v4166 = vsel %vm65, %v4155, 0.0
    %v4167 = vsel %vm65, %v4156, 0.0
    %v4168 = vadd.f32 %v4166, %v4167
    %v4169 = vrot.slane %v4168, 4
    %v4170 = vadd.f32 %v4168, %v4169
    %v4171 = vrot.slane %v4170, 2
    %v4172 = vadd.f32 %v4170, %v4171
    %v4173 = vrot.slane %v4172, 1
    %v4174 = vadd.f32 %v4172, %v4173
    %v4177 = vsel %vm93, %v4174, %v4165
    %v4179 = vmul.f32 %v3970, %v4177
    %v4180 = vld [vmem:[#allocation9 + $0x60] sm:$0xff]
    %v4181 = vld [vmem:[#allocation9 + $0x78] sm:$0xff]
    %v4182 = vld [vmem:[#allocation9 + $0x90] sm:$0xff]
    %v4183 = vld [vmem:[#allocation9 + $0xa8] sm:$0xff]
    %s4184 = scalar_lea.vmem [#allocation7], 14
    %v4185 = vld [vmem:[%s4184] sm:$0x3]
    %v4186 = vadd.f32 %v4185, %v3891
    %v4188 = vsel %vm65, %v4179, 0
    %4190 = vmatprep.subr.mxu0 0.0
    %4191 = vmatpush1.msra.mxu0 0.0
    %4192 = vmatprep.subr.mxu0 0.0
    %4193 = vmatpush1.msra.mxu0 0.0
    %4194 = vmatprep.subr.mxu0 0.0
    %4195 = vmatpush1.msra.mxu0 0.0
    %4196 = vmatprep.subr.mxu0 0.0
    %4197 = vmatpush1.msra.mxu0 0.0
    %4198 = vmatprep.subr.mxu0 0.0
    %4199 = vmatpush1.msra.mxu0 0.0
    %4200 = vmatprep.subr.mxu0 0.0
    %4201 = vmatpush1.msra.mxu0 0.0
    %4202 = vmatprep.subr.mxu0 0.0
    %4203 = vmatpush1.msra.mxu0 0.0
    %4204 = vmatprep.subr.mxu0 0.0
    %4205 = vmatpush1.msra.mxu0 0.0
    %4206 = vmatprep.subr.mxu0 0.0
    %4207 = vmatpush1.msra.mxu0 0.0
    %4208 = vmatprep.subr.mxu0 0.0
    %4209 = vmatpush1.msra.mxu0 0.0
    %4210 = vmatprep.subr.mxu0 0.0
    %4211 = vmatpush1.msra.mxu0 0.0
    %4212 = vmatprep.subr.mxu0 0.0
    %4213 = vmatpush1.msra.mxu0 0.0
    %4214 = vmatprep.subr.mxu0 0.0
    %4215 = vmatpush1.msra.mxu0 %v4183
    %4216 = vmatprep.subr.mxu0 0.0
    %4217 = vmatpush1.msra.mxu0 %v4182
    %4218 = vmatprep.subr.mxu0 0.0
    %4219 = vmatpush1.msra.mxu0 %v4181
    %4220 = vmatprep.subr.mxu0 0.0
    %4221 = vmatpush1.msra.mxu0 %v4180
    %4222 = vmatprep.subr.mxu0 0.0
    %4223 = vmatpush2.msra.mxu0 0.0
    %4224 = vmatprep.subr.mxu0 0.0
    %4225 = vmatpush2.msra.mxu0 0.0
    %4226 = vmatprep.subr.mxu0 0.0
    %4227 = vmatpush2.msra.mxu0 0.0
    %4228 = vmatprep.subr.mxu0 0.0
    %4229 = vmatpush2.msra.mxu0 0.0
    %4230 = vmatprep.subr.mxu0 0.0
    %4231 = vmatpush2.msra.mxu0 0.0
    %4232 = vmatprep.subr.mxu0 0.0
    %4233 = vmatpush2.msra.mxu0 0.0
    %4234 = vmatprep.subr.mxu0 0.0
    %4235 = vmatpush2.msra.mxu0 0.0
    %4236 = vmatprep.subr.mxu0 0.0
    %4237 = vmatpush2.msra.mxu0 0.0
    %4238 = vmatprep.subr.mxu0 0.0
    %4239 = vmatpush2.msra.mxu0 0.0
    %4240 = vmatprep.subr.mxu0 0.0
    %4241 = vmatpush2.msra.mxu0 0.0
    %4242 = vmatprep.subr.mxu0 0.0
    %4243 = vmatpush2.msra.mxu0 0.0
    %4244 = vmatprep.subr.mxu0 0.0
    %4245 = vmatpush2.msra.mxu0 0.0
    %4246 = vmatprep.subr.mxu0 0.0
    %4247 = vmatpush2.msra.mxu0 0.0
    %4248 = vmatprep.subr.mxu0 0.0
    %4249 = vmatpush2.msra.mxu0 0.0
    %4250 = vmatprep.subr.mxu0 0.0
    %4251 = vmatpush2.msra.mxu0 0.0
    %4252 = vmatprep.subr.mxu0 0.0
    %4253 = vmatpush2.msra.mxu0 0.0
    %4254 = vmatprep.mubr.f32.mxu0 0.0
    %4255 = vmatmul.mubr.f32.gmra.mxu0 %v4188
    %v4256 = vpop.f32.mrf.mxu0
    %v4257 = vadd.f32 0.0, %v4256
    %v4258 = vpop.f32.mrf.mxu0
    %4259 = vdwg.mxu0
    %v4260 = vadd.f32 %v4186, %v4257
    %v4261 = vxor.u32 %v4260, 2147483648
    %v4262 = vmul.f32 %v4261, 1.442695
    %v4263 = vpow.pop %v4262
    %v4264 = vadd.f32 %v4263, 1.0
    %v4265 = vrcp.pop %v4264
    %v4266 = vmul.f32 1.0, %v4265
    %v4267 = vtanh.pop %v4260
    %v4268 = vmul.f32 %v4266, %v3777
    %4270 = vrot.lane.b32.xlu0 %v4267, 64
    %v4271 = vpop.permute.xlu0 %4270
    %v4273 = vmul.f32 %v4266, %v4271
    %4275 = vrot.lane.b32.xlu0 %v4273, 32
    %v4276 = vpop.permute.xlu0 %4275
    %v4278 = vadd.f32 %v4268, %v4276
    %v4279 = vtanh.pop %v4278
    %4281 = vrot.lane.b32.xlu0 %v4279, 64
    %v4282 = vpop.permute.xlu0 %4281
    %v4284 = vmul.f32 %v4266, %v4282
    %4286 = vrot.lane.b32.xlu0 %v4284, 32
    %v4287 = vpop.permute.xlu0 %4286
    %4289 = vst.msk [vmem:[#allocation2 + $0xe] sm:$0x3] %vm781, %v4287
    %v4290 = vlaneseq
    %v4291 = vshrl.u32 %v4290, 7
    %v4292 = vsub.s32 %v521, %v4291
    %v4293 = vrot.slane %v4136, %v4292
    %v4294 = vlaneseq
    %v4295 = vshrl.u32 %v4294, 7
    %v4296 = vsub.s32 %v526, %v4295
    %v4297 = vrot.slane %v4141, %v4296
    %v4298 = vsel %vm531, %v4297, %v4293
    %v4299 = vlaneseq
    %v4300 = vshrl.u32 %v4299, 7
    %v4301 = vsub.s32 %v521, %v4300
    %v4302 = vrot.slane %v4146, %v4301
    %v4303 = vlaneseq
    %v4304 = vshrl.u32 %v4303, 7
    %v4305 = vsub.s32 %v526, %v4304
    %v4306 = vrot.slane %v4151, %v4305
    %v4307 = vsel %vm531, %v4306, %v4302
    %v4308 = vsel %vm93, %v4307, %v4298
    %4310 = vst.msk [vmem:[#allocation3 + $0xe] sm:$0x3] %vm544, %v4308
    %v4311 = vld [vmem:[#allocation9] sm:$0xff]
    %v4312 = vld [vmem:[#allocation9 + $0x8] sm:$0xff]
    %v4313 = vld [vmem:[#allocation9 + $0x10] sm:$0xff]
    %v4314 = vld [vmem:[#allocation9 + $0x18] sm:$0xff]
    %v4315 = vld [vmem:[#allocation9 + $0x20] sm:$0xff]
    %v4316 = vld [vmem:[#allocation9 + $0x28] sm:$0xff]
    %v4317 = vld [vmem:[#allocation9 + $0x30] sm:$0xff]
    %v4318 = vld [vmem:[#allocation9 + $0x38] sm:$0xff]
    %v4319 = vld [vmem:[#allocation9 + $0x40] sm:$0xff]
    %v4320 = vld [vmem:[#allocation9 + $0x48] sm:$0xff]
    %v4321 = vld [vmem:[#allocation9 + $0x50] sm:$0xff]
    %v4322 = vld [vmem:[#allocation9 + $0x58] sm:$0xff]
    %v4323 = vsel %vm65, %v4287, 0
    %4325 = vmatprep.subr.mxu0 0.0
    %4326 = vmatpush1.msra.mxu0 0.0
    %4327 = vmatprep.subr.mxu0 0.0
    %4328 = vmatpush1.msra.mxu0 0.0
    %4329 = vmatprep.subr.mxu0 0.0
    %4330 = vmatpush1.msra.mxu0 0.0
    %4331 = vmatprep.subr.mxu0 0.0
    %4332 = vmatpush1.msra.mxu0 0.0
    %4333 = vmatprep.subr.mxu0 0.0
    %4334 = vmatpush1.msra.mxu0 0.0
    %4335 = vmatprep.subr.mxu0 0.0
    %4336 = vmatpush1.msra.mxu0 0.0
    %4337 = vmatprep.subr.mxu0 0.0
    %4338 = vmatpush1.msra.mxu0 0.0
    %4339 = vmatprep.subr.mxu0 0.0
    %4340 = vmatpush1.msra.mxu0 0.0
    %4341 = vmatprep.subr.mxu0 0.0
    %4342 = vmatpush1.msra.mxu0 0.0
    %4343 = vmatprep.subr.mxu0 0.0
    %4344 = vmatpush1.msra.mxu0 0.0
    %4345 = vmatprep.subr.mxu0 0.0
    %4346 = vmatpush1.msra.mxu0 0.0
    %4347 = vmatprep.subr.mxu0 0.0
    %4348 = vmatpush1.msra.mxu0 0.0
    %4349 = vmatprep.subr.mxu0 %v4321
    %4350 = vmatpush1.msra.mxu0 %v4320
    %4351 = vmatprep.subr.mxu0 %v4318
    %4352 = vmatpush1.msra.mxu0 %v4317
    %4353 = vmatprep.subr.mxu0 %v4315
    %4354 = vmatpush1.msra.mxu0 %v4314
    %4355 = vmatprep.subr.mxu0 %v4312
    %4356 = vmatpush1.msra.mxu0 %v4311
    %4357 = vmatprep.subr.mxu0 0.0
    %4358 = vmatpush2.msra.mxu0 0.0
    %4359 = vmatprep.subr.mxu0 0.0
    %4360 = vmatpush2.msra.mxu0 0.0
    %4361 = vmatprep.subr.mxu0 0.0
    %4362 = vmatpush2.msra.mxu0 0.0
    %4363 = vmatprep.subr.mxu0 0.0
    %4364 = vmatpush2.msra.mxu0 0.0
    %4365 = vmatprep.subr.mxu0 0.0
    %4366 = vmatpush2.msra.mxu0 0.0
    %4367 = vmatprep.subr.mxu0 0.0
    %4368 = vmatpush2.msra.mxu0 0.0
    %4369 = vmatprep.subr.mxu0 0.0
    %4370 = vmatpush2.msra.mxu0 0.0
    %4371 = vmatprep.subr.mxu0 0.0
    %4372 = vmatpush2.msra.mxu0 0.0
    %4373 = vmatprep.subr.mxu0 0.0
    %4374 = vmatpush2.msra.mxu0 0.0
    %4375 = vmatprep.subr.mxu0 0.0
    %4376 = vmatpush2.msra.mxu0 0.0
    %4377 = vmatprep.subr.mxu0 0.0
    %4378 = vmatpush2.msra.mxu0 0.0
    %4379 = vmatprep.subr.mxu0 0.0
    %4380 = vmatpush2.msra.mxu0 0.0
    %4381 = vmatprep.subr.mxu0 0.0
    %4382 = vmatpush2.msra.mxu0 0.0
    %4383 = vmatprep.subr.mxu0 0.0
    %4384 = vmatpush2.msra.mxu0 0.0
    %4385 = vmatprep.subr.mxu0 0.0
    %4386 = vmatpush2.msra.mxu0 0.0
    %4387 = vmatprep.subr.mxu0 0.0
    %4388 = vmatpush2.msra.mxu0 0.0
    %4389 = vmatprep.mubr.f32.mxu0 0.0
    %4390 = vmatmul.mubr.f32.gmra.mxu0 %v4323
    %v4391 = vpop.f32.mrf.mxu0
    %v4392 = vadd.f32 %v285, %v4391
    %v4393 = vpop.f32.mrf.mxu0
    %v4394 = vadd.f32 %v289, %v4393
    %4395 = vdwg.mxu0
    %4396 = vmatprep.subr.mxu0 0.0
    %4397 = vmatpush1.msra.mxu0 0.0
    %4398 = vmatprep.subr.mxu0 0.0
    %4399 = vmatpush1.msra.mxu0 0.0
    %4400 = vmatprep.subr.mxu0 0.0
    %4401 = vmatpush1.msra.mxu0 0.0
    %4402 = vmatprep.subr.mxu0 0.0
    %4403 = vmatpush1.msra.mxu0 0.0
    %4404 = vmatprep.subr.mxu0 0.0
    %4405 = vmatpush1.msra.mxu0 0.0
    %4406 = vmatprep.subr.mxu0 0.0
    %4407 = vmatpush1.msra.mxu0 0.0
    %4408 = vmatprep.subr.mxu0 0.0
    %4409 = vmatpush1.msra.mxu0 0.0
    %4410 = vmatprep.subr.mxu0 0.0
    %4411 = vmatpush1.msra.mxu0 0.0
    %4412 = vmatprep.subr.mxu0 0.0
    %4413 = vmatpush1.msra.mxu0 0.0
    %4414 = vmatprep.subr.mxu0 0.0
    %4415 = vmatpush1.msra.mxu0 0.0
    %4416 = vmatprep.subr.mxu0 0.0
    %4417 = vmatpush1.msra.mxu0 0.0
    %4418 = vmatprep.subr.mxu0 0.0
    %4419 = vmatpush1.msra.mxu0 0.0
    %4420 = vmatprep.subr.mxu0 0.0
    %4421 = vmatpush1.msra.mxu0 %v4322
    %4422 = vmatprep.subr.mxu0 0.0
    %4423 = vmatpush1.msra.mxu0 %v4319
    %4424 = vmatprep.subr.mxu0 0.0
    %4425 = vmatpush1.msra.mxu0 %v4316
    %4426 = vmatprep.subr.mxu0 0.0
    %4427 = vmatpush1.msra.mxu0 %v4313
    %4428 = vmatprep.subr.mxu0 0.0
    %4429 = vmatpush2.msra.mxu0 0.0
    %4430 = vmatprep.subr.mxu0 0.0
    %4431 = vmatpush2.msra.mxu0 0.0
    %4432 = vmatprep.subr.mxu0 0.0
    %4433 = vmatpush2.msra.mxu0 0.0
    %4434 = vmatprep.subr.mxu0 0.0
    %4435 = vmatpush2.msra.mxu0 0.0
    %4436 = vmatprep.subr.mxu0 0.0
    %4437 = vmatpush2.msra.mxu0 0.0
    %4438 = vmatprep.subr.mxu0 0.0
    %4439 = vmatpush2.msra.mxu0 0.0
    %4440 = vmatprep.subr.mxu0 0.0
    %4441 = vmatpush2.msra.mxu0 0.0
    %4442 = vmatprep.subr.mxu0 0.0
    %4443 = vmatpush2.msra.mxu0 0.0
    %4444 = vmatprep.subr.mxu0 0.0
    %4445 = vmatpush2.msra.mxu0 0.0
    %4446 = vmatprep.subr.mxu0 0.0
    %4447 = vmatpush2.msra.mxu0 0.0
    %4448 = vmatprep.subr.mxu0 0.0
    %4449 = vmatpush2.msra.mxu0 0.0
    %4450 = vmatprep.subr.mxu0 0.0
    %4451 = vmatpush2.msra.mxu0 0.0
    %4452 = vmatprep.subr.mxu0 0.0
    %4453 = vmatpush2.msra.mxu0 0.0
    %4454 = vmatprep.subr.mxu0 0.0
    %4455 = vmatpush2.msra.mxu0 0.0
    %4456 = vmatprep.subr.mxu0 0.0
    %4457 = vmatpush2.msra.mxu0 0.0
    %4458 = vmatprep.subr.mxu0 0.0
    %4459 = vmatpush2.msra.mxu0 0.0
    %4460 = vmatprep.mubr.f32.mxu0 0.0
    %4461 = vmatmul.mubr.f32.gmra.mxu0 %v4323
    %v4462 = vpop.f32.mrf.mxu0
    %v4463 = vadd.f32 %v293, %v4462
    %v4464 = vpop.f32.mrf.mxu0
    %4465 = vdwg.mxu0
    %v4466 = vxor.u32 %v4463, 2147483648
    %v4467 = vmul.f32 %v4466, 1.442695
    %v4468 = vpow.pop %v4467
    %v4469 = vadd.f32 %v4468, 1.0
    %v4470 = vrcp.pop %v4469
    %v4471 = vmul.f32 1.0, %v4470
    %v4474 = vunpack.c.l.s4 1966171168
    %v4475 = vunpack.c.0.s8 %v4474
    %v4476 = vlaneseq
    %v4477 = vshrl.u32 %v4476, 7
    %v4478 = vsub.s32 %v4475, %v4477
    %v4479 = vrot.slane %v4394, %v4478
    %v4480 = vcombine.high %v4479, %v4479
    %v4482 = vunpack.c.l.s4 1966171168
    %v4483 = vunpack.c.0.s8 %v4482
    %v4484 = vlaneseq
    %v4485 = vshrl.u32 %v4484, 7
    %v4486 = vsub.s32 %v4483, %v4485
    %v4487 = vrot.slane %v4479, %v4486
    %v4489 = vunpack.c.l.s4 1966171168
    %v4490 = vunpack.c.0.s8 %v4489
    %v4491 = vlaneseq
    %v4492 = vshrl.u32 %v4491, 7
    %v4493 = vsub.s32 %v4490, %v4492
    %v4494 = vrot.slane %v4480, %v4493
    %v4495 = vlaneseq
    %v4496 = vshrl.u32 %v4495, 7
    %v4497 = vsub.s32 0, %v4496
    %v4498 = vrot.slane %v4487, %v4497
    %v4499 = vlaneseq
    %v4500 = vshrl.u32 %v4499, 7
    %v4501 = vsub.s32 0, %v4500
    %v4502 = vrot.slane %v4494, %v4501
    %v4505 = vadd.f32 %v263, %v4498
    %v4506 = vadd.f32 %v268, %v4498
    %v4507 = vadd.f32 %v273, %v4502
    %v4508 = vadd.f32 %v278, %v4502
    %v4509 = vtanh.pop %v4505
    %v4510 = vtanh.pop %v4506
    %v4511 = vtanh.pop %v4507
    %v4512 = vtanh.pop %v4508
    %v4513 = vmul.f32 %v4509, %v61
    %v4514 = vmul.f32 %v4510, %v61
    %v4515 = vmul.f32 %v4511, %v61
    %v4516 = vmul.f32 %v4512, %v61
    %v4517 = vsel %vm65, %v4513, 0.0
    %4518 = vadd.xlane.f32.xlu0 %v4517
    %v4519 = vpop.xlane.xlu0 %4518
    %v4520 = vsel %vm65, %v4514, 0.0
    %4521 = vadd.xlane.f32.xlu0 %v4520
    %v4522 = vpop.xlane.xlu0 %4521
    %v4523 = vsel %vm65, %v4515, 0.0
    %4524 = vadd.xlane.f32.xlu0 %v4523
    %v4525 = vpop.xlane.xlu0 %4524
    %v4526 = vsel %vm65, %v4516, 0.0
    %4527 = vadd.xlane.f32.xlu0 %v4526
    %v4528 = vpop.xlane.xlu0 %4527
    %v4533 = vlaneseq
    %v4534 = vshrl.u32 %v4533, 7
    %v4535 = vsub.s32 %v521, %v4534
    %v4536 = vrot.slane %v4519, %v4535
    %v4537 = vlaneseq
    %v4538 = vshrl.u32 %v4537, 7
    %v4539 = vsub.s32 %v526, %v4538
    %v4540 = vrot.slane %v4522, %v4539
    %v4541 = vsel %vm531, %v4540, %v4536
    %v4542 = vlaneseq
    %v4543 = vshrl.u32 %v4542, 7
    %v4544 = vsub.s32 %v521, %v4543
    %v4545 = vrot.slane %v4525, %v4544
    %v4546 = vlaneseq
    %v4547 = vshrl.u32 %v4546, 7
    %v4548 = vsub.s32 %v526, %v4547
    %v4549 = vrot.slane %v4528, %v4548
    %v4550 = vsel %vm531, %v4549, %v4545
    %v4551 = vsel %vm93, %v4550, %v4541
    %v4553 = vsel %vm544, %v4551, -inf
    %4554 = vmax.xlane.f32.xlu0 %v4553
    %v4555 = vpop.xlane.xlu0 %4554
    %v4557 = vlaneseq
    %v4558 = vshrl.u32 %v4557, 7
    %v4559 = vsub.s32 0, %v4558
    %v4560 = vrot.slane %v4555, %v4559
    %v4561 = vlaneseq
    %v4562 = vshrl.u32 %v4561, 7
    %v4563 = vsub.s32 1, %v4562
    %v4564 = vrot.slane %v4555, %v4563
    %v4567 = vsub.f32 %v4519, %v4560
    %v4568 = vsub.f32 %v4522, %v4560
    %v4569 = vsub.f32 %v4525, %v4564
    %v4570 = vsub.f32 %v4528, %v4564
    %v4571 = vmul.f32 %v4567, 1.442695
    %v4572 = vpow.pop %v4571
    %v4573 = vmul.f32 %v4568, 1.442695
    %v4574 = vpow.pop %v4573
    %v4575 = vmul.f32 %v4569, 1.442695
    %v4576 = vpow.pop %v4575
    %v4577 = vmul.f32 %v4570, 1.442695
    %v4578 = vpow.pop %v4577
    %4583 = vset.pattern.permute.xlu0 0
    %4584 = vperm.xlu0 %4583, %v4572
    %v4585 = vpop.permute.xlu0 %4584
    %4586 = vset.pattern.permute.xlu0 0
    %4587 = vperm.xlu0 %4586, %v4574
    %v4588 = vpop.permute.xlu0 %4587
    %4589 = vset.pattern.permute.xlu0 0
    %4590 = vperm.xlu0 %4589, %v4576
    %v4591 = vpop.permute.xlu0 %4590
    %4592 = vset.pattern.permute.xlu0 0
    %4593 = vperm.xlu0 %4592, %v4578
    %v4594 = vpop.permute.xlu0 %4593
    %v4595 = vlaneseq
    %v4596 = vshrl.u32 %v4595, 7
    %v4597 = vsub.s32 %v521, %v4596
    %v4598 = vrot.slane %v4585, %v4597
    %v4599 = vlaneseq
    %v4600 = vshrl.u32 %v4599, 7
    %v4601 = vsub.s32 %v526, %v4600
    %v4602 = vrot.slane %v4588, %v4601
    %v4603 = vsel %vm531, %v4602, %v4598
    %v4604 = vlaneseq
    %v4605 = vshrl.u32 %v4604, 7
    %v4606 = vsub.s32 %v521, %v4605
    %v4607 = vrot.slane %v4591, %v4606
    %v4608 = vlaneseq
    %v4609 = vshrl.u32 %v4608, 7
    %v4610 = vsub.s32 %v526, %v4609
    %v4611 = vrot.slane %v4594, %v4610
    %v4612 = vsel %vm531, %v4611, %v4607
    %v4613 = vsel %vm93, %v4612, %v4603
    %v4615 = vsel %vm544, %v4613, 0.0
    %4616 = vadd.xlane.f32.xlu0 %v4615
    %v4617 = vpop.xlane.xlu0 %4616
    %v4618 = vrcp.pop %v4617
    %v4620 = vlaneseq
    %v4621 = vshrl.u32 %v4620, 7
    %v4622 = vsub.s32 0, %v4621
    %v4623 = vrot.slane %v4618, %v4622
    %v4624 = vlaneseq
    %v4625 = vshrl.u32 %v4624, 7
    %v4626 = vsub.s32 1, %v4625
    %v4627 = vrot.slane %v4618, %v4626
    %v4630 = vmul.f32 %v4572, %v4623
    %v4631 = vmul.f32 %v4574, %v4623
    %v4632 = vmul.f32 %v4576, %v4627
    %v4633 = vmul.f32 %v4578, %v4627
    %4635 = vset.pattern.permute.xlu0 0
    %4636 = vperm.xlu0 %4635, %v4630
    %v4637 = vpop.permute.xlu0 %4636
    %4640 = vset.pattern.permute.xlu0 0
    %4641 = vperm.xlu0 %4640, %v4631
    %v4642 = vpop.permute.xlu0 %4641
    %4645 = vset.pattern.permute.xlu0 0
    %4646 = vperm.xlu0 %4645, %v4632
    %v4647 = vpop.permute.xlu0 %4646
    %4650 = vset.pattern.permute.xlu0 0
    %4651 = vperm.xlu0 %4650, %v4633
    %v4652 = vpop.permute.xlu0 %4651
    %v4654 = vmul.f32 %v56, %v4637
    %v4655 = vmul.f32 %v57, %v4642
    %v4656 = vmul.f32 %v58, %v4647
    %v4657 = vmul.f32 %v59, %v4652
    %v4658 = vsel %vm65, %v4654, 0.0
    %v4659 = vsel %vm65, %v4655, 0.0
    %v4660 = vadd.f32 %v4658, %v4659
    %v4661 = vrot.slane %v4660, 4
    %v4662 = vadd.f32 %v4660, %v4661
    %v4663 = vrot.slane %v4662, 2
    %v4664 = vadd.f32 %v4662, %v4663
    %v4665 = vrot.slane %v4664, 1
    %v4666 = vadd.f32 %v4664, %v4665
    %v4667 = vsel %vm65, %v4656, 0.0
    %v4668 = vsel %vm65, %v4657, 0.0
    %v4669 = vadd.f32 %v4667, %v4668
    %v4670 = vrot.slane %v4669, 4
    %v4671 = vadd.f32 %v4669, %v4670
    %v4672 = vrot.slane %v4671, 2
    %v4673 = vadd.f32 %v4671, %v4672
    %v4674 = vrot.slane %v4673, 1
    %v4675 = vadd.f32 %v4673, %v4674
    %v4678 = vsel %vm93, %v4675, %v4666
    %v4680 = vmul.f32 %v4471, %v4678
    %v4681 = vld [vmem:[#allocation9 + $0x60] sm:$0xff]
    %v4682 = vld [vmem:[#allocation9 + $0x78] sm:$0xff]
    %v4683 = vld [vmem:[#allocation9 + $0x90] sm:$0xff]
    %v4684 = vld [vmem:[#allocation9 + $0xa8] sm:$0xff]
    %s4685 = scalar_lea.vmem [#allocation7], 16
    %v4686 = vld [vmem:[%s4685] sm:$0x3]
    %v4687 = vadd.f32 %v4686, %v4392
    %v4689 = vsel %vm65, %v4680, 0
    %4691 = vmatprep.subr.mxu0 0.0
    %4692 = vmatpush1.msra.mxu0 0.0
    %4693 = vmatprep.subr.mxu0 0.0
    %4694 = vmatpush1.msra.mxu0 0.0
    %4695 = vmatprep.subr.mxu0 0.0
    %4696 = vmatpush1.msra.mxu0 0.0
    %4697 = vmatprep.subr.mxu0 0.0
    %4698 = vmatpush1.msra.mxu0 0.0
    %4699 = vmatprep.subr.mxu0 0.0
    %4700 = vmatpush1.msra.mxu0 0.0
    %4701 = vmatprep.subr.mxu0 0.0
    %4702 = vmatpush1.msra.mxu0 0.0
    %4703 = vmatprep.subr.mxu0 0.0
    %4704 = vmatpush1.msra.mxu0 0.0
    %4705 = vmatprep.subr.mxu0 0.0
    %4706 = vmatpush1.msra.mxu0 0.0
    %4707 = vmatprep.subr.mxu0 0.0
    %4708 = vmatpush1.msra.mxu0 0.0
    %4709 = vmatprep.subr.mxu0 0.0
    %4710 = vmatpush1.msra.mxu0 0.0
    %4711 = vmatprep.subr.mxu0 0.0
    %4712 = vmatpush1.msra.mxu0 0.0
    %4713 = vmatprep.subr.mxu0 0.0
    %4714 = vmatpush1.msra.mxu0 0.0
    %4715 = vmatprep.subr.mxu0 0.0
    %4716 = vmatpush1.msra.mxu0 %v4684
    %4717 = vmatprep.subr.mxu0 0.0
    %4718 = vmatpush1.msra.mxu0 %v4683
    %4719 = vmatprep.subr.mxu0 0.0
    %4720 = vmatpush1.msra.mxu0 %v4682
    %4721 = vmatprep.subr.mxu0 0.0
    %4722 = vmatpush1.msra.mxu0 %v4681
    %4723 = vmatprep.subr.mxu0 0.0
    %4724 = vmatpush2.msra.mxu0 0.0
    %4725 = vmatprep.subr.mxu0 0.0
    %4726 = vmatpush2.msra.mxu0 0.0
    %4727 = vmatprep.subr.mxu0 0.0
    %4728 = vmatpush2.msra.mxu0 0.0
    %4729 = vmatprep.subr.mxu0 0.0
    %4730 = vmatpush2.msra.mxu0 0.0
    %4731 = vmatprep.subr.mxu0 0.0
    %4732 = vmatpush2.msra.mxu0 0.0
    %4733 = vmatprep.subr.mxu0 0.0
    %4734 = vmatpush2.msra.mxu0 0.0
    %4735 = vmatprep.subr.mxu0 0.0
    %4736 = vmatpush2.msra.mxu0 0.0
    %4737 = vmatprep.subr.mxu0 0.0
    %4738 = vmatpush2.msra.mxu0 0.0
    %4739 = vmatprep.subr.mxu0 0.0
    %4740 = vmatpush2.msra.mxu0 0.0
    %4741 = vmatprep.subr.mxu0 0.0
    %4742 = vmatpush2.msra.mxu0 0.0
    %4743 = vmatprep.subr.mxu0 0.0
    %4744 = vmatpush2.msra.mxu0 0.0
    %4745 = vmatprep.subr.mxu0 0.0
    %4746 = vmatpush2.msra.mxu0 0.0
    %4747 = vmatprep.subr.mxu0 0.0
    %4748 = vmatpush2.msra.mxu0 0.0
    %4749 = vmatprep.subr.mxu0 0.0
    %4750 = vmatpush2.msra.mxu0 0.0
    %4751 = vmatprep.subr.mxu0 0.0
    %4752 = vmatpush2.msra.mxu0 0.0
    %4753 = vmatprep.subr.mxu0 0.0
    %4754 = vmatpush2.msra.mxu0 0.0
    %4755 = vmatprep.mubr.f32.mxu0 0.0
    %4756 = vmatmul.mubr.f32.gmra.mxu0 %v4689
    %v4757 = vpop.f32.mrf.mxu0
    %v4758 = vadd.f32 0.0, %v4757
    %v4759 = vpop.f32.mrf.mxu0
    %4760 = vdwg.mxu0
    %v4761 = vadd.f32 %v4687, %v4758
    %v4762 = vxor.u32 %v4761, 2147483648
    %v4763 = vmul.f32 %v4762, 1.442695
    %v4764 = vpow.pop %v4763
    %v4765 = vadd.f32 %v4764, 1.0
    %v4766 = vrcp.pop %v4765
    %v4767 = vmul.f32 1.0, %v4766
    %v4768 = vtanh.pop %v4761
    %v4769 = vmul.f32 %v4767, %v4278
    %4771 = vrot.lane.b32.xlu0 %v4768, 64
    %v4772 = vpop.permute.xlu0 %4771
    %v4774 = vmul.f32 %v4767, %v4772
    %4776 = vrot.lane.b32.xlu0 %v4774, 32
    %v4777 = vpop.permute.xlu0 %4776
    %v4779 = vadd.f32 %v4769, %v4777
    %v4780 = vtanh.pop %v4779
    %4782 = vrot.lane.b32.xlu0 %v4780, 64
    %v4783 = vpop.permute.xlu0 %4782
    %v4785 = vmul.f32 %v4767, %v4783
    %4787 = vrot.lane.b32.xlu0 %v4785, 32
    %v4788 = vpop.permute.xlu0 %4787
    %4790 = vst.msk [vmem:[#allocation2 + $0x10] sm:$0x3] %vm781, %v4788
    %v4791 = vlaneseq
    %v4792 = vshrl.u32 %v4791, 7
    %v4793 = vsub.s32 %v521, %v4792
    %v4794 = vrot.slane %v4637, %v4793
    %v4795 = vlaneseq
    %v4796 = vshrl.u32 %v4795, 7
    %v4797 = vsub.s32 %v526, %v4796
    %v4798 = vrot.slane %v4642, %v4797
    %v4799 = vsel %vm531, %v4798, %v4794
    %v4800 = vlaneseq
    %v4801 = vshrl.u32 %v4800, 7
    %v4802 = vsub.s32 %v521, %v4801
    %v4803 = vrot.slane %v4647, %v4802
    %v4804 = vlaneseq
    %v4805 = vshrl.u32 %v4804, 7
    %v4806 = vsub.s32 %v526, %v4805
    %v4807 = vrot.slane %v4652, %v4806
    %v4808 = vsel %vm531, %v4807, %v4803
    %v4809 = vsel %vm93, %v4808, %v4799
    %4811 = vst.msk [vmem:[#allocation3 + $0x10] sm:$0x3] %vm544, %v4809
    %v4812 = vld [vmem:[#allocation2] sm:$0xff]
    %v4813 = vld [vmem:[#allocation2 + $0x8] sm:$0xff]
    %v4814 = vld [vmem:[#allocation2 + $0x10] sm:$0x3]
    %v4815 = vld [vmem:[#allocation3] sm:$0xff]
    %v4816 = vld [vmem:[#allocation3 + $0x8] sm:$0xff]
    %v4817 = vld [vmem:[#allocation3 + $0x10] sm:$0x3]
    %v4818 = vld [vmem:[#allocation9 + $0x68] sm:$0xff]
    %v4819 = vld [vmem:[#allocation9 + $0x80] sm:$0xff]
    %v4820 = vld [vmem:[#allocation9 + $0x98] sm:$0xff]
    %v4821 = vld [vmem:[#allocation9 + $0xb0] sm:$0xff]
    %v4822 = vld [vmem:[#allocation9 + $0xf1] ss:$0 sm:$0xff]
    %v4823 = vld [vmem:[#allocation9 + $0xc0] sm:$0xff]
    %v4824 = vld [vmem:[#allocation9 + $0xd8] sm:$0xff]
    %v4826 = vsel %vm65, %v4812, 0
    %v4829 = vsel %vm65, %v4813, 0
    %v4832 = vsel %vm65, %v4814, 0
    %4834 = vmatprep.subr.mxu0 0.0
    %4835 = vmatpush1.msra.mxu0 0.0
    %4836 = vmatprep.subr.mxu0 0.0
    %4837 = vmatpush1.msra.mxu0 0.0
    %4838 = vmatprep.subr.mxu0 0.0
    %4839 = vmatpush1.msra.mxu0 0.0
    %4840 = vmatprep.subr.mxu0 0.0
    %4841 = vmatpush1.msra.mxu0 0.0
    %4842 = vmatprep.subr.mxu0 0.0
    %4843 = vmatpush1.msra.mxu0 0.0
    %4844 = vmatprep.subr.mxu0 0.0
    %4845 = vmatpush1.msra.mxu0 0.0
    %4846 = vmatprep.subr.mxu0 0.0
    %4847 = vmatpush1.msra.mxu0 0.0
    %4848 = vmatprep.subr.mxu0 0.0
    %4849 = vmatpush1.msra.mxu0 0.0
    %4850 = vmatprep.subr.mxu0 0.0
    %4851 = vmatpush1.msra.mxu0 0.0
    %4852 = vmatprep.subr.mxu0 0.0
    %4853 = vmatpush1.msra.mxu0 0.0
    %4854 = vmatprep.subr.mxu0 0.0
    %4855 = vmatpush1.msra.mxu0 0.0
    %4856 = vmatprep.subr.mxu0 0.0
    %4857 = vmatpush1.msra.mxu0 0.0
    %4858 = vmatprep.subr.mxu0 0.0
    %4859 = vmatpush1.msra.mxu0 %v4821
    %4860 = vmatprep.subr.mxu0 0.0
    %4861 = vmatpush1.msra.mxu0 %v4820
    %4862 = vmatprep.subr.mxu0 0.0
    %4863 = vmatpush1.msra.mxu0 %v4819
    %4864 = vmatprep.subr.mxu0 0.0
    %4865 = vmatpush1.msra.mxu0 %v4818
    %4866 = vmatprep.subr.mxu0 0.0
    %4867 = vmatpush2.msra.mxu0 0.0
    %4868 = vmatprep.subr.mxu0 0.0
    %4869 = vmatpush2.msra.mxu0 0.0
    %4870 = vmatprep.subr.mxu0 0.0
    %4871 = vmatpush2.msra.mxu0 0.0
    %4872 = vmatprep.subr.mxu0 0.0
    %4873 = vmatpush2.msra.mxu0 0.0
    %4874 = vmatprep.subr.mxu0 0.0
    %4875 = vmatpush2.msra.mxu0 0.0
    %4876 = vmatprep.subr.mxu0 0.0
    %4877 = vmatpush2.msra.mxu0 0.0
    %4878 = vmatprep.subr.mxu0 0.0
    %4879 = vmatpush2.msra.mxu0 0.0
    %4880 = vmatprep.subr.mxu0 0.0
    %4881 = vmatpush2.msra.mxu0 0.0
    %4882 = vmatprep.subr.mxu0 0.0
    %4883 = vmatpush2.msra.mxu0 0.0
    %4884 = vmatprep.subr.mxu0 0.0
    %4885 = vmatpush2.msra.mxu0 0.0
    %4886 = vmatprep.subr.mxu0 0.0
    %4887 = vmatpush2.msra.mxu0 0.0
    %4888 = vmatprep.subr.mxu0 0.0
    %4889 = vmatpush2.msra.mxu0 0.0
    %4890 = vmatprep.subr.mxu0 0.0
    %4891 = vmatpush2.msra.mxu0 0.0
    %4892 = vmatprep.subr.mxu0 0.0
    %4893 = vmatpush2.msra.mxu0 0.0
    %4894 = vmatprep.subr.mxu0 0.0
    %4895 = vmatpush2.msra.mxu0 0.0
    %4896 = vmatprep.subr.mxu0 0.0
    %4897 = vmatpush2.msra.mxu0 0.0
    %4898 = vmatprep.mubr.f32.mxu0 0.0
    %4899 = vmatmul.mubr.f32.gmra.mxu0 %v4826
    %v4900 = vpop.f32.mrf.mxu0
    %v4901 = vadd.f32 %v4822, %v4900
    %v4902 = vpop.f32.mrf.mxu0
    %4903 = vmatprep.mubr.f32.mxu0 0.0
    %4904 = vmatmul.mubr.f32.gmra.mxu0 %v4829
    %v4905 = vpop.f32.mrf.mxu0
    %v4906 = vadd.f32 %v4822, %v4905
    %v4907 = vpop.f32.mrf.mxu0
    %4908 = vmatprep.mubr.f32.mxu0 0.0
    %4909 = vmatmul.mubr.f32.gmra.mxu0 %v4832
    %v4910 = vpop.f32.mrf.mxu0
    %v4911 = vadd.f32 %v4822, %v4910
    %v4912 = vpop.f32.mrf.mxu0
    %4913 = vdwg.mxu0
    %vm4914 = vcmask 130048
    %v4916 = vsel %vm4914, %v4815, 0
    %v4919 = vsel %vm4914, %v4816, 0
    %v4922 = vsel %vm4914, %v4817, 0
    %4924 = vmatprep.subr.mxu0 0.0
    %4925 = vmatpush1.msra.mxu0 0.0
    %4926 = vmatprep.subr.mxu0 0.0
    %4927 = vmatpush1.msra.mxu0 0.0
    %4928 = vmatprep.subr.mxu0 0.0
    %4929 = vmatpush1.msra.mxu0 0.0
    %4930 = vmatprep.subr.mxu0 0.0
    %4931 = vmatpush1.msra.mxu0 0.0
    %4932 = vmatprep.subr.mxu0 0.0
    %4933 = vmatpush1.msra.mxu0 0.0
    %4934 = vmatprep.subr.mxu0 0.0
    %4935 = vmatpush1.msra.mxu0 0.0
    %4936 = vmatprep.subr.mxu0 0.0
    %4937 = vmatpush1.msra.mxu0 0.0
    %4938 = vmatprep.subr.mxu0 0.0
    %4939 = vmatpush1.msra.mxu0 0.0
    %4940 = vmatprep.subr.mxu0 0.0
    %4941 = vmatpush1.msra.mxu0 0.0
    %4942 = vmatprep.subr.mxu0 0.0
    %4943 = vmatpush1.msra.mxu0 0.0
    %4944 = vmatprep.subr.mxu0 0.0
    %4945 = vmatpush1.msra.mxu0 0.0
    %4946 = vmatprep.subr.mxu0 0.0
    %4947 = vmatpush1.msra.mxu0 0.0
    %4948 = vmatprep.subr.mxu0 0.0
    %4949 = vmatpush1.msra.mxu0 0.0
    %4950 = vmatprep.subr.mxu0 0.0
    %4951 = vmatpush1.msra.mxu0 0.0
    %4952 = vmatprep.subr.mxu0 0.0
    %4953 = vmatpush1.msra.mxu0 %v4824
    %4954 = vmatprep.subr.mxu0 0.0
    %4955 = vmatpush1.msra.mxu0 %v4823
    %4956 = vmatprep.subr.mxu0 0.0
    %4957 = vmatpush2.msra.mxu0 0.0
    %4958 = vmatprep.subr.mxu0 0.0
    %4959 = vmatpush2.msra.mxu0 0.0
    %4960 = vmatprep.subr.mxu0 0.0
    %4961 = vmatpush2.msra.mxu0 0.0
    %4962 = vmatprep.subr.mxu0 0.0
    %4963 = vmatpush2.msra.mxu0 0.0
    %4964 = vmatprep.subr.mxu0 0.0
    %4965 = vmatpush2.msra.mxu0 0.0
    %4966 = vmatprep.subr.mxu0 0.0
    %4967 = vmatpush2.msra.mxu0 0.0
    %4968 = vmatprep.subr.mxu0 0.0
    %4969 = vmatpush2.msra.mxu0 0.0
    %4970 = vmatprep.subr.mxu0 0.0
    %4971 = vmatpush2.msra.mxu0 0.0
    %4972 = vmatprep.subr.mxu0 0.0
    %4973 = vmatpush2.msra.mxu0 0.0
    %4974 = vmatprep.subr.mxu0 0.0
    %4975 = vmatpush2.msra.mxu0 0.0
    %4976 = vmatprep.subr.mxu0 0.0
    %4977 = vmatpush2.msra.mxu0 0.0
    %4978 = vmatprep.subr.mxu0 0.0
    %4979 = vmatpush2.msra.mxu0 0.0
    %4980 = vmatprep.subr.mxu0 0.0
    %4981 = vmatpush2.msra.mxu0 0.0
    %4982 = vmatprep.subr.mxu0 0.0
    %4983 = vmatpush2.msra.mxu0 0.0
    %4984 = vmatprep.subr.mxu0 0.0
    %4985 = vmatpush2.msra.mxu0 0.0
    %4986 = vmatprep.subr.mxu0 0.0
    %4987 = vmatpush2.msra.mxu0 0.0
    %4988 = vmatprep.mubr.f32.mxu0 0.0
    %4989 = vmatmul.mubr.f32.gmra.mxu0 %v4916
    %v4990 = vpop.f32.mrf.mxu0
    %v4991 = vadd.f32 0.0, %v4990
    %v4992 = vpop.f32.mrf.mxu0
    %4993 = vmatprep.mubr.f32.mxu0 0.0
    %4994 = vmatmul.mubr.f32.gmra.mxu0 %v4919
    %v4995 = vpop.f32.mrf.mxu0
    %v4996 = vadd.f32 0.0, %v4995
    %v4997 = vpop.f32.mrf.mxu0
    %4998 = vmatprep.mubr.f32.mxu0 0.0
    %4999 = vmatmul.mubr.f32.gmra.mxu0 %v4922
    %v5000 = vpop.f32.mrf.mxu0
    %v5001 = vadd.f32 0.0, %v5000
    %v5002 = vpop.f32.mrf.mxu0
    %5003 = vdwg.mxu0
    %v5004 = vadd.f32 %v4901, %v4991
    %v5005 = vadd.f32 %v4906, %v4996
    %v5006 = vadd.f32 %v4911, %v5001
    %5007 = vst [vmem:[#allocation10] sm:$0xff] %v5004
    %5008 = vst [vmem:[#allocation10 + $0x8] sm:$0xff] %v5005
    %5009 = vst [vmem:[#allocation10 + $0x10] sm:$0x3] %v5006
    // Predicated region
    $region26: #{tpu_custom_call.1} parent=1 // pred_check
      _
    $region27: #{tpu_custom_call.1} parent=1 // pred_check_branch
      %5011 = sbr.rel (0) target = $region29
    $region28: #{tpu_custom_call.1} parent=1 // pred_region
      %s5013 = ssub.s32 384, 384
      %5014 = vsyncadd [#allocation6], %s5013
      %s5015 = sshll.u32 [#allocation10], 4
      %s5016 = int_to_ptr.vmem [resolvable:$true] %s5015
      %5021 = dma.vmem_to_hbm [thread:$0]  %s5016, 384, %s3, [#allocation6], 128, 128, 8
    $region29: #{tpu_custom_call.1} parent=1 // pred_fallthru
      _
    // Predicated region
    $region30: #{tpu_custom_call.1} parent=1 // pred_check
      _
    $region31: #{tpu_custom_call.1} parent=1 // pred_check_branch
      %5023 = sbr.rel (0) target = $region33
    $region32: #{tpu_custom_call.1} parent=1 // pred_region
      %5024 = dma.done [#allocation6], 384
    $region33: #{tpu_custom_call.1} parent=1 // pred_fallthru
      _
    %5025 = vsyncpa [#allocation5], 1
    %5026 = vsyncpa [#allocation8], 1
    %5027 = vsyncpa [#allocation6], 1

</llo_original>
